<compile_context>
chip_gen: v7x
topology: tpu7x:2x2x1
jax: 0.10.0
libtpu: 0.0.40
codegen_flags: <defaults>
</compile_context>

<pallas_src>
import math

import jax
import jax.numpy as jnp
from jax.experimental import pallas as pl
from jax.experimental.pallas import tpu as pltpu

_LANE = 128


def _round_up(x, m):
    return (x + m - 1) // m * m


def _pad_cols(a, target):
    pad = target - a.shape[1]
    if pad == 0:
        return a
    return jnp.pad(a, ((0, 0), (0, pad)))


def _choose_batch_tile(bs, max_tile=512):
    """Largest sublane-aligned tile; prefer >=2 grid steps (v7x 2-TC sharding)."""
    cands = [t for t in range(8, min(bs, max_tile) + 1, 8) if bs % t == 0]
    two_step = [t for t in cands if bs // t >= 2]
    if two_step:
        return max(two_step)
    return max(cands) if cands else bs


def _vmem_limit_bytes():
    # ~100 MiB on v5e/v6e (128 MiB physical), ~56 MiB on v7x (64 MiB physical).
    try:
        cap = int(pltpu.get_tpu_info().vmem_capacity_bytes)
        return int(min(100 << 20, (cap * 7) // 8))
    except Exception:
        return 56 << 20


# ----------------------------------------------------------------------------
# Fused kernel: entire forward pass in one invocation.
# ----------------------------------------------------------------------------
def _make_fused_kernel(n_layers, hidden_dim, hidden_pad, has_wrest):
    inv_h = 1.0 / float(hidden_dim)
    needs_mask = hidden_pad != hidden_dim

    def kernel(x_ref, t_ref, wt1_ref, wt2_ref, w0_ref, *rest):
        if has_wrest:
            wrest_ref, pvec_ref, w_out_ref, b_out_ref, o_ref = rest
        else:
            pvec_ref, w_out_ref, b_out_ref, o_ref = rest
            wrest_ref = None

        # ---- timestep branch: L small dots, fully off the h critical path.
        # Stacked (L, Tp, Hp)/(L, Hp, Hp) weights; per-layer result indexed by
        # leading axis (no lane-dim slicing, no zero-block MACs).
        t_emb = t_ref[...]                                   # (tb, Tp) bf16
        t2 = []
        for l in range(n_layers):
            t1 = jnp.dot(t_emb, wt1_ref[l],
                         preferred_element_type=jnp.float32)
            t1 = jnp.maximum(t1 + pvec_ref[l, 1:2, :], 0.0)  # + bt1, relu
            t2_l = (jnp.dot(t1.astype(jnp.bfloat16), wt2_ref[l],
                            preferred_element_type=jnp.float32)
                    + pvec_ref[l, 2:3, :])                   # + bt2
            t2.append(t2_l)

        if needs_mask:
            mask = (jax.lax.broadcasted_iota(jnp.int32, (1, hidden_pad), 1)
                    < hidden_dim)

        # ---- serial hidden-layer chain: one matmul per layer on the critical
        # path; h stays resident in vregs/VMEM (bf16 matmuls, f32 LN).
        h = x_ref[...]                                       # (tb, Kp) bf16
        for l in range(n_layers):
            w = w0_ref[...] if l == 0 else wrest_ref[l - 1]
            a = jnp.dot(h, w, preferred_element_type=jnp.float32)
            a = jnp.maximum(a + pvec_ref[l, 0:1, :], 0.0)    # relu(xW + b)
            z = a + t2[l]                                    # pad lanes stay 0
            # masked, centered two-pass LayerNorm over the true hidden_dim
            m1 = jnp.sum(z, axis=-1, keepdims=True) * inv_h
            d = z - m1
            if needs_mask:
                d = jnp.where(mask, d, 0.0)
            var = jnp.sum(d * d, axis=-1, keepdims=True) * inv_h
            zn = d * jax.lax.rsqrt(var + 1e-5)
            # gamma/beta pad lanes are 0 -> h pad lanes stay exactly 0
            h = (zn * pvec_ref[l, 3:4, :] + pvec_ref[l, 4:5, :]
                 ).astype(jnp.bfloat16)

        # ---- fused output projection (lane-padded to 128 -> dense vst) -----
        o_ref[...] = (jnp.dot(h, w_out_ref[...],
                              preferred_element_type=jnp.float32)
                      + b_out_ref[...])

    return kernel


# ----------------------------------------------------------------------------
# Glue: sinusoidal timestep embedding (improved_diffusion.nn.timestep_embedding)
# ----------------------------------------------------------------------------
def timestep_embedding(timesteps, dim, max_period=10000):
    half = dim // 2
    freqs = jnp.exp(
        -math.log(max_period) * jnp.arange(half, dtype=jnp.float32) / half)
    args = timesteps.astype(jnp.float32)[:, None] * freqs[None, :]
    emb = jnp.concatenate([jnp.cos(args), jnp.sin(args)], axis=-1)
    if dim % 2:
        emb = jnp.concatenate([emb, jnp.zeros_like(emb[:, :1])], axis=-1)
    return emb


# ----------------------------------------------------------------------------
# Parameter construction (deterministic, synthetic) + kernel-ready packing
# ----------------------------------------------------------------------------
def init_params(key, input_dim, hidden_dim, n_hidden_layers, timestep_emb_dim):
    params = {"layers": []}
    prev_dim = input_dim
    for _ in range(n_hidden_layers):
        key, k1, k2, k3, k4, k5, k6, k7, k8 = jax.random.split(key, 9)
        layer = {
            "w": jax.random.normal(k1, (prev_dim, hidden_dim), jnp.float32)
            / math.sqrt(prev_dim),
            "b": 0.01 * jax.random.normal(k2, (1, hidden_dim), jnp.float32),
            "wt1": jax.random.normal(k3, (timestep_emb_dim, hidden_dim),
                                     jnp.float32) / math.sqrt(timestep_emb_dim),
            "bt1": 0.01 * jax.random.normal(k4, (1, hidden_dim), jnp.float32),
            "wt2": jax.random.normal(k5, (hidden_dim, hidden_dim), jnp.float32)
            / math.sqrt(hidden_dim),
            "bt2": 0.01 * jax.random.normal(k6, (1, hidden_dim), jnp.float32),
            "gamma": jnp.ones((1, hidden_dim), jnp.float32)
            + 0.01 * jax.random.normal(k7, (1, hidden_dim), jnp.float32),
            "beta": 0.01 * jax.random.normal(k8, (1, hidden_dim), jnp.float32),
        }
        params["layers"].append(layer)
        prev_dim = hidden_dim
    key, k1, k2 = jax.random.split(key, 3)
    params["w_out"] = jax.random.normal(
        k1, (hidden_dim, input_dim), jnp.float32) / math.sqrt(hidden_dim)
    params["b_out"] = 0.01 * jax.random.normal(k2, (1, input_dim), jnp.float32)
    return params


def pack_params(params, n_layers, hidden_dim, input_dim, timestep_emb_dim):
    """Pack natural per-layer f32 params into lane-padded, stacked arrays."""
    Kp = _round_up(input_dim, _LANE)
    Hp = _round_up(hidden_dim, _LANE)
    Tp = _round_up(timestep_emb_dim, _LANE)
    Op = _round_up(input_dim, _LANE)
    layers = params["layers"]

    def pad2(a, shape):
        out = jnp.zeros(shape, a.dtype)
        return out.at[: a.shape[0], : a.shape[1]].set(a)

    w0 = pad2(layers[0]["w"], (Kp, Hp)).astype(jnp.bfloat16)
    w_rest = (jnp.stack([pad2(layers[l]["w"], (Hp, Hp))
                         for l in range(1, n_layers)]).astype(jnp.bfloat16)
              if n_layers > 1 else None)
    wt1 = jnp.stack([pad2(l["wt1"], (Tp, Hp))
                     for l in layers]).astype(jnp.bfloat16)   # (L, Tp, Hp)
    wt2 = jnp.stack([pad2(l["wt2"], (Hp, Hp))
                     for l in layers]).astype(jnp.bfloat16)   # (L, Hp, Hp)
    # per-layer vectors: [b, bt1, bt2, gamma, beta]; zero pad lanes keep the
    # padded hidden lanes exactly 0 through relu / residual / LN.
    pvec = jnp.stack([jnp.concatenate(
        [pad2(l["b"], (1, Hp)), pad2(l["bt1"], (1, Hp)),
         pad2(l["bt2"], (1, Hp)), pad2(l["gamma"], (1, Hp)),
         pad2(l["beta"], (1, Hp))], axis=0) for l in layers])  # (L, 5, Hp) f32
    w_out = pad2(params["w_out"], (Hp, Op)).astype(jnp.bfloat16)
    b_out = pad2(params["b_out"], (1, Op))
    return {"w0": w0, "w_rest": w_rest, "wt1": wt1, "wt2": wt2, "pvec": pvec,
            "w_out": w_out, "b_out": b_out,
            "dims": {"Kp": Kp, "Hp": Hp, "Tp": Tp, "Op": Op}}


# ----------------------------------------------------------------------------
# DiffusionMLP forward (single Pallas call) and pure-JAX reference
# ----------------------------------------------------------------------------
def diffusion_mlp_forward(packed, x, timesteps, timestep_emb_dim,
                          n_layers, hidden_dim, input_dim, max_batch_tile=512):
    bs = x.shape[0]
    d = packed["dims"]
    Kp, Tp, Op, Hp = d["Kp"], d["Tp"], d["Op"], d["Hp"]

    t_emb = timestep_embedding(timesteps, timestep_emb_dim)
    x_p = _pad_cols(x[:, 0, :], Kp).astype(jnp.bfloat16)
    t_p = _pad_cols(t_emb, Tp).astype(jnp.bfloat16)

    tb = _choose_batch_tile(bs, max_batch_tile)
    assert bs % tb == 0, "batch must be a multiple of the batch tile"

    const_args = [packed["wt1"], packed["wt2"], packed["w0"]]
    if packed["w_rest"] is not None:
        const_args.append(packed["w_rest"])
    const_args += [packed["pvec"], packed["w_out"], packed["b_out"]]

    kernel = _make_fused_kernel(n_layers, hidden_dim, Hp,
                                packed["w_rest"] is not None)

    def _run(single_buffer_consts):
        def _const_spec(arr):
            nd = arr.ndim
            if single_buffer_consts:
                # constant block index -> single-buffer to halve weight VMEM
                return pl.BlockSpec(arr.shape, lambda i: (0,) * nd,
                                    pipeline_mode=pl.Buffered(1))
            return pl.BlockSpec(arr.shape, lambda i: (0,) * nd)

        in_specs = ([pl.BlockSpec((tb, Kp), lambda i: (i, 0)),
                     pl.BlockSpec((tb, Tp), lambda i: (i, 0))]
                    + [_const_spec(a) for a in const_args])

        return pl.pallas_call(
            kernel,
            out_shape=jax.ShapeDtypeStruct((bs, Op), jnp.float32),
            grid=(bs // tb,),
            in_specs=in_specs,
            out_specs=pl.BlockSpec((tb, Op), lambda i: (i, 0)),
            compiler_params=pltpu.CompilerParams(
                dimension_semantics=("parallel",),
                vmem_limit_bytes=_vmem_limit_bytes()),
        )(x_p, t_p, *const_args)

    try:
        out = _run(True)
    except Exception:
        # Fallback for jax builds without BlockSpec pipeline_mode / Buffered(1).
        out = _run(False)

    # drop lane padding; restore (bs, 1, input_dim)
    return out[:, None, :input_dim]


def diffusion_mlp_reference(params, x, timesteps, timestep_emb_dim):
    """Pure-JAX reference with the same bf16-matmul / f32-accumulate math."""
    bf16 = jnp.bfloat16
    h = x[:, 0, :]
    t_emb = timestep_embedding(timesteps, timestep_emb_dim)
    for layer in params["layers"]:
        a = jnp.dot(h.astype(bf16), layer["w"].astype(bf16),
                    preferred_element_type=jnp.float32) + layer["b"]
        a = jnp.maximum(a, 0.0)
        t1 = jnp.dot(t_emb.astype(bf16), layer["wt1"].astype(bf16),
                     preferred_element_type=jnp.float32) + layer["bt1"]
        t1 = jnp.maximum(t1, 0.0)
        t2 = jnp.dot(t1.astype(bf16), layer["wt2"].astype(bf16),
                     preferred_element_type=jnp.float32) + layer["bt2"]
        z = a + t2
        mean = jnp.mean(z, axis=-1, keepdims=True)
        var = jnp.mean((z - mean) ** 2, axis=-1, keepdims=True)
        h = (z - mean) / jnp.sqrt(var + 1e-5) * layer["gamma"] + layer["beta"]
    out = jnp.dot(h.astype(bf16), params["w_out"].astype(bf16),
                  preferred_element_type=jnp.float32) + params["b_out"]
    return out[:, None, :]


# ----------------------------------------------------------------------------
if __name__ == "__main__":
    # Small, module-consistent shapes
    batch = 8
    input_dim = 8
    hidden_dim = 32
    n_hidden_layers = 3
    timestep_emb_dim = 16

    key = jax.random.PRNGKey(0)
    kp, kx, kt = jax.random.split(key, 3)

    params = init_params(kp, input_dim, hidden_dim, n_hidden_layers,
                         timestep_emb_dim)
    packed = pack_params(params, n_hidden_layers, hidden_dim, input_dim,
                         timestep_emb_dim)

    x = jax.random.normal(kx, (batch, 1, input_dim), jnp.float32)
    timesteps = jax.random.randint(kt, (batch,), 0, 1000).astype(jnp.float32)

    out = diffusion_mlp_forward(packed, x, timesteps, timestep_emb_dim,
                                n_hidden_layers, hidden_dim, input_dim)
    out = jax.block_until_ready(out)

    ref = diffusion_mlp_reference(params, x, timesteps, timestep_emb_dim)
    assert out.shape == (batch, 1, input_dim), out.shape
    assert jnp.allclose(out, ref, rtol=1e-3, atol=1e-3), "Pallas output mismatch"

    print("KERNEL_OK")
</pallas_src>

<mosaic_0001>
module attributes {stable_mosaic.version = 11 : i64} {
  func.func @kernel(%arg0: i32, %arg1: memref<8x128xbf16, #tpu.memory_space<vmem>>, %arg2: memref<8x128xbf16, #tpu.memory_space<vmem>>, %arg3: memref<3x128x128xbf16, #tpu.memory_space<vmem>>, %arg4: memref<3x128x128xbf16, #tpu.memory_space<vmem>>, %arg5: memref<128x128xbf16, #tpu.memory_space<vmem>>, %arg6: memref<2x128x128xbf16, #tpu.memory_space<vmem>>, %arg7: memref<3x5x128xf32, #tpu.memory_space<vmem>>, %arg8: memref<128x128xbf16, #tpu.memory_space<vmem>>, %arg9: memref<1x128xf32, #tpu.memory_space<vmem>>, %arg10: memref<8x128xf32, #tpu.memory_space<vmem>>) attributes {dimension_semantics = [#tpu.dimension_semantics<parallel>], iteration_bounds = array<i64: 1>, scalar_prefetch = 0 : i64, scratch_operands = 0 : i64, tpu.core_type = #tpu.core_type<tc>, window_params = [{transform_indices = @transform_0, window_bounds = array<i64: 8, 128>}, {transform_indices = @transform_1, window_bounds = array<i64: 8, 128>}, {pipeline_mode = #tpu.pipeline_mode<synchronous>, transform_indices = @transform_2, window_bounds = array<i64: 3, 128, 128>}, {pipeline_mode = #tpu.pipeline_mode<synchronous>, transform_indices = @transform_3, window_bounds = array<i64: 3, 128, 128>}, {pipeline_mode = #tpu.pipeline_mode<synchronous>, transform_indices = @transform_4, window_bounds = array<i64: 128, 128>}, {pipeline_mode = #tpu.pipeline_mode<synchronous>, transform_indices = @transform_5, window_bounds = array<i64: 2, 128, 128>}, {pipeline_mode = #tpu.pipeline_mode<synchronous>, transform_indices = @transform_6, window_bounds = array<i64: 3, 5, 128>}, {pipeline_mode = #tpu.pipeline_mode<synchronous>, transform_indices = @transform_7, window_bounds = array<i64: 128, 128>}, {pipeline_mode = #tpu.pipeline_mode<synchronous>, transform_indices = @transform_8, window_bounds = array<i64: 1, 128>}, {transform_indices = @transform_9, window_bounds = array<i64: 8, 128>}]} {
    %c0 = arith.constant 0 : index
    %c0_0 = arith.constant 0 : index
    %0 = vector.load %arg2[%c0, %c0_0] : memref<8x128xbf16, #tpu.memory_space<vmem>>, vector<8x128xbf16>
    %c0_1 = arith.constant 0 : index
    %c0_2 = arith.constant 0 : index
    %c0_3 = arith.constant 0 : index
    %1 = vector.load %arg3[%c0_1, %c0_2, %c0_3] : memref<3x128x128xbf16, #tpu.memory_space<vmem>>, vector<1x128x128xbf16>
    %2 = vector.shape_cast %1 : vector<1x128x128xbf16> to vector<128x128xbf16>
    %cst = arith.constant dense<0.000000e+00> : vector<8x128xf32>
    %3 = tpu.matmul %0, %2, %cst {dimension_numbers = #tpu.dot_dimension_numbers<[1], [0], [0], [1], [0, 0, 1, 1], [], []>} : vector<8x128xbf16>, vector<128x128xbf16>, vector<8x128xf32> -> vector<8x128xf32>
    %c0_4 = arith.constant 0 : index
    %c1 = arith.constant 1 : index
    %c0_5 = arith.constant 0 : index
    %4 = vector.load %arg7[%c0_4, %c1, %c0_5] : memref<3x5x128xf32, #tpu.memory_space<vmem>>, vector<1x1x128xf32>
    %5 = vector.shape_cast %4 : vector<1x1x128xf32> to vector<1x128xf32>
    %6 = vector.broadcast %5 : vector<1x128xf32> to vector<8x128xf32>
    %7 = arith.addf %3, %6 : vector<8x128xf32>
    %cst_6 = arith.constant 0.000000e+00 : f32
    %8 = vector.broadcast %cst_6 : f32 to vector<8x128xf32>
    %9 = arith.maximumf %7, %8 : vector<8x128xf32>
    %10 = arith.truncf %9 : vector<8x128xf32> to vector<8x128xbf16>
    %c0_7 = arith.constant 0 : index
    %c0_8 = arith.constant 0 : index
    %c0_9 = arith.constant 0 : index
    %11 = vector.load %arg4[%c0_7, %c0_8, %c0_9] : memref<3x128x128xbf16, #tpu.memory_space<vmem>>, vector<1x128x128xbf16>
    %12 = vector.shape_cast %11 : vector<1x128x128xbf16> to vector<128x128xbf16>
    %cst_10 = arith.constant dense<0.000000e+00> : vector<8x128xf32>
    %13 = tpu.matmul %10, %12, %cst_10 {dimension_numbers = #tpu.dot_dimension_numbers<[1], [0], [0], [1], [0, 0, 1, 1], [], []>} : vector<8x128xbf16>, vector<128x128xbf16>, vector<8x128xf32> -> vector<8x128xf32>
    %c0_11 = arith.constant 0 : index
    %c2 = arith.constant 2 : index
    %c0_12 = arith.constant 0 : index
    %14 = vector.load %arg7[%c0_11, %c2, %c0_12] : memref<3x5x128xf32, #tpu.memory_space<vmem>>, vector<1x1x128xf32>
    %15 = vector.shape_cast %14 : vector<1x1x128xf32> to vector<1x128xf32>
    %16 = vector.broadcast %15 : vector<1x128xf32> to vector<8x128xf32>
    %17 = arith.addf %13, %16 : vector<8x128xf32>
    %c1_13 = arith.constant 1 : index
    %c0_14 = arith.constant 0 : index
    %c0_15 = arith.constant 0 : index
    %18 = vector.load %arg3[%c1_13, %c0_14, %c0_15] : memref<3x128x128xbf16, #tpu.memory_space<vmem>>, vector<1x128x128xbf16>
    %19 = vector.shape_cast %18 : vector<1x128x128xbf16> to vector<128x128xbf16>
    %cst_16 = arith.constant dense<0.000000e+00> : vector<8x128xf32>
    %20 = tpu.matmul %0, %19, %cst_16 {dimension_numbers = #tpu.dot_dimension_numbers<[1], [0], [0], [1], [0, 0, 1, 1], [], []>} : vector<8x128xbf16>, vector<128x128xbf16>, vector<8x128xf32> -> vector<8x128xf32>
    %c1_17 = arith.constant 1 : index
    %c1_18 = arith.constant 1 : index
    %c0_19 = arith.constant 0 : index
    %21 = vector.load %arg7[%c1_17, %c1_18, %c0_19] : memref<3x5x128xf32, #tpu.memory_space<vmem>>, vector<1x1x128xf32>
    %22 = vector.shape_cast %21 : vector<1x1x128xf32> to vector<1x128xf32>
    %23 = vector.broadcast %22 : vector<1x128xf32> to vector<8x128xf32>
    %24 = arith.addf %20, %23 : vector<8x128xf32>
    %cst_20 = arith.constant 0.000000e+00 : f32
    %25 = vector.broadcast %cst_20 : f32 to vector<8x128xf32>
    %26 = arith.maximumf %24, %25 : vector<8x128xf32>
    %27 = arith.truncf %26 : vector<8x128xf32> to vector<8x128xbf16>
    %c1_21 = arith.constant 1 : index
    %c0_22 = arith.constant 0 : index
    %c0_23 = arith.constant 0 : index
    %28 = vector.load %arg4[%c1_21, %c0_22, %c0_23] : memref<3x128x128xbf16, #tpu.memory_space<vmem>>, vector<1x128x128xbf16>
    %29 = vector.shape_cast %28 : vector<1x128x128xbf16> to vector<128x128xbf16>
    %cst_24 = arith.constant dense<0.000000e+00> : vector<8x128xf32>
    %30 = tpu.matmul %27, %29, %cst_24 {dimension_numbers = #tpu.dot_dimension_numbers<[1], [0], [0], [1], [0, 0, 1, 1], [], []>} : vector<8x128xbf16>, vector<128x128xbf16>, vector<8x128xf32> -> vector<8x128xf32>
    %c1_25 = arith.constant 1 : index
    %c2_26 = arith.constant 2 : index
    %c0_27 = arith.constant 0 : index
    %31 = vector.load %arg7[%c1_25, %c2_26, %c0_27] : memref<3x5x128xf32, #tpu.memory_space<vmem>>, vector<1x1x128xf32>
    %32 = vector.shape_cast %31 : vector<1x1x128xf32> to vector<1x128xf32>
    %33 = vector.broadcast %32 : vector<1x128xf32> to vector<8x128xf32>
    %34 = arith.addf %30, %33 : vector<8x128xf32>
    %c2_28 = arith.constant 2 : index
    %c0_29 = arith.constant 0 : index
    %c0_30 = arith.constant 0 : index
    %35 = vector.load %arg3[%c2_28, %c0_29, %c0_30] : memref<3x128x128xbf16, #tpu.memory_space<vmem>>, vector<1x128x128xbf16>
    %36 = vector.shape_cast %35 : vector<1x128x128xbf16> to vector<128x128xbf16>
    %cst_31 = arith.constant dense<0.000000e+00> : vector<8x128xf32>
    %37 = tpu.matmul %0, %36, %cst_31 {dimension_numbers = #tpu.dot_dimension_numbers<[1], [0], [0], [1], [0, 0, 1, 1], [], []>} : vector<8x128xbf16>, vector<128x128xbf16>, vector<8x128xf32> -> vector<8x128xf32>
    %c2_32 = arith.constant 2 : index
    %c1_33 = arith.constant 1 : index
    %c0_34 = arith.constant 0 : index
    %38 = vector.load %arg7[%c2_32, %c1_33, %c0_34] : memref<3x5x128xf32, #tpu.memory_space<vmem>>, vector<1x1x128xf32>
    %39 = vector.shape_cast %38 : vector<1x1x128xf32> to vector<1x128xf32>
    %40 = vector.broadcast %39 : vector<1x128xf32> to vector<8x128xf32>
    %41 = arith.addf %37, %40 : vector<8x128xf32>
    %cst_35 = arith.constant 0.000000e+00 : f32
    %42 = vector.broadcast %cst_35 : f32 to vector<8x128xf32>
    %43 = arith.maximumf %41, %42 : vector<8x128xf32>
    %44 = arith.truncf %43 : vector<8x128xf32> to vector<8x128xbf16>
    %c2_36 = arith.constant 2 : index
    %c0_37 = arith.constant 0 : index
    %c0_38 = arith.constant 0 : index
    %45 = vector.load %arg4[%c2_36, %c0_37, %c0_38] : memref<3x128x128xbf16, #tpu.memory_space<vmem>>, vector<1x128x128xbf16>
    %46 = vector.shape_cast %45 : vector<1x128x128xbf16> to vector<128x128xbf16>
    %cst_39 = arith.constant dense<0.000000e+00> : vector<8x128xf32>
    %47 = tpu.matmul %44, %46, %cst_39 {dimension_numbers = #tpu.dot_dimension_numbers<[1], [0], [0], [1], [0, 0, 1, 1], [], []>} : vector<8x128xbf16>, vector<128x128xbf16>, vector<8x128xf32> -> vector<8x128xf32>
    %c2_40 = arith.constant 2 : index
    %c2_41 = arith.constant 2 : index
    %c0_42 = arith.constant 0 : index
    %48 = vector.load %arg7[%c2_40, %c2_41, %c0_42] : memref<3x5x128xf32, #tpu.memory_space<vmem>>, vector<1x1x128xf32>
    %49 = vector.shape_cast %48 : vector<1x1x128xf32> to vector<1x128xf32>
    %50 = vector.broadcast %49 : vector<1x128xf32> to vector<8x128xf32>
    %51 = arith.addf %47, %50 : vector<8x128xf32>
    %52 = tpu.iota {dimensions = array<i32: 1>} : vector<1x128xi32>
    %c32_i32 = arith.constant 32 : i32
    %53 = vector.broadcast %c32_i32 : i32 to vector<1x128xi32>
    %54 = arith.cmpi slt, %52, %53 : vector<1x128xi32>
    %c0_43 = arith.constant 0 : index
    %c0_44 = arith.constant 0 : index
    %55 = vector.load %arg1[%c0_43, %c0_44] : memref<8x128xbf16, #tpu.memory_space<vmem>>, vector<8x128xbf16>
    %c0_45 = arith.constant 0 : index
    %c0_46 = arith.constant 0 : index
    %56 = vector.load %arg5[%c0_45, %c0_46] : memref<128x128xbf16, #tpu.memory_space<vmem>>, vector<128x128xbf16>
    %cst_47 = arith.constant dense<0.000000e+00> : vector<8x128xf32>
    %57 = tpu.matmul %55, %56, %cst_47 {dimension_numbers = #tpu.dot_dimension_numbers<[1], [0], [0], [1], [0, 0, 1, 1], [], []>} : vector<8x128xbf16>, vector<128x128xbf16>, vector<8x128xf32> -> vector<8x128xf32>
    %c0_48 = arith.constant 0 : index
    %c0_49 = arith.constant 0 : index
    %c0_50 = arith.constant 0 : index
    %58 = vector.load %arg7[%c0_48, %c0_49, %c0_50] : memref<3x5x128xf32, #tpu.memory_space<vmem>>, vector<1x1x128xf32>
    %59 = vector.shape_cast %58 : vector<1x1x128xf32> to vector<1x128xf32>
    %60 = vector.broadcast %59 : vector<1x128xf32> to vector<8x128xf32>
    %61 = arith.addf %57, %60 : vector<8x128xf32>
    %cst_51 = arith.constant 0.000000e+00 : f32
    %62 = vector.broadcast %cst_51 : f32 to vector<8x128xf32>
    %63 = arith.maximumf %61, %62 : vector<8x128xf32>
    %64 = arith.addf %63, %17 : vector<8x128xf32>
    %cst_52 = arith.constant dense<0.000000e+00> : vector<8xf32>
    %65 = vector.multi_reduction <add>, %64, %cst_52 [1] : vector<8x128xf32> to vector<8xf32>
    %66 = vector.shape_cast %65 : vector<8xf32> to vector<8x1xf32>
    %cst_53 = arith.constant 3.125000e-02 : f32
    %67 = vector.broadcast %cst_53 : f32 to vector<8x1xf32>
    %68 = arith.mulf %66, %67 : vector<8x1xf32>
    %69 = vector.broadcast %68 : vector<8x1xf32> to vector<8x128xf32>
    %70 = arith.subf %64, %69 : vector<8x128xf32>
    %cst_54 = arith.constant 0.000000e+00 : f32
    %71 = vector.shape_cast %54 : vector<1x128xi1> to vector<1x128xi1>
    %72 = vector.broadcast %71 : vector<1x128xi1> to vector<8x128xi1>
    %73 = vector.broadcast %cst_54 : f32 to vector<8x128xf32>
    %74 = arith.select %72, %70, %73 : vector<8x128xi1>, vector<8x128xf32>
    %75 = arith.mulf %74, %74 : vector<8x128xf32>
    %cst_55 = arith.constant dense<0.000000e+00> : vector<8xf32>
    %76 = vector.multi_reduction <add>, %75, %cst_55 [1] : vector<8x128xf32> to vector<8xf32>
    %77 = vector.shape_cast %76 : vector<8xf32> to vector<8x1xf32>
    %cst_56 = arith.constant 3.125000e-02 : f32
    %78 = vector.broadcast %cst_56 : f32 to vector<8x1xf32>
    %79 = arith.mulf %77, %78 : vector<8x1xf32>
    %cst_57 = arith.constant 9.99999974E-6 : f32
    %80 = vector.broadcast %cst_57 : f32 to vector<8x1xf32>
    %81 = arith.addf %79, %80 : vector<8x1xf32>
    %82 = math.rsqrt %81 : vector<8x1xf32>
    %83 = vector.broadcast %82 : vector<8x1xf32> to vector<8x128xf32>
    %84 = arith.mulf %74, %83 : vector<8x128xf32>
    %c0_58 = arith.constant 0 : index
    %c3 = arith.constant 3 : index
    %c0_59 = arith.constant 0 : index
    %85 = vector.load %arg7[%c0_58, %c3, %c0_59] : memref<3x5x128xf32, #tpu.memory_space<vmem>>, vector<1x1x128xf32>
    %86 = vector.shape_cast %85 : vector<1x1x128xf32> to vector<1x128xf32>
    %87 = vector.broadcast %86 : vector<1x128xf32> to vector<8x128xf32>
    %88 = arith.mulf %84, %87 : vector<8x128xf32>
    %c0_60 = arith.constant 0 : index
    %c4 = arith.constant 4 : index
    %c0_61 = arith.constant 0 : index
    %89 = vector.load %arg7[%c0_60, %c4, %c0_61] : memref<3x5x128xf32, #tpu.memory_space<vmem>>, vector<1x1x128xf32>
    %90 = vector.shape_cast %89 : vector<1x1x128xf32> to vector<1x128xf32>
    %91 = vector.broadcast %90 : vector<1x128xf32> to vector<8x128xf32>
    %92 = arith.addf %88, %91 : vector<8x128xf32>
    %93 = arith.truncf %92 : vector<8x128xf32> to vector<8x128xbf16>
    %c0_62 = arith.constant 0 : index
    %c0_63 = arith.constant 0 : index
    %c0_64 = arith.constant 0 : index
    %94 = vector.load %arg6[%c0_62, %c0_63, %c0_64] : memref<2x128x128xbf16, #tpu.memory_space<vmem>>, vector<1x128x128xbf16>
    %95 = vector.shape_cast %94 : vector<1x128x128xbf16> to vector<128x128xbf16>
    %cst_65 = arith.constant dense<0.000000e+00> : vector<8x128xf32>
    %96 = tpu.matmul %93, %95, %cst_65 {dimension_numbers = #tpu.dot_dimension_numbers<[1], [0], [0], [1], [0, 0, 1, 1], [], []>} : vector<8x128xbf16>, vector<128x128xbf16>, vector<8x128xf32> -> vector<8x128xf32>
    %c1_66 = arith.constant 1 : index
    %c0_67 = arith.constant 0 : index
    %c0_68 = arith.constant 0 : index
    %97 = vector.load %arg7[%c1_66, %c0_67, %c0_68] : memref<3x5x128xf32, #tpu.memory_space<vmem>>, vector<1x1x128xf32>
    %98 = vector.shape_cast %97 : vector<1x1x128xf32> to vector<1x128xf32>
    %99 = vector.broadcast %98 : vector<1x128xf32> to vector<8x128xf32>
    %100 = arith.addf %96, %99 : vector<8x128xf32>
    %cst_69 = arith.constant 0.000000e+00 : f32
    %101 = vector.broadcast %cst_69 : f32 to vector<8x128xf32>
    %102 = arith.maximumf %100, %101 : vector<8x128xf32>
    %103 = arith.addf %102, %34 : vector<8x128xf32>
    %cst_70 = arith.constant dense<0.000000e+00> : vector<8xf32>
    %104 = vector.multi_reduction <add>, %103, %cst_70 [1] : vector<8x128xf32> to vector<8xf32>
    %105 = vector.shape_cast %104 : vector<8xf32> to vector<8x1xf32>
    %cst_71 = arith.constant 3.125000e-02 : f32
    %106 = vector.broadcast %cst_71 : f32 to vector<8x1xf32>
    %107 = arith.mulf %105, %106 : vector<8x1xf32>
    %108 = vector.broadcast %107 : vector<8x1xf32> to vector<8x128xf32>
    %109 = arith.subf %103, %108 : vector<8x128xf32>
    %cst_72 = arith.constant 0.000000e+00 : f32
    %110 = vector.shape_cast %54 : vector<1x128xi1> to vector<1x128xi1>
    %111 = vector.broadcast %110 : vector<1x128xi1> to vector<8x128xi1>
    %112 = vector.broadcast %cst_72 : f32 to vector<8x128xf32>
    %113 = arith.select %111, %109, %112 : vector<8x128xi1>, vector<8x128xf32>
    %114 = arith.mulf %113, %113 : vector<8x128xf32>
    %cst_73 = arith.constant dense<0.000000e+00> : vector<8xf32>
    %115 = vector.multi_reduction <add>, %114, %cst_73 [1] : vector<8x128xf32> to vector<8xf32>
    %116 = vector.shape_cast %115 : vector<8xf32> to vector<8x1xf32>
    %cst_74 = arith.constant 3.125000e-02 : f32
    %117 = vector.broadcast %cst_74 : f32 to vector<8x1xf32>
    %118 = arith.mulf %116, %117 : vector<8x1xf32>
    %cst_75 = arith.constant 9.99999974E-6 : f32
    %119 = vector.broadcast %cst_75 : f32 to vector<8x1xf32>
    %120 = arith.addf %118, %119 : vector<8x1xf32>
    %121 = math.rsqrt %120 : vector<8x1xf32>
    %122 = vector.broadcast %121 : vector<8x1xf32> to vector<8x128xf32>
    %123 = arith.mulf %113, %122 : vector<8x128xf32>
    %c1_76 = arith.constant 1 : index
    %c3_77 = arith.constant 3 : index
    %c0_78 = arith.constant 0 : index
    %124 = vector.load %arg7[%c1_76, %c3_77, %c0_78] : memref<3x5x128xf32, #tpu.memory_space<vmem>>, vector<1x1x128xf32>
    %125 = vector.shape_cast %124 : vector<1x1x128xf32> to vector<1x128xf32>
    %126 = vector.broadcast %125 : vector<1x128xf32> to vector<8x128xf32>
    %127 = arith.mulf %123, %126 : vector<8x128xf32>
    %c1_79 = arith.constant 1 : index
    %c4_80 = arith.constant 4 : index
    %c0_81 = arith.constant 0 : index
    %128 = vector.load %arg7[%c1_79, %c4_80, %c0_81] : memref<3x5x128xf32, #tpu.memory_space<vmem>>, vector<1x1x128xf32>
    %129 = vector.shape_cast %128 : vector<1x1x128xf32> to vector<1x128xf32>
    %130 = vector.broadcast %129 : vector<1x128xf32> to vector<8x128xf32>
    %131 = arith.addf %127, %130 : vector<8x128xf32>
    %132 = arith.truncf %131 : vector<8x128xf32> to vector<8x128xbf16>
    %c1_82 = arith.constant 1 : index
    %c0_83 = arith.constant 0 : index
    %c0_84 = arith.constant 0 : index
    %133 = vector.load %arg6[%c1_82, %c0_83, %c0_84] : memref<2x128x128xbf16, #tpu.memory_space<vmem>>, vector<1x128x128xbf16>
    %134 = vector.shape_cast %133 : vector<1x128x128xbf16> to vector<128x128xbf16>
    %cst_85 = arith.constant dense<0.000000e+00> : vector<8x128xf32>
    %135 = tpu.matmul %132, %134, %cst_85 {dimension_numbers = #tpu.dot_dimension_numbers<[1], [0], [0], [1], [0, 0, 1, 1], [], []>} : vector<8x128xbf16>, vector<128x128xbf16>, vector<8x128xf32> -> vector<8x128xf32>
    %c2_86 = arith.constant 2 : index
    %c0_87 = arith.constant 0 : index
    %c0_88 = arith.constant 0 : index
    %136 = vector.load %arg7[%c2_86, %c0_87, %c0_88] : memref<3x5x128xf32, #tpu.memory_space<vmem>>, vector<1x1x128xf32>
    %137 = vector.shape_cast %136 : vector<1x1x128xf32> to vector<1x128xf32>
    %138 = vector.broadcast %137 : vector<1x128xf32> to vector<8x128xf32>
    %139 = arith.addf %135, %138 : vector<8x128xf32>
    %cst_89 = arith.constant 0.000000e+00 : f32
    %140 = vector.broadcast %cst_89 : f32 to vector<8x128xf32>
    %141 = arith.maximumf %139, %140 : vector<8x128xf32>
    %142 = arith.addf %141, %51 : vector<8x128xf32>
    %cst_90 = arith.constant dense<0.000000e+00> : vector<8xf32>
    %143 = vector.multi_reduction <add>, %142, %cst_90 [1] : vector<8x128xf32> to vector<8xf32>
    %144 = vector.shape_cast %143 : vector<8xf32> to vector<8x1xf32>
    %cst_91 = arith.constant 3.125000e-02 : f32
    %145 = vector.broadcast %cst_91 : f32 to vector<8x1xf32>
    %146 = arith.mulf %144, %145 : vector<8x1xf32>
    %147 = vector.broadcast %146 : vector<8x1xf32> to vector<8x128xf32>
    %148 = arith.subf %142, %147 : vector<8x128xf32>
    %cst_92 = arith.constant 0.000000e+00 : f32
    %149 = vector.shape_cast %54 : vector<1x128xi1> to vector<1x128xi1>
    %150 = vector.broadcast %149 : vector<1x128xi1> to vector<8x128xi1>
    %151 = vector.broadcast %cst_92 : f32 to vector<8x128xf32>
    %152 = arith.select %150, %148, %151 : vector<8x128xi1>, vector<8x128xf32>
    %153 = arith.mulf %152, %152 : vector<8x128xf32>
    %cst_93 = arith.constant dense<0.000000e+00> : vector<8xf32>
    %154 = vector.multi_reduction <add>, %153, %cst_93 [1] : vector<8x128xf32> to vector<8xf32>
    %155 = vector.shape_cast %154 : vector<8xf32> to vector<8x1xf32>
    %cst_94 = arith.constant 3.125000e-02 : f32
    %156 = vector.broadcast %cst_94 : f32 to vector<8x1xf32>
    %157 = arith.mulf %155, %156 : vector<8x1xf32>
    %cst_95 = arith.constant 9.99999974E-6 : f32
    %158 = vector.broadcast %cst_95 : f32 to vector<8x1xf32>
    %159 = arith.addf %157, %158 : vector<8x1xf32>
    %160 = math.rsqrt %159 : vector<8x1xf32>
    %161 = vector.broadcast %160 : vector<8x1xf32> to vector<8x128xf32>
    %162 = arith.mulf %152, %161 : vector<8x128xf32>
    %c2_96 = arith.constant 2 : index
    %c3_97 = arith.constant 3 : index
    %c0_98 = arith.constant 0 : index
    %163 = vector.load %arg7[%c2_96, %c3_97, %c0_98] : memref<3x5x128xf32, #tpu.memory_space<vmem>>, vector<1x1x128xf32>
    %164 = vector.shape_cast %163 : vector<1x1x128xf32> to vector<1x128xf32>
    %165 = vector.broadcast %164 : vector<1x128xf32> to vector<8x128xf32>
    %166 = arith.mulf %162, %165 : vector<8x128xf32>
    %c2_99 = arith.constant 2 : index
    %c4_100 = arith.constant 4 : index
    %c0_101 = arith.constant 0 : index
    %167 = vector.load %arg7[%c2_99, %c4_100, %c0_101] : memref<3x5x128xf32, #tpu.memory_space<vmem>>, vector<1x1x128xf32>
    %168 = vector.shape_cast %167 : vector<1x1x128xf32> to vector<1x128xf32>
    %169 = vector.broadcast %168 : vector<1x128xf32> to vector<8x128xf32>
    %170 = arith.addf %166, %169 : vector<8x128xf32>
    %171 = arith.truncf %170 : vector<8x128xf32> to vector<8x128xbf16>
    %c0_102 = arith.constant 0 : index
    %c0_103 = arith.constant 0 : index
    %172 = vector.load %arg8[%c0_102, %c0_103] : memref<128x128xbf16, #tpu.memory_space<vmem>>, vector<128x128xbf16>
    %cst_104 = arith.constant dense<0.000000e+00> : vector<8x128xf32>
    %173 = tpu.matmul %171, %172, %cst_104 {dimension_numbers = #tpu.dot_dimension_numbers<[1], [0], [0], [1], [0, 0, 1, 1], [], []>} : vector<8x128xbf16>, vector<128x128xbf16>, vector<8x128xf32> -> vector<8x128xf32>
    %c0_105 = arith.constant 0 : index
    %c0_106 = arith.constant 0 : index
    %174 = vector.load %arg9[%c0_105, %c0_106] : memref<1x128xf32, #tpu.memory_space<vmem>>, vector<1x128xf32>
    %175 = vector.broadcast %174 : vector<1x128xf32> to vector<8x128xf32>
    %176 = arith.addf %173, %175 : vector<8x128xf32>
    %c0_107 = arith.constant 0 : index
    %c0_108 = arith.constant 0 : index
    %177 = vector.load %arg10[%c0_107, %c0_108] : memref<8x128xf32, #tpu.memory_space<vmem>>, vector<8x128xf32>
    tpu.vector_store %arg10[%c0_107, %c0_108], %176 {strides = array<i32>} : memref<8x128xf32, #tpu.memory_space<vmem>>, vector<8x128xf32>,
    return
  }
  func.func @transform_0(%arg0: i32) -> (i32, i32) {
    %c0_i32 = arith.constant 0 : i32
    %c0_i32_0 = arith.constant 0 : i32
    return %arg0, %c0_i32 : i32, i32
  }
  func.func @transform_1(%arg0: i32) -> (i32, i32) {
    %c0_i32 = arith.constant 0 : i32
    %c0_i32_0 = arith.constant 0 : i32
    return %arg0, %c0_i32 : i32, i32
  }
  func.func @transform_2(%arg0: i32) -> (i32, i32, i32) {
    %c0_i32 = arith.constant 0 : i32
    %c0_i32_0 = arith.constant 0 : i32
    %c0_i32_1 = arith.constant 0 : i32
    %c0_i32_2 = arith.constant 0 : i32
    return %c0_i32, %c0_i32_0, %c0_i32_1 : i32, i32, i32
  }
  func.func @transform_3(%arg0: i32) -> (i32, i32, i32) {
    %c0_i32 = arith.constant 0 : i32
    %c0_i32_0 = arith.constant 0 : i32
    %c0_i32_1 = arith.constant 0 : i32
    %c0_i32_2 = arith.constant 0 : i32
    return %c0_i32, %c0_i32_0, %c0_i32_1 : i32, i32, i32
  }
  func.func @transform_4(%arg0: i32) -> (i32, i32) {
    %c0_i32 = arith.constant 0 : i32
    %c0_i32_0 = arith.constant 0 : i32
    %c0_i32_1 = arith.constant 0 : i32
    return %c0_i32, %c0_i32_0 : i32, i32
  }
  func.func @transform_5(%arg0: i32) -> (i32, i32, i32) {
    %c0_i32 = arith.constant 0 : i32
    %c0_i32_0 = arith.constant 0 : i32
    %c0_i32_1 = arith.constant 0 : i32
    %c0_i32_2 = arith.constant 0 : i32
    return %c0_i32, %c0_i32_0, %c0_i32_1 : i32, i32, i32
  }
  func.func @transform_6(%arg0: i32) -> (i32, i32, i32) {
    %c0_i32 = arith.constant 0 : i32
    %c0_i32_0 = arith.constant 0 : i32
    %c0_i32_1 = arith.constant 0 : i32
    %c0_i32_2 = arith.constant 0 : i32
    return %c0_i32, %c0_i32_0, %c0_i32_1 : i32, i32, i32
  }
  func.func @transform_7(%arg0: i32) -> (i32, i32) {
    %c0_i32 = arith.constant 0 : i32
    %c0_i32_0 = arith.constant 0 : i32
    %c0_i32_1 = arith.constant 0 : i32
    return %c0_i32, %c0_i32_0 : i32, i32
  }
  func.func @transform_8(%arg0: i32) -> (i32, i32) {
    %c0_i32 = arith.constant 0 : i32
    %c0_i32_0 = arith.constant 0 : i32
    %c0_i32_1 = arith.constant 0 : i32
    return %c0_i32, %c0_i32_0 : i32, i32
  }
  func.func @transform_9(%arg0: i32) -> (i32, i32) {
    %c0_i32 = arith.constant 0 : i32
    %c0_i32_0 = arith.constant 0 : i32
    return %arg0, %c0_i32 : i32, i32
  }
}

module attributes {stable_mosaic.version = 11 : i64} {
  func.func @kernel(%arg0: i32, %arg1: memref<8x128xbf16, #tpu.memory_space<vmem>>, %arg2: memref<8x128xbf16, #tpu.memory_space<vmem>>, %arg3: memref<3x128x128xbf16, #tpu.memory_space<vmem>>, %arg4: memref<3x128x128xbf16, #tpu.memory_space<vmem>>, %arg5: memref<128x128xbf16, #tpu.memory_space<vmem>>, %arg6: memref<2x128x128xbf16, #tpu.memory_space<vmem>>, %arg7: memref<3x5x128xf32, #tpu.memory_space<vmem>>, %arg8: memref<128x128xbf16, #tpu.memory_space<vmem>>, %arg9: memref<1x128xf32, #tpu.memory_space<vmem>>, %arg10: memref<8x128xf32, #tpu.memory_space<vmem>>) attributes {dimension_semantics = [#tpu.dimension_semantics<parallel>], iteration_bounds = array<i64: 1>, scalar_prefetch = 0 : i64, scratch_operands = 0 : i64, tpu.core_type = #tpu.core_type<tc>, window_params = [{transform_indices = @transform_0, window_bounds = array<i64: 8, 128>}, {transform_indices = @transform_1, window_bounds = array<i64: 8, 128>}, {pipeline_mode = #tpu.pipeline_mode<synchronous>, transform_indices = @transform_2, window_bounds = array<i64: 3, 128, 128>}, {pipeline_mode = #tpu.pipeline_mode<synchronous>, transform_indices = @transform_3, window_bounds = array<i64: 3, 128, 128>}, {pipeline_mode = #tpu.pipeline_mode<synchronous>, transform_indices = @transform_4, window_bounds = array<i64: 128, 128>}, {pipeline_mode = #tpu.pipeline_mode<synchronous>, transform_indices = @transform_5, window_bounds = array<i64: 2, 128, 128>}, {pipeline_mode = #tpu.pipeline_mode<synchronous>, transform_indices = @transform_6, window_bounds = array<i64: 3, 5, 128>}, {pipeline_mode = #tpu.pipeline_mode<synchronous>, transform_indices = @transform_7, window_bounds = array<i64: 128, 128>}, {pipeline_mode = #tpu.pipeline_mode<synchronous>, transform_indices = @transform_8, window_bounds = array<i64: 1, 128>}, {transform_indices = @transform_9, window_bounds = array<i64: 8, 128>}]} {
    %c0 = arith.constant 0 : index
    %c0_0 = arith.constant 0 : index
    %0 = vector.load %arg2[%c0, %c0_0] : memref<8x128xbf16, #tpu.memory_space<vmem>>, vector<8x128xbf16>
    %c0_1 = arith.constant 0 : index
    %c0_2 = arith.constant 0 : index
    %c0_3 = arith.constant 0 : index
    %1 = vector.load %arg3[%c0_1, %c0_2, %c0_3] : memref<3x128x128xbf16, #tpu.memory_space<vmem>>, vector<1x128x128xbf16>
    %2 = vector.shape_cast %1 : vector<1x128x128xbf16> to vector<128x128xbf16>
    %cst = arith.constant dense<0.000000e+00> : vector<8x128xf32>
    %3 = tpu.matmul %0, %2, %cst {dimension_numbers = #tpu.dot_dimension_numbers<[1], [0], [0], [1], [0, 0, 1, 1], [], []>} : vector<8x128xbf16>, vector<128x128xbf16>, vector<8x128xf32> -> vector<8x128xf32>
    %c0_4 = arith.constant 0 : index
    %c1 = arith.constant 1 : index
    %c0_5 = arith.constant 0 : index
    %4 = vector.load %arg7[%c0_4, %c1, %c0_5] : memref<3x5x128xf32, #tpu.memory_space<vmem>>, vector<1x1x128xf32>
    %5 = vector.shape_cast %4 : vector<1x1x128xf32> to vector<1x128xf32>
    %6 = vector.broadcast %5 : vector<1x128xf32> to vector<8x128xf32>
    %7 = arith.addf %3, %6 : vector<8x128xf32>
    %cst_6 = arith.constant 0.000000e+00 : f32
    %8 = vector.broadcast %cst_6 : f32 to vector<8x128xf32>
    %9 = arith.maximumf %7, %8 : vector<8x128xf32>
    %10 = arith.truncf %9 : vector<8x128xf32> to vector<8x128xbf16>
    %c0_7 = arith.constant 0 : index
    %c0_8 = arith.constant 0 : index
    %c0_9 = arith.constant 0 : index
    %11 = vector.load %arg4[%c0_7, %c0_8, %c0_9] : memref<3x128x128xbf16, #tpu.memory_space<vmem>>, vector<1x128x128xbf16>
    %12 = vector.shape_cast %11 : vector<1x128x128xbf16> to vector<128x128xbf16>
    %cst_10 = arith.constant dense<0.000000e+00> : vector<8x128xf32>
    %13 = tpu.matmul %10, %12, %cst_10 {dimension_numbers = #tpu.dot_dimension_numbers<[1], [0], [0], [1], [0, 0, 1, 1], [], []>} : vector<8x128xbf16>, vector<128x128xbf16>, vector<8x128xf32> -> vector<8x128xf32>
    %c0_11 = arith.constant 0 : index
    %c2 = arith.constant 2 : index
    %c0_12 = arith.constant 0 : index
    %14 = vector.load %arg7[%c0_11, %c2, %c0_12] : memref<3x5x128xf32, #tpu.memory_space<vmem>>, vector<1x1x128xf32>
    %15 = vector.shape_cast %14 : vector<1x1x128xf32> to vector<1x128xf32>
    %16 = vector.broadcast %15 : vector<1x128xf32> to vector<8x128xf32>
    %17 = arith.addf %13, %16 : vector<8x128xf32>
    %c1_13 = arith.constant 1 : index
    %c0_14 = arith.constant 0 : index
    %c0_15 = arith.constant 0 : index
    %18 = vector.load %arg3[%c1_13, %c0_14, %c0_15] : memref<3x128x128xbf16, #tpu.memory_space<vmem>>, vector<1x128x128xbf16>
    %19 = vector.shape_cast %18 : vector<1x128x128xbf16> to vector<128x128xbf16>
    %cst_16 = arith.constant dense<0.000000e+00> : vector<8x128xf32>
    %20 = tpu.matmul %0, %19, %cst_16 {dimension_numbers = #tpu.dot_dimension_numbers<[1], [0], [0], [1], [0, 0, 1, 1], [], []>} : vector<8x128xbf16>, vector<128x128xbf16>, vector<8x128xf32> -> vector<8x128xf32>
    %c1_17 = arith.constant 1 : index
    %c1_18 = arith.constant 1 : index
    %c0_19 = arith.constant 0 : index
    %21 = vector.load %arg7[%c1_17, %c1_18, %c0_19] : memref<3x5x128xf32, #tpu.memory_space<vmem>>, vector<1x1x128xf32>
    %22 = vector.shape_cast %21 : vector<1x1x128xf32> to vector<1x128xf32>
    %23 = vector.broadcast %22 : vector<1x128xf32> to vector<8x128xf32>
    %24 = arith.addf %20, %23 : vector<8x128xf32>
    %cst_20 = arith.constant 0.000000e+00 : f32
    %25 = vector.broadcast %cst_20 : f32 to vector<8x128xf32>
    %26 = arith.maximumf %24, %25 : vector<8x128xf32>
    %27 = arith.truncf %26 : vector<8x128xf32> to vector<8x128xbf16>
    %c1_21 = arith.constant 1 : index
    %c0_22 = arith.constant 0 : index
    %c0_23 = arith.constant 0 : index
    %28 = vector.load %arg4[%c1_21, %c0_22, %c0_23] : memref<3x128x128xbf16, #tpu.memory_space<vmem>>, vector<1x128x128xbf16>
    %29 = vector.shape_cast %28 : vector<1x128x128xbf16> to vector<128x128xbf16>
    %cst_24 = arith.constant dense<0.000000e+00> : vector<8x128xf32>
    %30 = tpu.matmul %27, %29, %cst_24 {dimension_numbers = #tpu.dot_dimension_numbers<[1], [0], [0], [1], [0, 0, 1, 1], [], []>} : vector<8x128xbf16>, vector<128x128xbf16>, vector<8x128xf32> -> vector<8x128xf32>
    %c1_25 = arith.constant 1 : index
    %c2_26 = arith.constant 2 : index
    %c0_27 = arith.constant 0 : index
    %31 = vector.load %arg7[%c1_25, %c2_26, %c0_27] : memref<3x5x128xf32, #tpu.memory_space<vmem>>, vector<1x1x128xf32>
    %32 = vector.shape_cast %31 : vector<1x1x128xf32> to vector<1x128xf32>
    %33 = vector.broadcast %32 : vector<1x128xf32> to vector<8x128xf32>
    %34 = arith.addf %30, %33 : vector<8x128xf32>
    %c2_28 = arith.constant 2 : index
    %c0_29 = arith.constant 0 : index
    %c0_30 = arith.constant 0 : index
    %35 = vector.load %arg3[%c2_28, %c0_29, %c0_30] : memref<3x128x128xbf16, #tpu.memory_space<vmem>>, vector<1x128x128xbf16>
    %36 = vector.shape_cast %35 : vector<1x128x128xbf16> to vector<128x128xbf16>
    %cst_31 = arith.constant dense<0.000000e+00> : vector<8x128xf32>
    %37 = tpu.matmul %0, %36, %cst_31 {dimension_numbers = #tpu.dot_dimension_numbers<[1], [0], [0], [1], [0, 0, 1, 1], [], []>} : vector<8x128xbf16>, vector<128x128xbf16>, vector<8x128xf32> -> vector<8x128xf32>
    %c2_32 = arith.constant 2 : index
    %c1_33 = arith.constant 1 : index
    %c0_34 = arith.constant 0 : index
    %38 = vector.load %arg7[%c2_32, %c1_33, %c0_34] : memref<3x5x128xf32, #tpu.memory_space<vmem>>, vector<1x1x128xf32>
    %39 = vector.shape_cast %38 : vector<1x1x128xf32> to vector<1x128xf32>
    %40 = vector.broadcast %39 : vector<1x128xf32> to vector<8x128xf32>
    %41 = arith.addf %37, %40 : vector<8x128xf32>
    %cst_35 = arith.constant 0.000000e+00 : f32
    %42 = vector.broadcast %cst_35 : f32 to vector<8x128xf32>
    %43 = arith.maximumf %41, %42 : vector<8x128xf32>
    %44 = arith.truncf %43 : vector<8x128xf32> to vector<8x128xbf16>
    %c2_36 = arith.constant 2 : index
    %c0_37 = arith.constant 0 : index
    %c0_38 = arith.constant 0 : index
    %45 = vector.load %arg4[%c2_36, %c0_37, %c0_38] : memref<3x128x128xbf16, #tpu.memory_space<vmem>>, vector<1x128x128xbf16>
    %46 = vector.shape_cast %45 : vector<1x128x128xbf16> to vector<128x128xbf16>
    %cst_39 = arith.constant dense<0.000000e+00> : vector<8x128xf32>
    %47 = tpu.matmul %44, %46, %cst_39 {dimension_numbers = #tpu.dot_dimension_numbers<[1], [0], [0], [1], [0, 0, 1, 1], [], []>} : vector<8x128xbf16>, vector<128x128xbf16>, vector<8x128xf32> -> vector<8x128xf32>
    %c2_40 = arith.constant 2 : index
    %c2_41 = arith.constant 2 : index
    %c0_42 = arith.constant 0 : index
    %48 = vector.load %arg7[%c2_40, %c2_41, %c0_42] : memref<3x5x128xf32, #tpu.memory_space<vmem>>, vector<1x1x128xf32>
    %49 = vector.shape_cast %48 : vector<1x1x128xf32> to vector<1x128xf32>
    %50 = vector.broadcast %49 : vector<1x128xf32> to vector<8x128xf32>
    %51 = arith.addf %47, %50 : vector<8x128xf32>
    %52 = tpu.iota {dimensions = array<i32: 1>} : vector<1x128xi32>
    %c32_i32 = arith.constant 32 : i32
    %53 = vector.broadcast %c32_i32 : i32 to vector<1x128xi32>
    %54 = arith.cmpi slt, %52, %53 : vector<1x128xi32>
    %c0_43 = arith.constant 0 : index
    %c0_44 = arith.constant 0 : index
    %55 = vector.load %arg1[%c0_43, %c0_44] : memref<8x128xbf16, #tpu.memory_space<vmem>>, vector<8x128xbf16>
    %c0_45 = arith.constant 0 : index
    %c0_46 = arith.constant 0 : index
    %56 = vector.load %arg5[%c0_45, %c0_46] : memref<128x128xbf16, #tpu.memory_space<vmem>>, vector<128x128xbf16>
    %cst_47 = arith.constant dense<0.000000e+00> : vector<8x128xf32>
    %57 = tpu.matmul %55, %56, %cst_47 {dimension_numbers = #tpu.dot_dimension_numbers<[1], [0], [0], [1], [0, 0, 1, 1], [], []>} : vector<8x128xbf16>, vector<128x128xbf16>, vector<8x128xf32> -> vector<8x128xf32>
    %c0_48 = arith.constant 0 : index
    %c0_49 = arith.constant 0 : index
    %c0_50 = arith.constant 0 : index
    %58 = vector.load %arg7[%c0_48, %c0_49, %c0_50] : memref<3x5x128xf32, #tpu.memory_space<vmem>>, vector<1x1x128xf32>
    %59 = vector.shape_cast %58 : vector<1x1x128xf32> to vector<1x128xf32>
    %60 = vector.broadcast %59 : vector<1x128xf32> to vector<8x128xf32>
    %61 = arith.addf %57, %60 : vector<8x128xf32>
    %cst_51 = arith.constant 0.000000e+00 : f32
    %62 = vector.broadcast %cst_51 : f32 to vector<8x128xf32>
    %63 = arith.maximumf %61, %62 : vector<8x128xf32>
    %64 = arith.addf %63, %17 : vector<8x128xf32>
    %cst_52 = arith.constant dense<0.000000e+00> : vector<8xf32>
    %65 = vector.multi_reduction <add>, %64, %cst_52 [1] : vector<8x128xf32> to vector<8xf32>
    %66 = vector.shape_cast %65 : vector<8xf32> to vector<8x1xf32>
    %cst_53 = arith.constant 3.125000e-02 : f32
    %67 = vector.broadcast %cst_53 : f32 to vector<8x1xf32>
    %68 = arith.mulf %66, %67 : vector<8x1xf32>
    %69 = vector.broadcast %68 : vector<8x1xf32> to vector<8x128xf32>
    %70 = arith.subf %64, %69 : vector<8x128xf32>
    %cst_54 = arith.constant 0.000000e+00 : f32
    %71 = vector.shape_cast %54 : vector<1x128xi1> to vector<1x128xi1>
    %72 = vector.broadcast %71 : vector<1x128xi1> to vector<8x128xi1>
    %73 = vector.broadcast %cst_54 : f32 to vector<8x128xf32>
    %74 = arith.select %72, %70, %73 : vector<8x128xi1>, vector<8x128xf32>
    %75 = arith.mulf %74, %74 : vector<8x128xf32>
    %cst_55 = arith.constant dense<0.000000e+00> : vector<8xf32>
    %76 = vector.multi_reduction <add>, %75, %cst_55 [1] : vector<8x128xf32> to vector<8xf32>
    %77 = vector.shape_cast %76 : vector<8xf32> to vector<8x1xf32>
    %cst_56 = arith.constant 3.125000e-02 : f32
    %78 = vector.broadcast %cst_56 : f32 to vector<8x1xf32>
    %79 = arith.mulf %77, %78 : vector<8x1xf32>
    %cst_57 = arith.constant 9.99999974E-6 : f32
    %80 = vector.broadcast %cst_57 : f32 to vector<8x1xf32>
    %81 = arith.addf %79, %80 : vector<8x1xf32>
    %82 = math.rsqrt %81 : vector<8x1xf32>
    %83 = vector.broadcast %82 : vector<8x1xf32> to vector<8x128xf32>
    %84 = arith.mulf %74, %83 : vector<8x128xf32>
    %c0_58 = arith.constant 0 : index
    %c3 = arith.constant 3 : index
    %c0_59 = arith.constant 0 : index
    %85 = vector.load %arg7[%c0_58, %c3, %c0_59] : memref<3x5x128xf32, #tpu.memory_space<vmem>>, vector<1x1x128xf32>
    %86 = vector.shape_cast %85 : vector<1x1x128xf32> to vector<1x128xf32>
    %87 = vector.broadcast %86 : vector<1x128xf32> to vector<8x128xf32>
    %88 = arith.mulf %84, %87 : vector<8x128xf32>
    %c0_60 = arith.constant 0 : index
    %c4 = arith.constant 4 : index
    %c0_61 = arith.constant 0 : index
    %89 = vector.load %arg7[%c0_60, %c4, %c0_61] : memref<3x5x128xf32, #tpu.memory_space<vmem>>, vector<1x1x128xf32>
    %90 = vector.shape_cast %89 : vector<1x1x128xf32> to vector<1x128xf32>
    %91 = vector.broadcast %90 : vector<1x128xf32> to vector<8x128xf32>
    %92 = arith.addf %88, %91 : vector<8x128xf32>
    %93 = arith.truncf %92 : vector<8x128xf32> to vector<8x128xbf16>
    %c0_62 = arith.constant 0 : index
    %c0_63 = arith.constant 0 : index
    %c0_64 = arith.constant 0 : index
    %94 = vector.load %arg6[%c0_62, %c0_63, %c0_64] : memref<2x128x128xbf16, #tpu.memory_space<vmem>>, vector<1x128x128xbf16>
    %95 = vector.shape_cast %94 : vector<1x128x128xbf16> to vector<128x128xbf16>
    %cst_65 = arith.constant dense<0.000000e+00> : vector<8x128xf32>
    %96 = tpu.matmul %93, %95, %cst_65 {dimension_numbers = #tpu.dot_dimension_numbers<[1], [0], [0], [1], [0, 0, 1, 1], [], []>} : vector<8x128xbf16>, vector<128x128xbf16>, vector<8x128xf32> -> vector<8x128xf32>
    %c1_66 = arith.constant 1 : index
    %c0_67 = arith.constant 0 : index
    %c0_68 = arith.constant 0 : index
    %97 = vector.load %arg7[%c1_66, %c0_67, %c0_68] : memref<3x5x128xf32, #tpu.memory_space<vmem>>, vector<1x1x128xf32>
    %98 = vector.shape_cast %97 : vector<1x1x128xf32> to vector<1x128xf32>
    %99 = vector.broadcast %98 : vector<1x128xf32> to vector<8x128xf32>
    %100 = arith.addf %96, %99 : vector<8x128xf32>
    %cst_69 = arith.constant 0.000000e+00 : f32
    %101 = vector.broadcast %cst_69 : f32 to vector<8x128xf32>
    %102 = arith.maximumf %100, %101 : vector<8x128xf32>
    %103 = arith.addf %102, %34 : vector<8x128xf32>
    %cst_70 = arith.constant dense<0.000000e+00> : vector<8xf32>
    %104 = vector.multi_reduction <add>, %103, %cst_70 [1] : vector<8x128xf32> to vector<8xf32>
    %105 = vector.shape_cast %104 : vector<8xf32> to vector<8x1xf32>
    %cst_71 = arith.constant 3.125000e-02 : f32
    %106 = vector.broadcast %cst_71 : f32 to vector<8x1xf32>
    %107 = arith.mulf %105, %106 : vector<8x1xf32>
    %108 = vector.broadcast %107 : vector<8x1xf32> to vector<8x128xf32>
    %109 = arith.subf %103, %108 : vector<8x128xf32>
    %cst_72 = arith.constant 0.000000e+00 : f32
    %110 = vector.shape_cast %54 : vector<1x128xi1> to vector<1x128xi1>
    %111 = vector.broadcast %110 : vector<1x128xi1> to vector<8x128xi1>
    %112 = vector.broadcast %cst_72 : f32 to vector<8x128xf32>
    %113 = arith.select %111, %109, %112 : vector<8x128xi1>, vector<8x128xf32>
    %114 = arith.mulf %113, %113 : vector<8x128xf32>
    %cst_73 = arith.constant dense<0.000000e+00> : vector<8xf32>
    %115 = vector.multi_reduction <add>, %114, %cst_73 [1] : vector<8x128xf32> to vector<8xf32>
    %116 = vector.shape_cast %115 : vector<8xf32> to vector<8x1xf32>
    %cst_74 = arith.constant 3.125000e-02 : f32
    %117 = vector.broadcast %cst_74 : f32 to vector<8x1xf32>
    %118 = arith.mulf %116, %117 : vector<8x1xf32>
    %cst_75 = arith.constant 9.99999974E-6 : f32
    %119 = vector.broadcast %cst_75 : f32 to vector<8x1xf32>
    %120 = arith.addf %118, %119 : vector<8x1xf32>
    %121 = math.rsqrt %120 : vector<8x1xf32>
    %122 = vector.broadcast %121 : vector<8x1xf32> to vector<8x128xf32>
    %123 = arith.mulf %113, %122 : vector<8x128xf32>
    %c1_76 = arith.constant 1 : index
    %c3_77 = arith.constant 3 : index
    %c0_78 = arith.constant 0 : index
    %124 = vector.load %arg7[%c1_76, %c3_77, %c0_78] : memref<3x5x128xf32, #tpu.memory_space<vmem>>, vector<1x1x128xf32>
    %125 = vector.shape_cast %124 : vector<1x1x128xf32> to vector<1x128xf32>
    %126 = vector.broadcast %125 : vector<1x128xf32> to vector<8x128xf32>
    %127 = arith.mulf %123, %126 : vector<8x128xf32>
    %c1_79 = arith.constant 1 : index
    %c4_80 = arith.constant 4 : index
    %c0_81 = arith.constant 0 : index
    %128 = vector.load %arg7[%c1_79, %c4_80, %c0_81] : memref<3x5x128xf32, #tpu.memory_space<vmem>>, vector<1x1x128xf32>
    %129 = vector.shape_cast %128 : vector<1x1x128xf32> to vector<1x128xf32>
    %130 = vector.broadcast %129 : vector<1x128xf32> to vector<8x128xf32>
    %131 = arith.addf %127, %130 : vector<8x128xf32>
    %132 = arith.truncf %131 : vector<8x128xf32> to vector<8x128xbf16>
    %c1_82 = arith.constant 1 : index
    %c0_83 = arith.constant 0 : index
    %c0_84 = arith.constant 0 : index
    %133 = vector.load %arg6[%c1_82, %c0_83, %c0_84] : memref<2x128x128xbf16, #tpu.memory_space<vmem>>, vector<1x128x128xbf16>
    %134 = vector.shape_cast %133 : vector<1x128x128xbf16> to vector<128x128xbf16>
    %cst_85 = arith.constant dense<0.000000e+00> : vector<8x128xf32>
    %135 = tpu.matmul %132, %134, %cst_85 {dimension_numbers = #tpu.dot_dimension_numbers<[1], [0], [0], [1], [0, 0, 1, 1], [], []>} : vector<8x128xbf16>, vector<128x128xbf16>, vector<8x128xf32> -> vector<8x128xf32>
    %c2_86 = arith.constant 2 : index
    %c0_87 = arith.constant 0 : index
    %c0_88 = arith.constant 0 : index
    %136 = vector.load %arg7[%c2_86, %c0_87, %c0_88] : memref<3x5x128xf32, #tpu.memory_space<vmem>>, vector<1x1x128xf32>
    %137 = vector.shape_cast %136 : vector<1x1x128xf32> to vector<1x128xf32>
    %138 = vector.broadcast %137 : vector<1x128xf32> to vector<8x128xf32>
    %139 = arith.addf %135, %138 : vector<8x128xf32>
    %cst_89 = arith.constant 0.000000e+00 : f32
    %140 = vector.broadcast %cst_89 : f32 to vector<8x128xf32>
    %141 = arith.maximumf %139, %140 : vector<8x128xf32>
    %142 = arith.addf %141, %51 : vector<8x128xf32>
    %cst_90 = arith.constant dense<0.000000e+00> : vector<8xf32>
    %143 = vector.multi_reduction <add>, %142, %cst_90 [1] : vector<8x128xf32> to vector<8xf32>
    %144 = vector.shape_cast %143 : vector<8xf32> to vector<8x1xf32>
    %cst_91 = arith.constant 3.125000e-02 : f32
    %145 = vector.broadcast %cst_91 : f32 to vector<8x1xf32>
    %146 = arith.mulf %144, %145 : vector<8x1xf32>
    %147 = vector.broadcast %146 : vector<8x1xf32> to vector<8x128xf32>
    %148 = arith.subf %142, %147 : vector<8x128xf32>
    %cst_92 = arith.constant 0.000000e+00 : f32
    %149 = vector.shape_cast %54 : vector<1x128xi1> to vector<1x128xi1>
    %150 = vector.broadcast %149 : vector<1x128xi1> to vector<8x128xi1>
    %151 = vector.broadcast %cst_92 : f32 to vector<8x128xf32>
    %152 = arith.select %150, %148, %151 : vector<8x128xi1>, vector<8x128xf32>
    %153 = arith.mulf %152, %152 : vector<8x128xf32>
    %cst_93 = arith.constant dense<0.000000e+00> : vector<8xf32>
    %154 = vector.multi_reduction <add>, %153, %cst_93 [1] : vector<8x128xf32> to vector<8xf32>
    %155 = vector.shape_cast %154 : vector<8xf32> to vector<8x1xf32>
    %cst_94 = arith.constant 3.125000e-02 : f32
    %156 = vector.broadcast %cst_94 : f32 to vector<8x1xf32>
    %157 = arith.mulf %155, %156 : vector<8x1xf32>
    %cst_95 = arith.constant 9.99999974E-6 : f32
    %158 = vector.broadcast %cst_95 : f32 to vector<8x1xf32>
    %159 = arith.addf %157, %158 : vector<8x1xf32>
    %160 = math.rsqrt %159 : vector<8x1xf32>
    %161 = vector.broadcast %160 : vector<8x1xf32> to vector<8x128xf32>
    %162 = arith.mulf %152, %161 : vector<8x128xf32>
    %c2_96 = arith.constant 2 : index
    %c3_97 = arith.constant 3 : index
    %c0_98 = arith.constant 0 : index
    %163 = vector.load %arg7[%c2_96, %c3_97, %c0_98] : memref<3x5x128xf32, #tpu.memory_space<vmem>>, vector<1x1x128xf32>
    %164 = vector.shape_cast %163 : vector<1x1x128xf32> to vector<1x128xf32>
    %165 = vector.broadcast %164 : vector<1x128xf32> to vector<8x128xf32>
    %166 = arith.mulf %162, %165 : vector<8x128xf32>
    %c2_99 = arith.constant 2 : index
    %c4_100 = arith.constant 4 : index
    %c0_101 = arith.constant 0 : index
    %167 = vector.load %arg7[%c2_99, %c4_100, %c0_101] : memref<3x5x128xf32, #tpu.memory_space<vmem>>, vector<1x1x128xf32>
    %168 = vector.shape_cast %167 : vector<1x1x128xf32> to vector<1x128xf32>
    %169 = vector.broadcast %168 : vector<1x128xf32> to vector<8x128xf32>
    %170 = arith.addf %166, %169 : vector<8x128xf32>
    %171 = arith.truncf %170 : vector<8x128xf32> to vector<8x128xbf16>
    %c0_102 = arith.constant 0 : index
    %c0_103 = arith.constant 0 : index
    %172 = vector.load %arg8[%c0_102, %c0_103] : memref<128x128xbf16, #tpu.memory_space<vmem>>, vector<128x128xbf16>
    %cst_104 = arith.constant dense<0.000000e+00> : vector<8x128xf32>
    %173 = tpu.matmul %171, %172, %cst_104 {dimension_numbers = #tpu.dot_dimension_numbers<[1], [0], [0], [1], [0, 0, 1, 1], [], []>} : vector<8x128xbf16>, vector<128x128xbf16>, vector<8x128xf32> -> vector<8x128xf32>
    %c0_105 = arith.constant 0 : index
    %c0_106 = arith.constant 0 : index
    %174 = vector.load %arg9[%c0_105, %c0_106] : memref<1x128xf32, #tpu.memory_space<vmem>>, vector<1x128xf32>
    %175 = vector.broadcast %174 : vector<1x128xf32> to vector<8x128xf32>
    %176 = arith.addf %173, %175 : vector<8x128xf32>
    %c0_107 = arith.constant 0 : index
    %c0_108 = arith.constant 0 : index
    %177 = vector.load %arg10[%c0_107, %c0_108] : memref<8x128xf32, #tpu.memory_space<vmem>>, vector<8x128xf32>
    tpu.vector_store %arg10[%c0_107, %c0_108], %176 {strides = array<i32>} : memref<8x128xf32, #tpu.memory_space<vmem>>, vector<8x128xf32>,
    return
  }
  func.func @transform_0(%arg0: i32) -> (i32, i32) {
    %c0_i32 = arith.constant 0 : i32
    %c0_i32_0 = arith.constant 0 : i32
    return %arg0, %c0_i32 : i32, i32
  }
  func.func @transform_1(%arg0: i32) -> (i32, i32) {
    %c0_i32 = arith.constant 0 : i32
    %c0_i32_0 = arith.constant 0 : i32
    return %arg0, %c0_i32 : i32, i32
  }
  func.func @transform_2(%arg0: i32) -> (i32, i32, i32) {
    %c0_i32 = arith.constant 0 : i32
    %c0_i32_0 = arith.constant 0 : i32
    %c0_i32_1 = arith.constant 0 : i32
    %c0_i32_2 = arith.constant 0 : i32
    return %c0_i32, %c0_i32_0, %c0_i32_1 : i32, i32, i32
  }
  func.func @transform_3(%arg0: i32) -> (i32, i32, i32) {
    %c0_i32 = arith.constant 0 : i32
    %c0_i32_0 = arith.constant 0 : i32
    %c0_i32_1 = arith.constant 0 : i32
    %c0_i32_2 = arith.constant 0 : i32
    return %c0_i32, %c0_i32_0, %c0_i32_1 : i32, i32, i32
  }
  func.func @transform_4(%arg0: i32) -> (i32, i32) {
    %c0_i32 = arith.constant 0 : i32
    %c0_i32_0 = arith.constant 0 : i32
    %c0_i32_1 = arith.constant 0 : i32
    return %c0_i32, %c0_i32_0 : i32, i32
  }
  func.func @transform_5(%arg0: i32) -> (i32, i32, i32) {
    %c0_i32 = arith.constant 0 : i32
    %c0_i32_0 = arith.constant 0 : i32
    %c0_i32_1 = arith.constant 0 : i32
    %c0_i32_2 = arith.constant 0 : i32
    return %c0_i32, %c0_i32_0, %c0_i32_1 : i32, i32, i32
  }
  func.func @transform_6(%arg0: i32) -> (i32, i32, i32) {
    %c0_i32 = arith.constant 0 : i32
    %c0_i32_0 = arith.constant 0 : i32
    %c0_i32_1 = arith.constant 0 : i32
    %c0_i32_2 = arith.constant 0 : i32
    return %c0_i32, %c0_i32_0, %c0_i32_1 : i32, i32, i32
  }
  func.func @transform_7(%arg0: i32) -> (i32, i32) {
    %c0_i32 = arith.constant 0 : i32
    %c0_i32_0 = arith.constant 0 : i32
    %c0_i32_1 = arith.constant 0 : i32
    return %c0_i32, %c0_i32_0 : i32, i32
  }
  func.func @transform_8(%arg0: i32) -> (i32, i32) {
    %c0_i32 = arith.constant 0 : i32
    %c0_i32_0 = arith.constant 0 : i32
    %c0_i32_1 = arith.constant 0 : i32
    return %c0_i32, %c0_i32_0 : i32, i32
  }
  func.func @transform_9(%arg0: i32) -> (i32, i32) {
    %c0_i32 = arith.constant 0 : i32
    %c0_i32_0 = arith.constant 0 : i32
    return %arg0, %c0_i32 : i32, i32
  }
}

</mosaic_0001>

<llo_original>
// kernel: tpu_custom_call.1
$region0: #{tpu_custom_call.1}
  #allocation0 [shape = 'u32[]', space=smem, size = 0x4, offset = 0x4, fixed_abs, tag = 'smem constant byte address 0x4 - core index']
  #allocation1 [shape = 'u32[144,128]{1,0:T(1,128)}', space=vmem, size = 0x12000, scoped, tag = 'internal scratch']
  %s0 = inlined_call_operand.vmem [shape: bf16[8,128], index: 0, kind: input, shape index: {}]
  %s1 = inlined_call_operand.hbm [shape: bf16[8,128], index: 1, kind: input, shape index: {}]
  %s2 = inlined_call_operand.hbm [shape: bf16[3,128,128], index: 2, kind: input, shape index: {}]
  %s3 = inlined_call_operand.hbm [shape: bf16[3,128,128], index: 3, kind: input, shape index: {}]
  %s4 = inlined_call_operand.hbm [shape: bf16[128,128], index: 4, kind: input, shape index: {}]
  %s5 = inlined_call_operand.hbm [shape: bf16[2,128,128], index: 5, kind: input, shape index: {}]
  %s6 = inlined_call_operand.vmem [shape: f32[3,5,128], index: 6, kind: input, shape index: {}]
  %s7 = inlined_call_operand.vmem [shape: bf16[128,128], index: 7, kind: input, shape index: {}]
  %s8 = inlined_call_operand.vmem [shape: f32[1,128], index: 8, kind: input, shape index: {}]
  %s9 = inlined_call_operand.hbm [shape: f32[8,128], index: 9, kind: output, shape index: {}]
  %s10 = sld [smem:[#allocation0]]
  $region66: #{tpu_custom_call.1} parent=0
    _
  %s12 = ssub.s32 1, %s10
  %s13 = scalar_select 0, %s12, %s10
  $region1: #{tpu_custom_call.1} parent=0
    #allocation2 [shape = 'u8[2048]{0}', space=vmem, size = 0x800, scoped, tag = 'input window, operand 1, single buffered']
    #allocation3 [shape = 's32[1]{0}', space=sflag, size = 0x4, scoped, tag = 'scoped memory for tpu_custom_call.1']
    #allocation4 [shape = 's32[1]{0}', space=sflag, size = 0x4, scoped, tag = 'scoped memory for tpu_custom_call.1']
    #allocation5 [shape = 'u8[98304]{0}', space=vmem, size = 0x18000, scoped, tag = 'input window, operand 2, single buffered']
    #allocation6 [shape = 's32[1]{0}', space=sflag, size = 0x4, scoped, tag = 'scoped memory for tpu_custom_call.1']
    #allocation7 [shape = 'u8[98304]{0}', space=vmem, size = 0x18000, scoped, tag = 'input window, operand 3, single buffered']
    #allocation8 [shape = 'u8[32768]{0}', space=vmem, size = 0x8000, scoped, tag = 'input window, operand 4, single buffered']
    #allocation9 [shape = 's32[1]{0}', space=sflag, size = 0x4, scoped, tag = 'scoped memory for tpu_custom_call.1']
    #allocation10 [shape = 'u8[65536]{0}', space=vmem, size = 0x10000, scoped, tag = 'input window, operand 5, single buffered']
    #allocation11 [shape = 'u8[4096]{0}', space=vmem, size = 0x1000, scoped, tag = 'output window, operand 0, single buffered']
    %14 = vsyncpa [#allocation3], 0
    %15 = vsyncpa [#allocation6], 0
    %16 = vsyncpa [#allocation9], 0
    %17 = vsyncpa [#allocation4], 0
    // Predicated region
    $region2: #{tpu_custom_call.1} parent=1 // pred_check
      _
    $region3: #{tpu_custom_call.1} parent=1 // pred_check_branch
      %19 = sbr.rel (0) target = $region5
    $region4: #{tpu_custom_call.1} parent=1 // pred_region
      _
    $region5: #{tpu_custom_call.1} parent=1 // pred_fallthru
      _
    // Predicated region
    $region6: #{tpu_custom_call.1} parent=1 // pred_check
      _
    $region7: #{tpu_custom_call.1} parent=1 // pred_check_branch
      %21 = sbr.rel (0) target = $region9
    $region8: #{tpu_custom_call.1} parent=1 // pred_region
      %s23 = ssub.s32 64, 64
      %24 = vsyncadd [#allocation3], %s23
      %s26 = sshll.u32 [#allocation2], 4
      %s27 = int_to_ptr.vmem [resolvable:$true] %s26
      %29 = dma.hbm_to_vmem [thread:$0]  %s1, 64, %s27, [#allocation3]
    $region9: #{tpu_custom_call.1} parent=1 // pred_fallthru
      _
    // Predicated region
    $region10: #{tpu_custom_call.1} parent=1 // pred_check
      _
    $region11: #{tpu_custom_call.1} parent=1 // pred_check_branch
      %31 = sbr.rel (0) target = $region13
    $region12: #{tpu_custom_call.1} parent=1 // pred_region
      %s33 = ssub.s32 3072, 3072
      %34 = vsyncadd [#allocation6], %s33
      %s35 = sshll.u32 [#allocation5], 4
      %s36 = int_to_ptr.vmem [resolvable:$true] %s35
      %41 = dma.hbm_to_vmem [thread:$0]  %s2, 3072, %s36, [#allocation6], 64, 64, 4
    $region13: #{tpu_custom_call.1} parent=1 // pred_fallthru
      _
    // Predicated region
    $region14: #{tpu_custom_call.1} parent=1 // pred_check
      _
    $region15: #{tpu_custom_call.1} parent=1 // pred_check_branch
      %43 = sbr.rel (0) target = $region17
    $region16: #{tpu_custom_call.1} parent=1 // pred_region
      %s45 = ssub.s32 3072, 3072
      %46 = vsyncadd [#allocation6], %s45
      %s47 = sshll.u32 [#allocation7], 4
      %s48 = int_to_ptr.vmem [resolvable:$true] %s47
      %53 = dma.hbm_to_vmem [thread:$0]  %s3, 3072, %s48, [#allocation6], 64, 64, 4
    $region17: #{tpu_custom_call.1} parent=1 // pred_fallthru
      _
    // Predicated region
    $region18: #{tpu_custom_call.1} parent=1 // pred_check
      _
    $region19: #{tpu_custom_call.1} parent=1 // pred_check_branch
      %55 = sbr.rel (0) target = $region21
    $region20: #{tpu_custom_call.1} parent=1 // pred_region
      %s57 = ssub.s32 1024, 1024
      %58 = vsyncadd [#allocation9], %s57
      %s59 = sshll.u32 [#allocation8], 4
      %s60 = int_to_ptr.vmem [resolvable:$true] %s59
      %65 = dma.hbm_to_vmem [thread:$0]  %s4, 1024, %s60, [#allocation9], 64, 64, 4
    $region21: #{tpu_custom_call.1} parent=1 // pred_fallthru
      _
    // Predicated region
    $region22: #{tpu_custom_call.1} parent=1 // pred_check
      _
    $region23: #{tpu_custom_call.1} parent=1 // pred_check_branch
      %67 = sbr.rel (0) target = $region25
    $region24: #{tpu_custom_call.1} parent=1 // pred_region
      %s69 = ssub.s32 2048, 2048
      %70 = vsyncadd [#allocation9], %s69
      %s71 = sshll.u32 [#allocation10], 4
      %s72 = int_to_ptr.vmem [resolvable:$true] %s71
      %77 = dma.hbm_to_vmem [thread:$0]  %s5, 2048, %s72, [#allocation9], 64, 64, 4
    $region25: #{tpu_custom_call.1} parent=1 // pred_fallthru
      _
    // Predicated region
    $region26: #{tpu_custom_call.1} parent=1 // pred_check
      _
    $region27: #{tpu_custom_call.1} parent=1 // pred_check_branch
      %79 = sbr.rel (0) target = $region29
    $region28: #{tpu_custom_call.1} parent=1 // pred_region
      _
    $region29: #{tpu_custom_call.1} parent=1 // pred_fallthru
      _
    // Predicated region
    $region30: #{tpu_custom_call.1} parent=1 // pred_check
      _
    $region31: #{tpu_custom_call.1} parent=1 // pred_check_branch
      %81 = sbr.rel (0) target = $region33
    $region32: #{tpu_custom_call.1} parent=1 // pred_region
      _
    $region33: #{tpu_custom_call.1} parent=1 // pred_fallthru
      _
    // Predicated region
    $region34: #{tpu_custom_call.1} parent=1 // pred_check
      _
    $region35: #{tpu_custom_call.1} parent=1 // pred_check_branch
      %83 = sbr.rel (0) target = $region37
    $region36: #{tpu_custom_call.1} parent=1 // pred_region
      _
    $region37: #{tpu_custom_call.1} parent=1 // pred_fallthru
      _
    // Predicated region
    $region38: #{tpu_custom_call.1} parent=1 // pred_check
      _
    $region39: #{tpu_custom_call.1} parent=1 // pred_check_branch
      %85 = sbr.rel (0) target = $region41
    $region40: #{tpu_custom_call.1} parent=1 // pred_region
      %86 = dma.done [#allocation3], 64
    $region41: #{tpu_custom_call.1} parent=1 // pred_fallthru
      _
    // Predicated region
    $region42: #{tpu_custom_call.1} parent=1 // pred_check
      _
    $region43: #{tpu_custom_call.1} parent=1 // pred_check_branch
      %88 = sbr.rel (0) target = $region45
    $region44: #{tpu_custom_call.1} parent=1 // pred_region
      %89 = dma.done [#allocation6], 3072
    $region45: #{tpu_custom_call.1} parent=1 // pred_fallthru
      _
    // Predicated region
    $region46: #{tpu_custom_call.1} parent=1 // pred_check
      _
    $region47: #{tpu_custom_call.1} parent=1 // pred_check_branch
      %91 = sbr.rel (0) target = $region49
    $region48: #{tpu_custom_call.1} parent=1 // pred_region
      %92 = dma.done [#allocation6], 3072
    $region49: #{tpu_custom_call.1} parent=1 // pred_fallthru
      _
    // Predicated region
    $region50: #{tpu_custom_call.1} parent=1 // pred_check
      _
    $region51: #{tpu_custom_call.1} parent=1 // pred_check_branch
      %94 = sbr.rel (0) target = $region53
    $region52: #{tpu_custom_call.1} parent=1 // pred_region
      %95 = dma.done [#allocation9], 1024
    $region53: #{tpu_custom_call.1} parent=1 // pred_fallthru
      _
    // Predicated region
    $region54: #{tpu_custom_call.1} parent=1 // pred_check
      _
    $region55: #{tpu_custom_call.1} parent=1 // pred_check_branch
      %97 = sbr.rel (0) target = $region57
    $region56: #{tpu_custom_call.1} parent=1 // pred_region
      %98 = dma.done [#allocation9], 2048
    $region57: #{tpu_custom_call.1} parent=1 // pred_fallthru
      _
    %v100 = vld [vmem:[#allocation2] sm:$0xf]
    %v101 = vld [vmem:[#allocation5] sm:$0xf]
    %v102 = vld [vmem:[#allocation5 + $0x4] sm:$0xf]
    %v103 = vld [vmem:[#allocation5 + $0x8] sm:$0xf]
    %v104 = vld [vmem:[#allocation5 + $0xc] sm:$0xf]
    %v105 = vld [vmem:[#allocation5 + $0x10] sm:$0xf]
    %v106 = vld [vmem:[#allocation5 + $0x14] sm:$0xf]
    %v107 = vld [vmem:[#allocation5 + $0x18] sm:$0xf]
    %v108 = vld [vmem:[#allocation5 + $0x1c] sm:$0xf]
    %v109 = vld [vmem:[#allocation5 + $0x20] sm:$0xf]
    %v110 = vld [vmem:[#allocation5 + $0x24] sm:$0xf]
    %v111 = vld [vmem:[#allocation5 + $0x28] sm:$0xf]
    %v112 = vld [vmem:[#allocation5 + $0x2c] sm:$0xf]
    %v113 = vld [vmem:[#allocation5 + $0x30] sm:$0xf]
    %v114 = vld [vmem:[#allocation5 + $0x34] sm:$0xf]
    %v115 = vld [vmem:[#allocation5 + $0x38] sm:$0xf]
    %v116 = vld [vmem:[#allocation5 + $0x3c] sm:$0xf]
    %v117 = vld [vmem:[%s6 + $0x1] sm:$0x1]
    %v118 = vlaneseq
    %v119 = vshrl.u32 %v118, 7
    %v120 = vsub.s32 0, %v119
    %v121 = vrot.slane %v117, %v120
    %v138 = vunpack.c.l.b16 %v101
    %v139 = vunpack.c.l.b16 %v102
    %v140 = vunpack.c.l.b16 %v103
    %v141 = vunpack.c.l.b16 %v104
    %v142 = vunpack.c.l.b16 %v105
    %v143 = vunpack.c.l.b16 %v106
    %v144 = vunpack.c.l.b16 %v107
    %v145 = vunpack.c.l.b16 %v108
    %v146 = vunpack.c.l.b16 %v109
    %v147 = vunpack.c.l.b16 %v110
    %v148 = vunpack.c.l.b16 %v111
    %v149 = vunpack.c.l.b16 %v112
    %v150 = vunpack.c.l.b16 %v113
    %v151 = vunpack.c.l.b16 %v114
    %v152 = vunpack.c.l.b16 %v115
    %v153 = vunpack.c.l.b16 %v116
    %v154 = vpack.c.b16 %v139, %v138
    %v155 = vpack.c.b16 %v141, %v140
    %v156 = vpack.c.b16 %v143, %v142
    %v157 = vpack.c.b16 %v145, %v144
    %v158 = vpack.c.b16 %v147, %v146
    %v159 = vpack.c.b16 %v149, %v148
    %v160 = vpack.c.b16 %v151, %v150
    %v161 = vpack.c.b16 %v153, %v152
    %170 = vmatprep.subr.bf16.mxu0 0
    %171 = vmatpush1.bf16.msra.mxu0 %v154
    %172 = vmatprep.subr.bf16.mxu0 0
    %173 = vmatpush1.bf16.msra.mxu0 %v155
    %174 = vmatprep.subr.bf16.mxu0 0
    %175 = vmatpush1.bf16.msra.mxu0 %v156
    %176 = vmatprep.subr.bf16.mxu0 0
    %177 = vmatpush1.bf16.msra.mxu0 %v157
    %178 = vmatprep.subr.bf16.mxu0 0
    %179 = vmatpush1.bf16.msra.mxu0 %v158
    %180 = vmatprep.subr.bf16.mxu0 0
    %181 = vmatpush1.bf16.msra.mxu0 %v159
    %182 = vmatprep.subr.bf16.mxu0 0
    %183 = vmatpush1.bf16.msra.mxu0 %v160
    %184 = vmatprep.subr.bf16.mxu0 0
    %185 = vmatpush1.bf16.msra.mxu0 %v161
    %186 = vmatprep.subr.bf16.mxu0 0
    %187 = vmatpush1.bf16.msra.mxu0 0
    %188 = vmatprep.subr.bf16.mxu0 0
    %189 = vmatpush1.bf16.msra.mxu0 0
    %190 = vmatprep.subr.bf16.mxu0 0
    %191 = vmatpush1.bf16.msra.mxu0 0
    %192 = vmatprep.subr.bf16.mxu0 0
    %193 = vmatpush1.bf16.msra.mxu0 0
    %194 = vmatprep.subr.bf16.mxu0 0
    %195 = vmatpush1.bf16.msra.mxu0 0
    %196 = vmatprep.subr.bf16.mxu0 0
    %197 = vmatpush1.bf16.msra.mxu0 0
    %198 = vmatprep.subr.bf16.mxu0 0
    %199 = vmatpush1.bf16.msra.mxu0 0
    %200 = vmatprep.subr.bf16.mxu0 0
    %201 = vmatpush1.bf16.msra.mxu0 0
    %202 = vmatprep.mubr.bf16.mxu0 0
    %203 = vmatmul.mubr.bf16.gmra.mrb[0].mxu0 %v100
    %v204 = vpop.f32.mrb[0].mxu0
    %v205 = vadd.f32 %v121, %v204
    %v206 = vpop.f32.mrb[0].mxu0
    %v207 = vpop.f32.mrb[0].mxu0
    %v208 = vpop.f32.mrb[0].mxu0
    %209 = vdwg.mxu0
    %v210 = vmax.f32 %v205, 0.0
    %v211 = vpack.c.bf16 %v210, %v210
    %v212 = vld [vmem:[#allocation7] sm:$0xf]
    %v213 = vld [vmem:[#allocation7 + $0x4] sm:$0xf]
    %v214 = vld [vmem:[#allocation7 + $0x8] sm:$0xf]
    %v215 = vld [vmem:[#allocation7 + $0xc] sm:$0xf]
    %v216 = vld [vmem:[#allocation7 + $0x10] sm:$0xf]
    %v217 = vld [vmem:[#allocation7 + $0x14] sm:$0xf]
    %v218 = vld [vmem:[#allocation7 + $0x18] sm:$0xf]
    %v219 = vld [vmem:[#allocation7 + $0x1c] sm:$0xf]
    %v220 = vld [vmem:[#allocation7 + $0x20] sm:$0xf]
    %v221 = vld [vmem:[#allocation7 + $0x24] sm:$0xf]
    %v222 = vld [vmem:[#allocation7 + $0x28] sm:$0xf]
    %v223 = vld [vmem:[#allocation7 + $0x2c] sm:$0xf]
    %v224 = vld [vmem:[#allocation7 + $0x30] sm:$0xf]
    %v225 = vld [vmem:[#allocation7 + $0x34] sm:$0xf]
    %v226 = vld [vmem:[#allocation7 + $0x38] sm:$0xf]
    %v227 = vld [vmem:[#allocation7 + $0x3c] sm:$0xf]
    %v228 = vld [vmem:[%s6 + $0x2] sm:$0x1]
    %v229 = vlaneseq
    %v230 = vshrl.u32 %v229, 7
    %v231 = vsub.s32 0, %v230
    %v232 = vrot.slane %v228, %v231
    %v249 = vunpack.c.l.b16 %v212
    %v250 = vunpack.c.l.b16 %v213
    %v251 = vunpack.c.l.b16 %v214
    %v252 = vunpack.c.l.b16 %v215
    %v253 = vunpack.c.l.b16 %v216
    %v254 = vunpack.c.l.b16 %v217
    %v255 = vunpack.c.l.b16 %v218
    %v256 = vunpack.c.l.b16 %v219
    %v257 = vunpack.c.l.b16 %v220
    %v258 = vunpack.c.l.b16 %v221
    %v259 = vunpack.c.l.b16 %v222
    %v260 = vunpack.c.l.b16 %v223
    %v261 = vunpack.c.l.b16 %v224
    %v262 = vunpack.c.l.b16 %v225
    %v263 = vunpack.c.l.b16 %v226
    %v264 = vunpack.c.l.b16 %v227
    %v265 = vpack.c.b16 %v250, %v249
    %v266 = vpack.c.b16 %v252, %v251
    %v267 = vpack.c.b16 %v254, %v253
    %v268 = vpack.c.b16 %v256, %v255
    %v269 = vpack.c.b16 %v258, %v257
    %v270 = vpack.c.b16 %v260, %v259
    %v271 = vpack.c.b16 %v262, %v261
    %v272 = vpack.c.b16 %v264, %v263
    %281 = vmatprep.subr.bf16.mxu0 0
    %282 = vmatpush1.bf16.msra.mxu0 %v265
    %283 = vmatprep.subr.bf16.mxu0 0
    %284 = vmatpush1.bf16.msra.mxu0 %v266
    %285 = vmatprep.subr.bf16.mxu0 0
    %286 = vmatpush1.bf16.msra.mxu0 %v267
    %287 = vmatprep.subr.bf16.mxu0 0
    %288 = vmatpush1.bf16.msra.mxu0 %v268
    %289 = vmatprep.subr.bf16.mxu0 0
    %290 = vmatpush1.bf16.msra.mxu0 %v269
    %291 = vmatprep.subr.bf16.mxu0 0
    %292 = vmatpush1.bf16.msra.mxu0 %v270
    %293 = vmatprep.subr.bf16.mxu0 0
    %294 = vmatpush1.bf16.msra.mxu0 %v271
    %295 = vmatprep.subr.bf16.mxu0 0
    %296 = vmatpush1.bf16.msra.mxu0 %v272
    %297 = vmatprep.subr.bf16.mxu0 0
    %298 = vmatpush1.bf16.msra.mxu0 0
    %299 = vmatprep.subr.bf16.mxu0 0
    %300 = vmatpush1.bf16.msra.mxu0 0
    %301 = vmatprep.subr.bf16.mxu0 0
    %302 = vmatpush1.bf16.msra.mxu0 0
    %303 = vmatprep.subr.bf16.mxu0 0
    %304 = vmatpush1.bf16.msra.mxu0 0
    %305 = vmatprep.subr.bf16.mxu0 0
    %306 = vmatpush1.bf16.msra.mxu0 0
    %307 = vmatprep.subr.bf16.mxu0 0
    %308 = vmatpush1.bf16.msra.mxu0 0
    %309 = vmatprep.subr.bf16.mxu0 0
    %310 = vmatpush1.bf16.msra.mxu0 0
    %311 = vmatprep.subr.bf16.mxu0 0
    %312 = vmatpush1.bf16.msra.mxu0 0
    %313 = vmatprep.mubr.bf16.mxu0 0
    %314 = vmatmul.mubr.bf16.gmra.mrb[0].mxu0 %v211
    %v315 = vpop.f32.mrb[0].mxu0
    %v316 = vadd.f32 %v232, %v315
    %v317 = vpop.f32.mrb[0].mxu0
    %v318 = vpop.f32.mrb[0].mxu0
    %v319 = vpop.f32.mrb[0].mxu0
    %320 = vdwg.mxu0
    %s321 = scalar_lea.vmem [#allocation5], 64
    %v322 = vld [vmem:[%s321] sm:$0xf]
    %v323 = vld [vmem:[%s321 + $0x4] sm:$0xf]
    %v324 = vld [vmem:[%s321 + $0x8] sm:$0xf]
    %v325 = vld [vmem:[%s321 + $0xc] sm:$0xf]
    %v326 = vld [vmem:[%s321 + $0x10] sm:$0xf]
    %v327 = vld [vmem:[%s321 + $0x14] sm:$0xf]
    %v328 = vld [vmem:[%s321 + $0x18] sm:$0xf]
    %v329 = vld [vmem:[%s321 + $0x1c] sm:$0xf]
    %v330 = vld [vmem:[%s321 + $0x20] sm:$0xf]
    %v331 = vld [vmem:[%s321 + $0x24] sm:$0xf]
    %v332 = vld [vmem:[%s321 + $0x28] sm:$0xf]
    %v333 = vld [vmem:[%s321 + $0x2c] sm:$0xf]
    %v334 = vld [vmem:[%s321 + $0x30] sm:$0xf]
    %v335 = vld [vmem:[%s321 + $0x34] sm:$0xf]
    %v336 = vld [vmem:[%s321 + $0x38] sm:$0xf]
    %v337 = vld [vmem:[%s321 + $0x3c] sm:$0xf]
    %s338 = scalar_lea.vmem %s6, 8
    %v339 = vld [vmem:[%s338 + $0x1] sm:$0x1]
    %v340 = vlaneseq
    %v341 = vshrl.u32 %v340, 7
    %v342 = vsub.s32 0, %v341
    %v343 = vrot.slane %v339, %v342
    %v360 = vunpack.c.l.b16 %v322
    %v361 = vunpack.c.l.b16 %v323
    %v362 = vunpack.c.l.b16 %v324
    %v363 = vunpack.c.l.b16 %v325
    %v364 = vunpack.c.l.b16 %v326
    %v365 = vunpack.c.l.b16 %v327
    %v366 = vunpack.c.l.b16 %v328
    %v367 = vunpack.c.l.b16 %v329
    %v368 = vunpack.c.l.b16 %v330
    %v369 = vunpack.c.l.b16 %v331
    %v370 = vunpack.c.l.b16 %v332
    %v371 = vunpack.c.l.b16 %v333
    %v372 = vunpack.c.l.b16 %v334
    %v373 = vunpack.c.l.b16 %v335
    %v374 = vunpack.c.l.b16 %v336
    %v375 = vunpack.c.l.b16 %v337
    %v376 = vpack.c.b16 %v361, %v360
    %v377 = vpack.c.b16 %v363, %v362
    %v378 = vpack.c.b16 %v365, %v364
    %v379 = vpack.c.b16 %v367, %v366
    %v380 = vpack.c.b16 %v369, %v368
    %v381 = vpack.c.b16 %v371, %v370
    %v382 = vpack.c.b16 %v373, %v372
    %v383 = vpack.c.b16 %v375, %v374
    %392 = vmatprep.subr.bf16.mxu0 0
    %393 = vmatpush1.bf16.msra.mxu0 %v376
    %394 = vmatprep.subr.bf16.mxu0 0
    %395 = vmatpush1.bf16.msra.mxu0 %v377
    %396 = vmatprep.subr.bf16.mxu0 0
    %397 = vmatpush1.bf16.msra.mxu0 %v378
    %398 = vmatprep.subr.bf16.mxu0 0
    %399 = vmatpush1.bf16.msra.mxu0 %v379
    %400 = vmatprep.subr.bf16.mxu0 0
    %401 = vmatpush1.bf16.msra.mxu0 %v380
    %402 = vmatprep.subr.bf16.mxu0 0
    %403 = vmatpush1.bf16.msra.mxu0 %v381
    %404 = vmatprep.subr.bf16.mxu0 0
    %405 = vmatpush1.bf16.msra.mxu0 %v382
    %406 = vmatprep.subr.bf16.mxu0 0
    %407 = vmatpush1.bf16.msra.mxu0 %v383
    %408 = vmatprep.subr.bf16.mxu0 0
    %409 = vmatpush1.bf16.msra.mxu0 0
    %410 = vmatprep.subr.bf16.mxu0 0
    %411 = vmatpush1.bf16.msra.mxu0 0
    %412 = vmatprep.subr.bf16.mxu0 0
    %413 = vmatpush1.bf16.msra.mxu0 0
    %414 = vmatprep.subr.bf16.mxu0 0
    %415 = vmatpush1.bf16.msra.mxu0 0
    %416 = vmatprep.subr.bf16.mxu0 0
    %417 = vmatpush1.bf16.msra.mxu0 0
    %418 = vmatprep.subr.bf16.mxu0 0
    %419 = vmatpush1.bf16.msra.mxu0 0
    %420 = vmatprep.subr.bf16.mxu0 0
    %421 = vmatpush1.bf16.msra.mxu0 0
    %422 = vmatprep.subr.bf16.mxu0 0
    %423 = vmatpush1.bf16.msra.mxu0 0
    %424 = vmatprep.mubr.bf16.mxu0 0
    %425 = vmatmul.mubr.bf16.gmra.mrb[0].mxu0 %v100
    %v426 = vpop.f32.mrb[0].mxu0
    %v427 = vadd.f32 %v343, %v426
    %v428 = vpop.f32.mrb[0].mxu0
    %v429 = vpop.f32.mrb[0].mxu0
    %v430 = vpop.f32.mrb[0].mxu0
    %431 = vdwg.mxu0
    %v432 = vmax.f32 %v427, 0.0
    %v433 = vpack.c.bf16 %v432, %v432
    %s434 = scalar_lea.vmem [#allocation7], 64
    %v435 = vld [vmem:[%s434] sm:$0xf]
    %v436 = vld [vmem:[%s434 + $0x4] sm:$0xf]
    %v437 = vld [vmem:[%s434 + $0x8] sm:$0xf]
    %v438 = vld [vmem:[%s434 + $0xc] sm:$0xf]
    %v439 = vld [vmem:[%s434 + $0x10] sm:$0xf]
    %v440 = vld [vmem:[%s434 + $0x14] sm:$0xf]
    %v441 = vld [vmem:[%s434 + $0x18] sm:$0xf]
    %v442 = vld [vmem:[%s434 + $0x1c] sm:$0xf]
    %v443 = vld [vmem:[%s434 + $0x20] sm:$0xf]
    %v444 = vld [vmem:[%s434 + $0x24] sm:$0xf]
    %v445 = vld [vmem:[%s434 + $0x28] sm:$0xf]
    %v446 = vld [vmem:[%s434 + $0x2c] sm:$0xf]
    %v447 = vld [vmem:[%s434 + $0x30] sm:$0xf]
    %v448 = vld [vmem:[%s434 + $0x34] sm:$0xf]
    %v449 = vld [vmem:[%s434 + $0x38] sm:$0xf]
    %v450 = vld [vmem:[%s434 + $0x3c] sm:$0xf]
    %v451 = vld [vmem:[%s338 + $0x2] sm:$0x1]
    %v452 = vlaneseq
    %v453 = vshrl.u32 %v452, 7
    %v454 = vsub.s32 0, %v453
    %v455 = vrot.slane %v451, %v454
    %v472 = vunpack.c.l.b16 %v435
    %v473 = vunpack.c.l.b16 %v436
    %v474 = vunpack.c.l.b16 %v437
    %v475 = vunpack.c.l.b16 %v438
    %v476 = vunpack.c.l.b16 %v439
    %v477 = vunpack.c.l.b16 %v440
    %v478 = vunpack.c.l.b16 %v441
    %v479 = vunpack.c.l.b16 %v442
    %v480 = vunpack.c.l.b16 %v443
    %v481 = vunpack.c.l.b16 %v444
    %v482 = vunpack.c.l.b16 %v445
    %v483 = vunpack.c.l.b16 %v446
    %v484 = vunpack.c.l.b16 %v447
    %v485 = vunpack.c.l.b16 %v448
    %v486 = vunpack.c.l.b16 %v449
    %v487 = vunpack.c.l.b16 %v450
    %v488 = vpack.c.b16 %v473, %v472
    %v489 = vpack.c.b16 %v475, %v474
    %v490 = vpack.c.b16 %v477, %v476
    %v491 = vpack.c.b16 %v479, %v478
    %v492 = vpack.c.b16 %v481, %v480
    %v493 = vpack.c.b16 %v483, %v482
    %v494 = vpack.c.b16 %v485, %v484
    %v495 = vpack.c.b16 %v487, %v486
    %504 = vmatprep.subr.bf16.mxu0 0
    %505 = vmatpush1.bf16.msra.mxu0 %v488
    %506 = vmatprep.subr.bf16.mxu0 0
    %507 = vmatpush1.bf16.msra.mxu0 %v489
    %508 = vmatprep.subr.bf16.mxu0 0
    %509 = vmatpush1.bf16.msra.mxu0 %v490
    %510 = vmatprep.subr.bf16.mxu0 0
    %511 = vmatpush1.bf16.msra.mxu0 %v491
    %512 = vmatprep.subr.bf16.mxu0 0
    %513 = vmatpush1.bf16.msra.mxu0 %v492
    %514 = vmatprep.subr.bf16.mxu0 0
    %515 = vmatpush1.bf16.msra.mxu0 %v493
    %516 = vmatprep.subr.bf16.mxu0 0
    %517 = vmatpush1.bf16.msra.mxu0 %v494
    %518 = vmatprep.subr.bf16.mxu0 0
    %519 = vmatpush1.bf16.msra.mxu0 %v495
    %520 = vmatprep.subr.bf16.mxu0 0
    %521 = vmatpush1.bf16.msra.mxu0 0
    %522 = vmatprep.subr.bf16.mxu0 0
    %523 = vmatpush1.bf16.msra.mxu0 0
    %524 = vmatprep.subr.bf16.mxu0 0
    %525 = vmatpush1.bf16.msra.mxu0 0
    %526 = vmatprep.subr.bf16.mxu0 0
    %527 = vmatpush1.bf16.msra.mxu0 0
    %528 = vmatprep.subr.bf16.mxu0 0
    %529 = vmatpush1.bf16.msra.mxu0 0
    %530 = vmatprep.subr.bf16.mxu0 0
    %531 = vmatpush1.bf16.msra.mxu0 0
    %532 = vmatprep.subr.bf16.mxu0 0
    %533 = vmatpush1.bf16.msra.mxu0 0
    %534 = vmatprep.subr.bf16.mxu0 0
    %535 = vmatpush1.bf16.msra.mxu0 0
    %536 = vmatprep.mubr.bf16.mxu0 0
    %537 = vmatmul.mubr.bf16.gmra.mrb[0].mxu0 %v433
    %v538 = vpop.f32.mrb[0].mxu0
    %v539 = vadd.f32 %v455, %v538
    %v540 = vpop.f32.mrb[0].mxu0
    %v541 = vpop.f32.mrb[0].mxu0
    %v542 = vpop.f32.mrb[0].mxu0
    %543 = vdwg.mxu0
    %s544 = scalar_lea.vmem [#allocation5], 128
    %v545 = vld [vmem:[%s544] sm:$0xf]
    %v546 = vld [vmem:[%s544 + $0x4] sm:$0xf]
    %v547 = vld [vmem:[%s544 + $0x8] sm:$0xf]
    %v548 = vld [vmem:[%s544 + $0xc] sm:$0xf]
    %v549 = vld [vmem:[%s544 + $0x10] sm:$0xf]
    %v550 = vld [vmem:[%s544 + $0x14] sm:$0xf]
    %v551 = vld [vmem:[%s544 + $0x18] sm:$0xf]
    %v552 = vld [vmem:[%s544 + $0x1c] sm:$0xf]
    %v553 = vld [vmem:[%s544 + $0x20] sm:$0xf]
    %v554 = vld [vmem:[%s544 + $0x24] sm:$0xf]
    %v555 = vld [vmem:[%s544 + $0x28] sm:$0xf]
    %v556 = vld [vmem:[%s544 + $0x2c] sm:$0xf]
    %v557 = vld [vmem:[%s544 + $0x30] sm:$0xf]
    %v558 = vld [vmem:[%s544 + $0x34] sm:$0xf]
    %v559 = vld [vmem:[%s544 + $0x38] sm:$0xf]
    %v560 = vld [vmem:[%s544 + $0x3c] sm:$0xf]
    %s561 = scalar_lea.vmem %s6, 16
    %v562 = vld [vmem:[%s561 + $0x1] sm:$0x1]
    %v563 = vlaneseq
    %v564 = vshrl.u32 %v563, 7
    %v565 = vsub.s32 0, %v564
    %v566 = vrot.slane %v562, %v565
    %v583 = vunpack.c.l.b16 %v545
    %v584 = vunpack.c.l.b16 %v546
    %v585 = vunpack.c.l.b16 %v547
    %v586 = vunpack.c.l.b16 %v548
    %v587 = vunpack.c.l.b16 %v549
    %v588 = vunpack.c.l.b16 %v550
    %v589 = vunpack.c.l.b16 %v551
    %v590 = vunpack.c.l.b16 %v552
    %v591 = vunpack.c.l.b16 %v553
    %v592 = vunpack.c.l.b16 %v554
    %v593 = vunpack.c.l.b16 %v555
    %v594 = vunpack.c.l.b16 %v556
    %v595 = vunpack.c.l.b16 %v557
    %v596 = vunpack.c.l.b16 %v558
    %v597 = vunpack.c.l.b16 %v559
    %v598 = vunpack.c.l.b16 %v560
    %v599 = vpack.c.b16 %v584, %v583
    %v600 = vpack.c.b16 %v586, %v585
    %v601 = vpack.c.b16 %v588, %v587
    %v602 = vpack.c.b16 %v590, %v589
    %v603 = vpack.c.b16 %v592, %v591
    %v604 = vpack.c.b16 %v594, %v593
    %v605 = vpack.c.b16 %v596, %v595
    %v606 = vpack.c.b16 %v598, %v597
    %615 = vmatprep.subr.bf16.mxu0 0
    %616 = vmatpush1.bf16.msra.mxu0 %v599
    %617 = vmatprep.subr.bf16.mxu0 0
    %618 = vmatpush1.bf16.msra.mxu0 %v600
    %619 = vmatprep.subr.bf16.mxu0 0
    %620 = vmatpush1.bf16.msra.mxu0 %v601
    %621 = vmatprep.subr.bf16.mxu0 0
    %622 = vmatpush1.bf16.msra.mxu0 %v602
    %623 = vmatprep.subr.bf16.mxu0 0
    %624 = vmatpush1.bf16.msra.mxu0 %v603
    %625 = vmatprep.subr.bf16.mxu0 0
    %626 = vmatpush1.bf16.msra.mxu0 %v604
    %627 = vmatprep.subr.bf16.mxu0 0
    %628 = vmatpush1.bf16.msra.mxu0 %v605
    %629 = vmatprep.subr.bf16.mxu0 0
    %630 = vmatpush1.bf16.msra.mxu0 %v606
    %631 = vmatprep.subr.bf16.mxu0 0
    %632 = vmatpush1.bf16.msra.mxu0 0
    %633 = vmatprep.subr.bf16.mxu0 0
    %634 = vmatpush1.bf16.msra.mxu0 0
    %635 = vmatprep.subr.bf16.mxu0 0
    %636 = vmatpush1.bf16.msra.mxu0 0
    %637 = vmatprep.subr.bf16.mxu0 0
    %638 = vmatpush1.bf16.msra.mxu0 0
    %639 = vmatprep.subr.bf16.mxu0 0
    %640 = vmatpush1.bf16.msra.mxu0 0
    %641 = vmatprep.subr.bf16.mxu0 0
    %642 = vmatpush1.bf16.msra.mxu0 0
    %643 = vmatprep.subr.bf16.mxu0 0
    %644 = vmatpush1.bf16.msra.mxu0 0
    %645 = vmatprep.subr.bf16.mxu0 0
    %646 = vmatpush1.bf16.msra.mxu0 0
    %647 = vmatprep.mubr.bf16.mxu0 0
    %648 = vmatmul.mubr.bf16.gmra.mrb[0].mxu0 %v100
    %v649 = vpop.f32.mrb[0].mxu0
    %v650 = vadd.f32 %v566, %v649
    %v651 = vpop.f32.mrb[0].mxu0
    %v652 = vpop.f32.mrb[0].mxu0
    %v653 = vpop.f32.mrb[0].mxu0
    %654 = vdwg.mxu0
    %v655 = vmax.f32 %v650, 0.0
    %v656 = vpack.c.bf16 %v655, %v655
    %s657 = scalar_lea.vmem [#allocation7], 128
    %v658 = vld [vmem:[%s657] sm:$0xf]
    %v659 = vld [vmem:[%s657 + $0x4] sm:$0xf]
    %v660 = vld [vmem:[%s657 + $0x8] sm:$0xf]
    %v661 = vld [vmem:[%s657 + $0xc] sm:$0xf]
    %v662 = vld [vmem:[%s657 + $0x10] sm:$0xf]
    %v663 = vld [vmem:[%s657 + $0x14] sm:$0xf]
    %v664 = vld [vmem:[%s657 + $0x18] sm:$0xf]
    %v665 = vld [vmem:[%s657 + $0x1c] sm:$0xf]
    %v666 = vld [vmem:[%s657 + $0x20] sm:$0xf]
    %v667 = vld [vmem:[%s657 + $0x24] sm:$0xf]
    %v668 = vld [vmem:[%s657 + $0x28] sm:$0xf]
    %v669 = vld [vmem:[%s657 + $0x2c] sm:$0xf]
    %v670 = vld [vmem:[%s657 + $0x30] sm:$0xf]
    %v671 = vld [vmem:[%s657 + $0x34] sm:$0xf]
    %v672 = vld [vmem:[%s657 + $0x38] sm:$0xf]
    %v673 = vld [vmem:[%s657 + $0x3c] sm:$0xf]
    %v674 = vld [vmem:[%s561 + $0x2] sm:$0x1]
    %v675 = vlaneseq
    %v676 = vshrl.u32 %v675, 7
    %v677 = vsub.s32 0, %v676
    %v678 = vrot.slane %v674, %v677
    %v695 = vunpack.c.l.b16 %v658
    %v696 = vunpack.c.l.b16 %v659
    %v697 = vunpack.c.l.b16 %v660
    %v698 = vunpack.c.l.b16 %v661
    %v699 = vunpack.c.l.b16 %v662
    %v700 = vunpack.c.l.b16 %v663
    %v701 = vunpack.c.l.b16 %v664
    %v702 = vunpack.c.l.b16 %v665
    %v703 = vunpack.c.l.b16 %v666
    %v704 = vunpack.c.l.b16 %v667
    %v705 = vunpack.c.l.b16 %v668
    %v706 = vunpack.c.l.b16 %v669
    %v707 = vunpack.c.l.b16 %v670
    %v708 = vunpack.c.l.b16 %v671
    %v709 = vunpack.c.l.b16 %v672
    %v710 = vunpack.c.l.b16 %v673
    %v711 = vpack.c.b16 %v696, %v695
    %v712 = vpack.c.b16 %v698, %v697
    %v713 = vpack.c.b16 %v700, %v699
    %v714 = vpack.c.b16 %v702, %v701
    %v715 = vpack.c.b16 %v704, %v703
    %v716 = vpack.c.b16 %v706, %v705
    %v717 = vpack.c.b16 %v708, %v707
    %v718 = vpack.c.b16 %v710, %v709
    %727 = vmatprep.subr.bf16.mxu0 0
    %728 = vmatpush1.bf16.msra.mxu0 %v711
    %729 = vmatprep.subr.bf16.mxu0 0
    %730 = vmatpush1.bf16.msra.mxu0 %v712
    %731 = vmatprep.subr.bf16.mxu0 0
    %732 = vmatpush1.bf16.msra.mxu0 %v713
    %733 = vmatprep.subr.bf16.mxu0 0
    %734 = vmatpush1.bf16.msra.mxu0 %v714
    %735 = vmatprep.subr.bf16.mxu0 0
    %736 = vmatpush1.bf16.msra.mxu0 %v715
    %737 = vmatprep.subr.bf16.mxu0 0
    %738 = vmatpush1.bf16.msra.mxu0 %v716
    %739 = vmatprep.subr.bf16.mxu0 0
    %740 = vmatpush1.bf16.msra.mxu0 %v717
    %741 = vmatprep.subr.bf16.mxu0 0
    %742 = vmatpush1.bf16.msra.mxu0 %v718
    %743 = vmatprep.subr.bf16.mxu0 0
    %744 = vmatpush1.bf16.msra.mxu0 0
    %745 = vmatprep.subr.bf16.mxu0 0
    %746 = vmatpush1.bf16.msra.mxu0 0
    %747 = vmatprep.subr.bf16.mxu0 0
    %748 = vmatpush1.bf16.msra.mxu0 0
    %749 = vmatprep.subr.bf16.mxu0 0
    %750 = vmatpush1.bf16.msra.mxu0 0
    %751 = vmatprep.subr.bf16.mxu0 0
    %752 = vmatpush1.bf16.msra.mxu0 0
    %753 = vmatprep.subr.bf16.mxu0 0
    %754 = vmatpush1.bf16.msra.mxu0 0
    %755 = vmatprep.subr.bf16.mxu0 0
    %756 = vmatpush1.bf16.msra.mxu0 0
    %757 = vmatprep.subr.bf16.mxu0 0
    %758 = vmatpush1.bf16.msra.mxu0 0
    %759 = vmatprep.mubr.bf16.mxu0 0
    %760 = vmatmul.mubr.bf16.gmra.mrb[0].mxu0 %v656
    %v761 = vpop.f32.mrb[0].mxu0
    %v762 = vadd.f32 %v678, %v761
    %v763 = vpop.f32.mrb[0].mxu0
    %v764 = vpop.f32.mrb[0].mxu0
    %v765 = vpop.f32.mrb[0].mxu0
    %766 = vdwg.mxu0
    %v767 = vlaneseq
    %v768 = vand.u32 %v767, 127
    %vm769 = vcmp.lt.s32.totalorder %v768, 32
    %v770 = vld [vmem:[%s0] sm:$0xf]
    %v771 = vld [vmem:[#allocation8] sm:$0xf]
    %v772 = vld [vmem:[#allocation8 + $0x4] sm:$0xf]
    %v773 = vld [vmem:[#allocation8 + $0x8] sm:$0xf]
    %v774 = vld [vmem:[#allocation8 + $0xc] sm:$0xf]
    %v775 = vld [vmem:[#allocation8 + $0x10] sm:$0xf]
    %v776 = vld [vmem:[#allocation8 + $0x14] sm:$0xf]
    %v777 = vld [vmem:[#allocation8 + $0x18] sm:$0xf]
    %v778 = vld [vmem:[#allocation8 + $0x1c] sm:$0xf]
    %v779 = vld [vmem:[#allocation8 + $0x20] sm:$0xf]
    %v780 = vld [vmem:[#allocation8 + $0x24] sm:$0xf]
    %v781 = vld [vmem:[#allocation8 + $0x28] sm:$0xf]
    %v782 = vld [vmem:[#allocation8 + $0x2c] sm:$0xf]
    %v783 = vld [vmem:[#allocation8 + $0x30] sm:$0xf]
    %v784 = vld [vmem:[#allocation8 + $0x34] sm:$0xf]
    %v785 = vld [vmem:[#allocation8 + $0x38] sm:$0xf]
    %v786 = vld [vmem:[#allocation8 + $0x3c] sm:$0xf]
    %v787 = vld [vmem:[%s6] sm:$0x1]
    %v788 = vlaneseq
    %v789 = vshrl.u32 %v788, 7
    %v790 = vsub.s32 0, %v789
    %v791 = vrot.slane %v787, %v790
    %v808 = vunpack.c.l.b16 %v771
    %v809 = vunpack.c.l.b16 %v772
    %v810 = vunpack.c.l.b16 %v773
    %v811 = vunpack.c.l.b16 %v774
    %v812 = vunpack.c.l.b16 %v775
    %v813 = vunpack.c.l.b16 %v776
    %v814 = vunpack.c.l.b16 %v777
    %v815 = vunpack.c.l.b16 %v778
    %v816 = vunpack.c.l.b16 %v779
    %v817 = vunpack.c.l.b16 %v780
    %v818 = vunpack.c.l.b16 %v781
    %v819 = vunpack.c.l.b16 %v782
    %v820 = vunpack.c.l.b16 %v783
    %v821 = vunpack.c.l.b16 %v784
    %v822 = vunpack.c.l.b16 %v785
    %v823 = vunpack.c.l.b16 %v786
    %v824 = vpack.c.b16 %v809, %v808
    %v825 = vpack.c.b16 %v811, %v810
    %v826 = vpack.c.b16 %v813, %v812
    %v827 = vpack.c.b16 %v815, %v814
    %v828 = vpack.c.b16 %v817, %v816
    %v829 = vpack.c.b16 %v819, %v818
    %v830 = vpack.c.b16 %v821, %v820
    %v831 = vpack.c.b16 %v823, %v822
    %840 = vmatprep.subr.bf16.mxu0 0
    %841 = vmatpush1.bf16.msra.mxu0 %v824
    %842 = vmatprep.subr.bf16.mxu0 0
    %843 = vmatpush1.bf16.msra.mxu0 %v825
    %844 = vmatprep.subr.bf16.mxu0 0
    %845 = vmatpush1.bf16.msra.mxu0 %v826
    %846 = vmatprep.subr.bf16.mxu0 0
    %847 = vmatpush1.bf16.msra.mxu0 %v827
    %848 = vmatprep.subr.bf16.mxu0 0
    %849 = vmatpush1.bf16.msra.mxu0 %v828
    %850 = vmatprep.subr.bf16.mxu0 0
    %851 = vmatpush1.bf16.msra.mxu0 %v829
    %852 = vmatprep.subr.bf16.mxu0 0
    %853 = vmatpush1.bf16.msra.mxu0 %v830
    %854 = vmatprep.subr.bf16.mxu0 0
    %855 = vmatpush1.bf16.msra.mxu0 %v831
    %856 = vmatprep.subr.bf16.mxu0 0
    %857 = vmatpush1.bf16.msra.mxu0 0
    %858 = vmatprep.subr.bf16.mxu0 0
    %859 = vmatpush1.bf16.msra.mxu0 0
    %860 = vmatprep.subr.bf16.mxu0 0
    %861 = vmatpush1.bf16.msra.mxu0 0
    %862 = vmatprep.subr.bf16.mxu0 0
    %863 = vmatpush1.bf16.msra.mxu0 0
    %864 = vmatprep.subr.bf16.mxu0 0
    %865 = vmatpush1.bf16.msra.mxu0 0
    %866 = vmatprep.subr.bf16.mxu0 0
    %867 = vmatpush1.bf16.msra.mxu0 0
    %868 = vmatprep.subr.bf16.mxu0 0
    %869 = vmatpush1.bf16.msra.mxu0 0
    %870 = vmatprep.subr.bf16.mxu0 0
    %871 = vmatpush1.bf16.msra.mxu0 0
    %872 = vmatprep.mubr.bf16.mxu0 0
    %873 = vmatmul.mubr.bf16.gmra.mrb[0].mxu0 %v770
    %v874 = vpop.f32.mrb[0].mxu0
    %v875 = vadd.f32 %v791, %v874
    %v876 = vpop.f32.mrb[0].mxu0
    %v877 = vpop.f32.mrb[0].mxu0
    %v878 = vpop.f32.mrb[0].mxu0
    %879 = vdwg.mxu0
    %v880 = vmax.f32 %v875, 0.0
    %v881 = vadd.f32 %v880, %v316
    %882 = vadd.xlane.f32.xlu0 %v881
    %v883 = vpop.xlane.xlu0 %882
    %v884 = vmul.f32 %v883, 0.03125
    %v885 = vsub.f32 %v881, %v884
    %v886 = vsel %vm769, 1, 0
    %vm887 = vcmp.eq.s32.totalorder %v886, 1
    %v888 = vsel %vm887, %v885, 0.0
    %v889 = vmul.f32 %v888, %v888
    %890 = vadd.xlane.f32.xlu0 %v889
    %v891 = vpop.xlane.xlu0 %890
    %v892 = vmul.f32 %v891, 0.03125
    %v893 = vadd.f32 %v892, 1e-05
    %v894 = vrsqrt.pop %v893
    %v895 = vmul.f32 %v888, %v894
    %v896 = vld [vmem:[%s6 + $0x3] sm:$0x1]
    %v897 = vlaneseq
    %v898 = vshrl.u32 %v897, 7
    %v899 = vsub.s32 0, %v898
    %v900 = vrot.slane %v896, %v899
    %v901 = vmul.f32 %v895, %v900
    %v902 = vld [vmem:[%s6 + $0x4] sm:$0x1]
    %v903 = vlaneseq
    %v904 = vshrl.u32 %v903, 7
    %v905 = vsub.s32 0, %v904
    %v906 = vrot.slane %v902, %v905
    %v907 = vadd.f32 %v901, %v906
    %v908 = vpack.c.bf16 %v907, %v907
    %v909 = vld [vmem:[#allocation10] sm:$0xf]
    %v910 = vld [vmem:[#allocation10 + $0x4] sm:$0xf]
    %v911 = vld [vmem:[#allocation10 + $0x8] sm:$0xf]
    %v912 = vld [vmem:[#allocation10 + $0xc] sm:$0xf]
    %v913 = vld [vmem:[#allocation10 + $0x10] sm:$0xf]
    %v914 = vld [vmem:[#allocation10 + $0x14] sm:$0xf]
    %v915 = vld [vmem:[#allocation10 + $0x18] sm:$0xf]
    %v916 = vld [vmem:[#allocation10 + $0x1c] sm:$0xf]
    %v917 = vld [vmem:[#allocation10 + $0x20] sm:$0xf]
    %v918 = vld [vmem:[#allocation10 + $0x24] sm:$0xf]
    %v919 = vld [vmem:[#allocation10 + $0x28] sm:$0xf]
    %v920 = vld [vmem:[#allocation10 + $0x2c] sm:$0xf]
    %v921 = vld [vmem:[#allocation10 + $0x30] sm:$0xf]
    %v922 = vld [vmem:[#allocation10 + $0x34] sm:$0xf]
    %v923 = vld [vmem:[#allocation10 + $0x38] sm:$0xf]
    %v924 = vld [vmem:[#allocation10 + $0x3c] sm:$0xf]
    %v925 = vld [vmem:[%s338] sm:$0x1]
    %v926 = vlaneseq
    %v927 = vshrl.u32 %v926, 7
    %v928 = vsub.s32 0, %v927
    %v929 = vrot.slane %v925, %v928
    %v946 = vunpack.c.l.b16 %v909
    %v947 = vunpack.c.l.b16 %v910
    %v948 = vunpack.c.l.b16 %v911
    %v949 = vunpack.c.l.b16 %v912
    %v950 = vunpack.c.l.b16 %v913
    %v951 = vunpack.c.l.b16 %v914
    %v952 = vunpack.c.l.b16 %v915
    %v953 = vunpack.c.l.b16 %v916
    %v954 = vunpack.c.l.b16 %v917
    %v955 = vunpack.c.l.b16 %v918
    %v956 = vunpack.c.l.b16 %v919
    %v957 = vunpack.c.l.b16 %v920
    %v958 = vunpack.c.l.b16 %v921
    %v959 = vunpack.c.l.b16 %v922
    %v960 = vunpack.c.l.b16 %v923
    %v961 = vunpack.c.l.b16 %v924
    %v962 = vpack.c.b16 %v947, %v946
    %v963 = vpack.c.b16 %v949, %v948
    %v964 = vpack.c.b16 %v951, %v950
    %v965 = vpack.c.b16 %v953, %v952
    %v966 = vpack.c.b16 %v955, %v954
    %v967 = vpack.c.b16 %v957, %v956
    %v968 = vpack.c.b16 %v959, %v958
    %v969 = vpack.c.b16 %v961, %v960
    %978 = vmatprep.subr.bf16.mxu0 0
    %979 = vmatpush1.bf16.msra.mxu0 %v962
    %980 = vmatprep.subr.bf16.mxu0 0
    %981 = vmatpush1.bf16.msra.mxu0 %v963
    %982 = vmatprep.subr.bf16.mxu0 0
    %983 = vmatpush1.bf16.msra.mxu0 %v964
    %984 = vmatprep.subr.bf16.mxu0 0
    %985 = vmatpush1.bf16.msra.mxu0 %v965
    %986 = vmatprep.subr.bf16.mxu0 0
    %987 = vmatpush1.bf16.msra.mxu0 %v966
    %988 = vmatprep.subr.bf16.mxu0 0
    %989 = vmatpush1.bf16.msra.mxu0 %v967
    %990 = vmatprep.subr.bf16.mxu0 0
    %991 = vmatpush1.bf16.msra.mxu0 %v968
    %992 = vmatprep.subr.bf16.mxu0 0
    %993 = vmatpush1.bf16.msra.mxu0 %v969
    %994 = vmatprep.subr.bf16.mxu0 0
    %995 = vmatpush1.bf16.msra.mxu0 0
    %996 = vmatprep.subr.bf16.mxu0 0
    %997 = vmatpush1.bf16.msra.mxu0 0
    %998 = vmatprep.subr.bf16.mxu0 0
    %999 = vmatpush1.bf16.msra.mxu0 0
    %1000 = vmatprep.subr.bf16.mxu0 0
    %1001 = vmatpush1.bf16.msra.mxu0 0
    %1002 = vmatprep.subr.bf16.mxu0 0
    %1003 = vmatpush1.bf16.msra.mxu0 0
    %1004 = vmatprep.subr.bf16.mxu0 0
    %1005 = vmatpush1.bf16.msra.mxu0 0
    %1006 = vmatprep.subr.bf16.mxu0 0
    %1007 = vmatpush1.bf16.msra.mxu0 0
    %1008 = vmatprep.subr.bf16.mxu0 0
    %1009 = vmatpush1.bf16.msra.mxu0 0
    %1010 = vmatprep.mubr.bf16.mxu0 0
    %1011 = vmatmul.mubr.bf16.gmra.mrb[0].mxu0 %v908
    %v1012 = vpop.f32.mrb[0].mxu0
    %v1013 = vadd.f32 %v929, %v1012
    %v1014 = vpop.f32.mrb[0].mxu0
    %v1015 = vpop.f32.mrb[0].mxu0
    %v1016 = vpop.f32.mrb[0].mxu0
    %1017 = vdwg.mxu0
    %v1018 = vmax.f32 %v1013, 0.0
    %v1019 = vadd.f32 %v1018, %v539
    %1020 = vadd.xlane.f32.xlu0 %v1019
    %v1021 = vpop.xlane.xlu0 %1020
    %v1022 = vmul.f32 %v1021, 0.03125
    %v1023 = vsub.f32 %v1019, %v1022
    %v1024 = vsel %vm887, %v1023, 0.0
    %v1025 = vmul.f32 %v1024, %v1024
    %1026 = vadd.xlane.f32.xlu0 %v1025
    %v1027 = vpop.xlane.xlu0 %1026
    %v1028 = vmul.f32 %v1027, 0.03125
    %v1029 = vadd.f32 %v1028, 1e-05
    %v1030 = vrsqrt.pop %v1029
    %v1031 = vmul.f32 %v1024, %v1030
    %v1032 = vld [vmem:[%s338 + $0x3] sm:$0x1]
    %v1033 = vlaneseq
    %v1034 = vshrl.u32 %v1033, 7
    %v1035 = vsub.s32 0, %v1034
    %v1036 = vrot.slane %v1032, %v1035
    %v1037 = vmul.f32 %v1031, %v1036
    %v1038 = vld [vmem:[%s338 + $0x4] sm:$0x1]
    %v1039 = vlaneseq
    %v1040 = vshrl.u32 %v1039, 7
    %v1041 = vsub.s32 0, %v1040
    %v1042 = vrot.slane %v1038, %v1041
    %v1043 = vadd.f32 %v1037, %v1042
    %v1044 = vpack.c.bf16 %v1043, %v1043
    %s1045 = scalar_lea.vmem [#allocation10], 64
    %v1046 = vld [vmem:[%s1045] sm:$0xf]
    %v1047 = vld [vmem:[%s1045 + $0x4] sm:$0xf]
    %v1048 = vld [vmem:[%s1045 + $0x8] sm:$0xf]
    %v1049 = vld [vmem:[%s1045 + $0xc] sm:$0xf]
    %v1050 = vld [vmem:[%s1045 + $0x10] sm:$0xf]
    %v1051 = vld [vmem:[%s1045 + $0x14] sm:$0xf]
    %v1052 = vld [vmem:[%s1045 + $0x18] sm:$0xf]
    %v1053 = vld [vmem:[%s1045 + $0x1c] sm:$0xf]
    %v1054 = vld [vmem:[%s1045 + $0x20] sm:$0xf]
    %v1055 = vld [vmem:[%s1045 + $0x24] sm:$0xf]
    %v1056 = vld [vmem:[%s1045 + $0x28] sm:$0xf]
    %v1057 = vld [vmem:[%s1045 + $0x2c] sm:$0xf]
    %v1058 = vld [vmem:[%s1045 + $0x30] sm:$0xf]
    %v1059 = vld [vmem:[%s1045 + $0x34] sm:$0xf]
    %v1060 = vld [vmem:[%s1045 + $0x38] sm:$0xf]
    %v1061 = vld [vmem:[%s1045 + $0x3c] sm:$0xf]
    %v1062 = vld [vmem:[%s561] sm:$0x1]
    %v1063 = vlaneseq
    %v1064 = vshrl.u32 %v1063, 7
    %v1065 = vsub.s32 0, %v1064
    %v1066 = vrot.slane %v1062, %v1065
    %v1083 = vunpack.c.l.b16 %v1046
    %v1084 = vunpack.c.l.b16 %v1047
    %v1085 = vunpack.c.l.b16 %v1048
    %v1086 = vunpack.c.l.b16 %v1049
    %v1087 = vunpack.c.l.b16 %v1050
    %v1088 = vunpack.c.l.b16 %v1051
    %v1089 = vunpack.c.l.b16 %v1052
    %v1090 = vunpack.c.l.b16 %v1053
    %v1091 = vunpack.c.l.b16 %v1054
    %v1092 = vunpack.c.l.b16 %v1055
    %v1093 = vunpack.c.l.b16 %v1056
    %v1094 = vunpack.c.l.b16 %v1057
    %v1095 = vunpack.c.l.b16 %v1058
    %v1096 = vunpack.c.l.b16 %v1059
    %v1097 = vunpack.c.l.b16 %v1060
    %v1098 = vunpack.c.l.b16 %v1061
    %v1099 = vpack.c.b16 %v1084, %v1083
    %v1100 = vpack.c.b16 %v1086, %v1085
    %v1101 = vpack.c.b16 %v1088, %v1087
    %v1102 = vpack.c.b16 %v1090, %v1089
    %v1103 = vpack.c.b16 %v1092, %v1091
    %v1104 = vpack.c.b16 %v1094, %v1093
    %v1105 = vpack.c.b16 %v1096, %v1095
    %v1106 = vpack.c.b16 %v1098, %v1097
    %1115 = vmatprep.subr.bf16.mxu0 0
    %1116 = vmatpush1.bf16.msra.mxu0 %v1099
    %1117 = vmatprep.subr.bf16.mxu0 0
    %1118 = vmatpush1.bf16.msra.mxu0 %v1100
    %1119 = vmatprep.subr.bf16.mxu0 0
    %1120 = vmatpush1.bf16.msra.mxu0 %v1101
    %1121 = vmatprep.subr.bf16.mxu0 0
    %1122 = vmatpush1.bf16.msra.mxu0 %v1102
    %1123 = vmatprep.subr.bf16.mxu0 0
    %1124 = vmatpush1.bf16.msra.mxu0 %v1103
    %1125 = vmatprep.subr.bf16.mxu0 0
    %1126 = vmatpush1.bf16.msra.mxu0 %v1104
    %1127 = vmatprep.subr.bf16.mxu0 0
    %1128 = vmatpush1.bf16.msra.mxu0 %v1105
    %1129 = vmatprep.subr.bf16.mxu0 0
    %1130 = vmatpush1.bf16.msra.mxu0 %v1106
    %1131 = vmatprep.subr.bf16.mxu0 0
    %1132 = vmatpush1.bf16.msra.mxu0 0
    %1133 = vmatprep.subr.bf16.mxu0 0
    %1134 = vmatpush1.bf16.msra.mxu0 0
    %1135 = vmatprep.subr.bf16.mxu0 0
    %1136 = vmatpush1.bf16.msra.mxu0 0
    %1137 = vmatprep.subr.bf16.mxu0 0
    %1138 = vmatpush1.bf16.msra.mxu0 0
    %1139 = vmatprep.subr.bf16.mxu0 0
    %1140 = vmatpush1.bf16.msra.mxu0 0
    %1141 = vmatprep.subr.bf16.mxu0 0
    %1142 = vmatpush1.bf16.msra.mxu0 0
    %1143 = vmatprep.subr.bf16.mxu0 0
    %1144 = vmatpush1.bf16.msra.mxu0 0
    %1145 = vmatprep.subr.bf16.mxu0 0
    %1146 = vmatpush1.bf16.msra.mxu0 0
    %1147 = vmatprep.mubr.bf16.mxu0 0
    %1148 = vmatmul.mubr.bf16.gmra.mrb[0].mxu0 %v1044
    %v1149 = vpop.f32.mrb[0].mxu0
    %v1150 = vadd.f32 %v1066, %v1149
    %v1151 = vpop.f32.mrb[0].mxu0
    %v1152 = vpop.f32.mrb[0].mxu0
    %v1153 = vpop.f32.mrb[0].mxu0
    %1154 = vdwg.mxu0
    %v1155 = vmax.f32 %v1150, 0.0
    %v1156 = vadd.f32 %v1155, %v762
    %1157 = vadd.xlane.f32.xlu0 %v1156
    %v1158 = vpop.xlane.xlu0 %1157
    %v1159 = vmul.f32 %v1158, 0.03125
    %v1160 = vsub.f32 %v1156, %v1159
    %v1161 = vsel %vm887, %v1160, 0.0
    %v1162 = vmul.f32 %v1161, %v1161
    %1163 = vadd.xlane.f32.xlu0 %v1162
    %v1164 = vpop.xlane.xlu0 %1163
    %v1165 = vmul.f32 %v1164, 0.03125
    %v1166 = vadd.f32 %v1165, 1e-05
    %v1167 = vrsqrt.pop %v1166
    %v1168 = vmul.f32 %v1161, %v1167
    %v1169 = vld [vmem:[%s561 + $0x3] sm:$0x1]
    %v1170 = vlaneseq
    %v1171 = vshrl.u32 %v1170, 7
    %v1172 = vsub.s32 0, %v1171
    %v1173 = vrot.slane %v1169, %v1172
    %v1174 = vmul.f32 %v1168, %v1173
    %v1175 = vld [vmem:[%s561 + $0x4] sm:$0x1]
    %v1176 = vlaneseq
    %v1177 = vshrl.u32 %v1176, 7
    %v1178 = vsub.s32 0, %v1177
    %v1179 = vrot.slane %v1175, %v1178
    %v1180 = vadd.f32 %v1174, %v1179
    %v1181 = vpack.c.bf16 %v1180, %v1180
    %v1182 = vld [vmem:[%s7] sm:$0xf]
    %v1183 = vld [vmem:[%s7 + $0x4] sm:$0xf]
    %v1184 = vld [vmem:[%s7 + $0x8] sm:$0xf]
    %v1185 = vld [vmem:[%s7 + $0xc] sm:$0xf]
    %v1186 = vld [vmem:[%s7 + $0x10] sm:$0xf]
    %v1187 = vld [vmem:[%s7 + $0x14] sm:$0xf]
    %v1188 = vld [vmem:[%s7 + $0x18] sm:$0xf]
    %v1189 = vld [vmem:[%s7 + $0x1c] sm:$0xf]
    %v1190 = vld [vmem:[%s7 + $0x20] sm:$0xf]
    %v1191 = vld [vmem:[%s7 + $0x24] sm:$0xf]
    %v1192 = vld [vmem:[%s7 + $0x28] sm:$0xf]
    %v1193 = vld [vmem:[%s7 + $0x2c] sm:$0xf]
    %v1194 = vld [vmem:[%s7 + $0x30] sm:$0xf]
    %v1195 = vld [vmem:[%s7 + $0x34] sm:$0xf]
    %v1196 = vld [vmem:[%s7 + $0x38] sm:$0xf]
    %v1197 = vld [vmem:[%s7 + $0x3c] sm:$0xf]
    %v1198 = vld [vmem:[%s8] sm:$0x1]
    %v1200 = vlaneseq
    %v1201 = vshrl.u32 %v1200, 7
    %v1202 = vsub.s32 0, %v1201
    %v1203 = vrot.slane %v1198, %v1202
    %v1221 = vunpack.c.l.b16 %v1182
    %v1222 = vunpack.c.l.b16 %v1183
    %v1223 = vunpack.c.l.b16 %v1184
    %v1224 = vunpack.c.l.b16 %v1185
    %v1225 = vunpack.c.l.b16 %v1186
    %v1226 = vunpack.c.l.b16 %v1187
    %v1227 = vunpack.c.l.b16 %v1188
    %v1228 = vunpack.c.l.b16 %v1189
    %v1229 = vunpack.c.l.b16 %v1190
    %v1230 = vunpack.c.l.b16 %v1191
    %v1231 = vunpack.c.l.b16 %v1192
    %v1232 = vunpack.c.l.b16 %v1193
    %v1233 = vunpack.c.l.b16 %v1194
    %v1234 = vunpack.c.l.b16 %v1195
    %v1235 = vunpack.c.l.b16 %v1196
    %v1236 = vunpack.c.l.b16 %v1197
    %v1237 = vpack.c.b16 %v1222, %v1221
    %v1238 = vpack.c.b16 %v1224, %v1223
    %v1239 = vpack.c.b16 %v1226, %v1225
    %v1240 = vpack.c.b16 %v1228, %v1227
    %v1241 = vpack.c.b16 %v1230, %v1229
    %v1242 = vpack.c.b16 %v1232, %v1231
    %v1243 = vpack.c.b16 %v1234, %v1233
    %v1244 = vpack.c.b16 %v1236, %v1235
    %1253 = vmatprep.subr.bf16.mxu0 0
    %1254 = vmatpush1.bf16.msra.mxu0 %v1237
    %1255 = vmatprep.subr.bf16.mxu0 0
    %1256 = vmatpush1.bf16.msra.mxu0 %v1238
    %1257 = vmatprep.subr.bf16.mxu0 0
    %1258 = vmatpush1.bf16.msra.mxu0 %v1239
    %1259 = vmatprep.subr.bf16.mxu0 0
    %1260 = vmatpush1.bf16.msra.mxu0 %v1240
    %1261 = vmatprep.subr.bf16.mxu0 0
    %1262 = vmatpush1.bf16.msra.mxu0 %v1241
    %1263 = vmatprep.subr.bf16.mxu0 0
    %1264 = vmatpush1.bf16.msra.mxu0 %v1242
    %1265 = vmatprep.subr.bf16.mxu0 0
    %1266 = vmatpush1.bf16.msra.mxu0 %v1243
    %1267 = vmatprep.subr.bf16.mxu0 0
    %1268 = vmatpush1.bf16.msra.mxu0 %v1244
    %1269 = vmatprep.subr.bf16.mxu0 0
    %1270 = vmatpush1.bf16.msra.mxu0 0
    %1271 = vmatprep.subr.bf16.mxu0 0
    %1272 = vmatpush1.bf16.msra.mxu0 0
    %1273 = vmatprep.subr.bf16.mxu0 0
    %1274 = vmatpush1.bf16.msra.mxu0 0
    %1275 = vmatprep.subr.bf16.mxu0 0
    %1276 = vmatpush1.bf16.msra.mxu0 0
    %1277 = vmatprep.subr.bf16.mxu0 0
    %1278 = vmatpush1.bf16.msra.mxu0 0
    %1279 = vmatprep.subr.bf16.mxu0 0
    %1280 = vmatpush1.bf16.msra.mxu0 0
    %1281 = vmatprep.subr.bf16.mxu0 0
    %1282 = vmatpush1.bf16.msra.mxu0 0
    %1283 = vmatprep.subr.bf16.mxu0 0
    %1284 = vmatpush1.bf16.msra.mxu0 0
    %1285 = vmatprep.mubr.bf16.mxu0 0
    %1286 = vmatmul.mubr.bf16.gmra.mrb[0].mxu0 %v1181
    %v1287 = vpop.f32.mrb[0].mxu0
    %v1288 = vadd.f32 %v1203, %v1287
    %v1289 = vpop.f32.mrb[0].mxu0
    %v1290 = vpop.f32.mrb[0].mxu0
    %v1291 = vpop.f32.mrb[0].mxu0
    %1292 = vdwg.mxu0
    %1293 = vst [vmem:[#allocation11] sm:$0xff] %v1288
    // Predicated region
    $region58: #{tpu_custom_call.1} parent=1 // pred_check
      _
    $region59: #{tpu_custom_call.1} parent=1 // pred_check_branch
      %1295 = sbr.rel (0) target = $region61
    $region60: #{tpu_custom_call.1} parent=1 // pred_region
      %s1297 = ssub.s32 128, 128
      %1298 = vsyncadd [#allocation4], %s1297
      %s1300 = sshll.u32 [#allocation11], 4
      %s1301 = int_to_ptr.vmem [resolvable:$true] %s1300
      %1303 = dma.vmem_to_hbm [thread:$0]  %s1301, 128, %s9, [#allocation4]
    $region61: #{tpu_custom_call.1} parent=1 // pred_fallthru
      _
    // Predicated region
    $region62: #{tpu_custom_call.1} parent=1 // pred_check
      _
    $region63: #{tpu_custom_call.1} parent=1 // pred_check_branch
      %1305 = sbr.rel (0) target = $region65
    $region64: #{tpu_custom_call.1} parent=1 // pred_region
      %1306 = dma.done [#allocation4], 128
    $region65: #{tpu_custom_call.1} parent=1 // pred_fallthru
      _
    %1307 = vsyncpa [#allocation3], 1
    %1308 = vsyncpa [#allocation6], 1
    %1309 = vsyncpa [#allocation9], 1
    %1310 = vsyncpa [#allocation4], 1

// kernel: tpu_custom_call.1
$region0: #{tpu_custom_call.1}
  #allocation0 [shape = 'u32[]', space=smem, size = 0x4, offset = 0x4, fixed_abs, tag = 'smem constant byte address 0x4 - core index']
  #allocation1 [shape = 'u32[144,128]{1,0:T(1,128)}', space=vmem, size = 0x12000, scoped, tag = 'internal scratch']
  %s0 = inlined_call_operand.vmem [shape: bf16[8,128], index: 0, kind: input, shape index: {}]
  %s1 = inlined_call_operand.hbm [shape: bf16[8,128], index: 1, kind: input, shape index: {}]
  %s2 = inlined_call_operand.hbm [shape: bf16[3,128,128], index: 2, kind: input, shape index: {}]
  %s3 = inlined_call_operand.hbm [shape: bf16[3,128,128], index: 3, kind: input, shape index: {}]
  %s4 = inlined_call_operand.hbm [shape: bf16[128,128], index: 4, kind: input, shape index: {}]
  %s5 = inlined_call_operand.hbm [shape: bf16[2,128,128], index: 5, kind: input, shape index: {}]
  %s6 = inlined_call_operand.vmem [shape: f32[3,5,128], index: 6, kind: input, shape index: {}]
  %s7 = inlined_call_operand.vmem [shape: bf16[128,128], index: 7, kind: input, shape index: {}]
  %s8 = inlined_call_operand.vmem [shape: f32[1,128], index: 8, kind: input, shape index: {}]
  %s9 = inlined_call_operand.hbm [shape: f32[8,128], index: 9, kind: output, shape index: {}]
  %s10 = sld [smem:[#allocation0]]
  $region66: #{tpu_custom_call.1} parent=0
    _
  %s12 = ssub.s32 1, %s10
  %s13 = scalar_select 0, %s12, %s10
  $region1: #{tpu_custom_call.1} parent=0
    #allocation2 [shape = 'u8[2048]{0}', space=vmem, size = 0x800, scoped, tag = 'input window, operand 1, single buffered']
    #allocation3 [shape = 's32[1]{0}', space=sflag, size = 0x4, scoped, tag = 'scoped memory for tpu_custom_call.1']
    #allocation4 [shape = 's32[1]{0}', space=sflag, size = 0x4, scoped, tag = 'scoped memory for tpu_custom_call.1']
    #allocation5 [shape = 'u8[98304]{0}', space=vmem, size = 0x18000, scoped, tag = 'input window, operand 2, single buffered']
    #allocation6 [shape = 's32[1]{0}', space=sflag, size = 0x4, scoped, tag = 'scoped memory for tpu_custom_call.1']
    #allocation7 [shape = 'u8[98304]{0}', space=vmem, size = 0x18000, scoped, tag = 'input window, operand 3, single buffered']
    #allocation8 [shape = 'u8[32768]{0}', space=vmem, size = 0x8000, scoped, tag = 'input window, operand 4, single buffered']
    #allocation9 [shape = 's32[1]{0}', space=sflag, size = 0x4, scoped, tag = 'scoped memory for tpu_custom_call.1']
    #allocation10 [shape = 'u8[65536]{0}', space=vmem, size = 0x10000, scoped, tag = 'input window, operand 5, single buffered']
    #allocation11 [shape = 'u8[4096]{0}', space=vmem, size = 0x1000, scoped, tag = 'output window, operand 0, single buffered']
    %14 = vsyncpa [#allocation3], 0
    %15 = vsyncpa [#allocation6], 0
    %16 = vsyncpa [#allocation9], 0
    %17 = vsyncpa [#allocation4], 0
    // Predicated region
    $region2: #{tpu_custom_call.1} parent=1 // pred_check
      _
    $region3: #{tpu_custom_call.1} parent=1 // pred_check_branch
      %19 = sbr.rel (0) target = $region5
    $region4: #{tpu_custom_call.1} parent=1 // pred_region
      _
    $region5: #{tpu_custom_call.1} parent=1 // pred_fallthru
      _
    // Predicated region
    $region6: #{tpu_custom_call.1} parent=1 // pred_check
      _
    $region7: #{tpu_custom_call.1} parent=1 // pred_check_branch
      %21 = sbr.rel (0) target = $region9
    $region8: #{tpu_custom_call.1} parent=1 // pred_region
      %s23 = ssub.s32 64, 64
      %24 = vsyncadd [#allocation3], %s23
      %s26 = sshll.u32 [#allocation2], 4
      %s27 = int_to_ptr.vmem [resolvable:$true] %s26
      %29 = dma.hbm_to_vmem [thread:$0]  %s1, 64, %s27, [#allocation3]
    $region9: #{tpu_custom_call.1} parent=1 // pred_fallthru
      _
    // Predicated region
    $region10: #{tpu_custom_call.1} parent=1 // pred_check
      _
    $region11: #{tpu_custom_call.1} parent=1 // pred_check_branch
      %31 = sbr.rel (0) target = $region13
    $region12: #{tpu_custom_call.1} parent=1 // pred_region
      %s33 = ssub.s32 3072, 3072
      %34 = vsyncadd [#allocation6], %s33
      %s35 = sshll.u32 [#allocation5], 4
      %s36 = int_to_ptr.vmem [resolvable:$true] %s35
      %41 = dma.hbm_to_vmem [thread:$0]  %s2, 3072, %s36, [#allocation6], 64, 64, 4
    $region13: #{tpu_custom_call.1} parent=1 // pred_fallthru
      _
    // Predicated region
    $region14: #{tpu_custom_call.1} parent=1 // pred_check
      _
    $region15: #{tpu_custom_call.1} parent=1 // pred_check_branch
      %43 = sbr.rel (0) target = $region17
    $region16: #{tpu_custom_call.1} parent=1 // pred_region
      %s45 = ssub.s32 3072, 3072
      %46 = vsyncadd [#allocation6], %s45
      %s47 = sshll.u32 [#allocation7], 4
      %s48 = int_to_ptr.vmem [resolvable:$true] %s47
      %53 = dma.hbm_to_vmem [thread:$0]  %s3, 3072, %s48, [#allocation6], 64, 64, 4
    $region17: #{tpu_custom_call.1} parent=1 // pred_fallthru
      _
    // Predicated region
    $region18: #{tpu_custom_call.1} parent=1 // pred_check
      _
    $region19: #{tpu_custom_call.1} parent=1 // pred_check_branch
      %55 = sbr.rel (0) target = $region21
    $region20: #{tpu_custom_call.1} parent=1 // pred_region
      %s57 = ssub.s32 1024, 1024
      %58 = vsyncadd [#allocation9], %s57
      %s59 = sshll.u32 [#allocation8], 4
      %s60 = int_to_ptr.vmem [resolvable:$true] %s59
      %65 = dma.hbm_to_vmem [thread:$0]  %s4, 1024, %s60, [#allocation9], 64, 64, 4
    $region21: #{tpu_custom_call.1} parent=1 // pred_fallthru
      _
    // Predicated region
    $region22: #{tpu_custom_call.1} parent=1 // pred_check
      _
    $region23: #{tpu_custom_call.1} parent=1 // pred_check_branch
      %67 = sbr.rel (0) target = $region25
    $region24: #{tpu_custom_call.1} parent=1 // pred_region
      %s69 = ssub.s32 2048, 2048
      %70 = vsyncadd [#allocation9], %s69
      %s71 = sshll.u32 [#allocation10], 4
      %s72 = int_to_ptr.vmem [resolvable:$true] %s71
      %77 = dma.hbm_to_vmem [thread:$0]  %s5, 2048, %s72, [#allocation9], 64, 64, 4
    $region25: #{tpu_custom_call.1} parent=1 // pred_fallthru
      _
    // Predicated region
    $region26: #{tpu_custom_call.1} parent=1 // pred_check
      _
    $region27: #{tpu_custom_call.1} parent=1 // pred_check_branch
      %79 = sbr.rel (0) target = $region29
    $region28: #{tpu_custom_call.1} parent=1 // pred_region
      _
    $region29: #{tpu_custom_call.1} parent=1 // pred_fallthru
      _
    // Predicated region
    $region30: #{tpu_custom_call.1} parent=1 // pred_check
      _
    $region31: #{tpu_custom_call.1} parent=1 // pred_check_branch
      %81 = sbr.rel (0) target = $region33
    $region32: #{tpu_custom_call.1} parent=1 // pred_region
      _
    $region33: #{tpu_custom_call.1} parent=1 // pred_fallthru
      _
    // Predicated region
    $region34: #{tpu_custom_call.1} parent=1 // pred_check
      _
    $region35: #{tpu_custom_call.1} parent=1 // pred_check_branch
      %83 = sbr.rel (0) target = $region37
    $region36: #{tpu_custom_call.1} parent=1 // pred_region
      _
    $region37: #{tpu_custom_call.1} parent=1 // pred_fallthru
      _
    // Predicated region
    $region38: #{tpu_custom_call.1} parent=1 // pred_check
      _
    $region39: #{tpu_custom_call.1} parent=1 // pred_check_branch
      %85 = sbr.rel (0) target = $region41
    $region40: #{tpu_custom_call.1} parent=1 // pred_region
      %86 = dma.done [#allocation3], 64
    $region41: #{tpu_custom_call.1} parent=1 // pred_fallthru
      _
    // Predicated region
    $region42: #{tpu_custom_call.1} parent=1 // pred_check
      _
    $region43: #{tpu_custom_call.1} parent=1 // pred_check_branch
      %88 = sbr.rel (0) target = $region45
    $region44: #{tpu_custom_call.1} parent=1 // pred_region
      %89 = dma.done [#allocation6], 3072
    $region45: #{tpu_custom_call.1} parent=1 // pred_fallthru
      _
    // Predicated region
    $region46: #{tpu_custom_call.1} parent=1 // pred_check
      _
    $region47: #{tpu_custom_call.1} parent=1 // pred_check_branch
      %91 = sbr.rel (0) target = $region49
    $region48: #{tpu_custom_call.1} parent=1 // pred_region
      %92 = dma.done [#allocation6], 3072
    $region49: #{tpu_custom_call.1} parent=1 // pred_fallthru
      _
    // Predicated region
    $region50: #{tpu_custom_call.1} parent=1 // pred_check
      _
    $region51: #{tpu_custom_call.1} parent=1 // pred_check_branch
      %94 = sbr.rel (0) target = $region53
    $region52: #{tpu_custom_call.1} parent=1 // pred_region
      %95 = dma.done [#allocation9], 1024
    $region53: #{tpu_custom_call.1} parent=1 // pred_fallthru
      _
    // Predicated region
    $region54: #{tpu_custom_call.1} parent=1 // pred_check
      _
    $region55: #{tpu_custom_call.1} parent=1 // pred_check_branch
      %97 = sbr.rel (0) target = $region57
    $region56: #{tpu_custom_call.1} parent=1 // pred_region
      %98 = dma.done [#allocation9], 2048
    $region57: #{tpu_custom_call.1} parent=1 // pred_fallthru
      _
    %v100 = vld [vmem:[#allocation2] sm:$0xf]
    %v101 = vld [vmem:[#allocation5] sm:$0xf]
    %v102 = vld [vmem:[#allocation5 + $0x4] sm:$0xf]
    %v103 = vld [vmem:[#allocation5 + $0x8] sm:$0xf]
    %v104 = vld [vmem:[#allocation5 + $0xc] sm:$0xf]
    %v105 = vld [vmem:[#allocation5 + $0x10] sm:$0xf]
    %v106 = vld [vmem:[#allocation5 + $0x14] sm:$0xf]
    %v107 = vld [vmem:[#allocation5 + $0x18] sm:$0xf]
    %v108 = vld [vmem:[#allocation5 + $0x1c] sm:$0xf]
    %v109 = vld [vmem:[#allocation5 + $0x20] sm:$0xf]
    %v110 = vld [vmem:[#allocation5 + $0x24] sm:$0xf]
    %v111 = vld [vmem:[#allocation5 + $0x28] sm:$0xf]
    %v112 = vld [vmem:[#allocation5 + $0x2c] sm:$0xf]
    %v113 = vld [vmem:[#allocation5 + $0x30] sm:$0xf]
    %v114 = vld [vmem:[#allocation5 + $0x34] sm:$0xf]
    %v115 = vld [vmem:[#allocation5 + $0x38] sm:$0xf]
    %v116 = vld [vmem:[#allocation5 + $0x3c] sm:$0xf]
    %v117 = vld [vmem:[%s6 + $0x1] sm:$0x1]
    %v118 = vlaneseq
    %v119 = vshrl.u32 %v118, 7
    %v120 = vsub.s32 0, %v119
    %v121 = vrot.slane %v117, %v120
    %v138 = vunpack.c.l.b16 %v101
    %v139 = vunpack.c.l.b16 %v102
    %v140 = vunpack.c.l.b16 %v103
    %v141 = vunpack.c.l.b16 %v104
    %v142 = vunpack.c.l.b16 %v105
    %v143 = vunpack.c.l.b16 %v106
    %v144 = vunpack.c.l.b16 %v107
    %v145 = vunpack.c.l.b16 %v108
    %v146 = vunpack.c.l.b16 %v109
    %v147 = vunpack.c.l.b16 %v110
    %v148 = vunpack.c.l.b16 %v111
    %v149 = vunpack.c.l.b16 %v112
    %v150 = vunpack.c.l.b16 %v113
    %v151 = vunpack.c.l.b16 %v114
    %v152 = vunpack.c.l.b16 %v115
    %v153 = vunpack.c.l.b16 %v116
    %v154 = vpack.c.b16 %v139, %v138
    %v155 = vpack.c.b16 %v141, %v140
    %v156 = vpack.c.b16 %v143, %v142
    %v157 = vpack.c.b16 %v145, %v144
    %v158 = vpack.c.b16 %v147, %v146
    %v159 = vpack.c.b16 %v149, %v148
    %v160 = vpack.c.b16 %v151, %v150
    %v161 = vpack.c.b16 %v153, %v152
    %170 = vmatprep.subr.bf16.mxu0 0
    %171 = vmatpush1.bf16.msra.mxu0 %v154
    %172 = vmatprep.subr.bf16.mxu0 0
    %173 = vmatpush1.bf16.msra.mxu0 %v155
    %174 = vmatprep.subr.bf16.mxu0 0
    %175 = vmatpush1.bf16.msra.mxu0 %v156
    %176 = vmatprep.subr.bf16.mxu0 0
    %177 = vmatpush1.bf16.msra.mxu0 %v157
    %178 = vmatprep.subr.bf16.mxu0 0
    %179 = vmatpush1.bf16.msra.mxu0 %v158
    %180 = vmatprep.subr.bf16.mxu0 0
    %181 = vmatpush1.bf16.msra.mxu0 %v159
    %182 = vmatprep.subr.bf16.mxu0 0
    %183 = vmatpush1.bf16.msra.mxu0 %v160
    %184 = vmatprep.subr.bf16.mxu0 0
    %185 = vmatpush1.bf16.msra.mxu0 %v161
    %186 = vmatprep.subr.bf16.mxu0 0
    %187 = vmatpush1.bf16.msra.mxu0 0
    %188 = vmatprep.subr.bf16.mxu0 0
    %189 = vmatpush1.bf16.msra.mxu0 0
    %190 = vmatprep.subr.bf16.mxu0 0
    %191 = vmatpush1.bf16.msra.mxu0 0
    %192 = vmatprep.subr.bf16.mxu0 0
    %193 = vmatpush1.bf16.msra.mxu0 0
    %194 = vmatprep.subr.bf16.mxu0 0
    %195 = vmatpush1.bf16.msra.mxu0 0
    %196 = vmatprep.subr.bf16.mxu0 0
    %197 = vmatpush1.bf16.msra.mxu0 0
    %198 = vmatprep.subr.bf16.mxu0 0
    %199 = vmatpush1.bf16.msra.mxu0 0
    %200 = vmatprep.subr.bf16.mxu0 0
    %201 = vmatpush1.bf16.msra.mxu0 0
    %202 = vmatprep.mubr.bf16.mxu0 0
    %203 = vmatmul.mubr.bf16.gmra.mrb[0].mxu0 %v100
    %v204 = vpop.f32.mrb[0].mxu0
    %v205 = vadd.f32 %v121, %v204
    %v206 = vpop.f32.mrb[0].mxu0
    %v207 = vpop.f32.mrb[0].mxu0
    %v208 = vpop.f32.mrb[0].mxu0
    %209 = vdwg.mxu0
    %v210 = vmax.f32 %v205, 0.0
    %v211 = vpack.c.bf16 %v210, %v210
    %v212 = vld [vmem:[#allocation7] sm:$0xf]
    %v213 = vld [vmem:[#allocation7 + $0x4] sm:$0xf]
    %v214 = vld [vmem:[#allocation7 + $0x8] sm:$0xf]
    %v215 = vld [vmem:[#allocation7 + $0xc] sm:$0xf]
    %v216 = vld [vmem:[#allocation7 + $0x10] sm:$0xf]
    %v217 = vld [vmem:[#allocation7 + $0x14] sm:$0xf]
    %v218 = vld [vmem:[#allocation7 + $0x18] sm:$0xf]
    %v219 = vld [vmem:[#allocation7 + $0x1c] sm:$0xf]
    %v220 = vld [vmem:[#allocation7 + $0x20] sm:$0xf]
    %v221 = vld [vmem:[#allocation7 + $0x24] sm:$0xf]
    %v222 = vld [vmem:[#allocation7 + $0x28] sm:$0xf]
    %v223 = vld [vmem:[#allocation7 + $0x2c] sm:$0xf]
    %v224 = vld [vmem:[#allocation7 + $0x30] sm:$0xf]
    %v225 = vld [vmem:[#allocation7 + $0x34] sm:$0xf]
    %v226 = vld [vmem:[#allocation7 + $0x38] sm:$0xf]
    %v227 = vld [vmem:[#allocation7 + $0x3c] sm:$0xf]
    %v228 = vld [vmem:[%s6 + $0x2] sm:$0x1]
    %v229 = vlaneseq
    %v230 = vshrl.u32 %v229, 7
    %v231 = vsub.s32 0, %v230
    %v232 = vrot.slane %v228, %v231
    %v249 = vunpack.c.l.b16 %v212
    %v250 = vunpack.c.l.b16 %v213
    %v251 = vunpack.c.l.b16 %v214
    %v252 = vunpack.c.l.b16 %v215
    %v253 = vunpack.c.l.b16 %v216
    %v254 = vunpack.c.l.b16 %v217
    %v255 = vunpack.c.l.b16 %v218
    %v256 = vunpack.c.l.b16 %v219
    %v257 = vunpack.c.l.b16 %v220
    %v258 = vunpack.c.l.b16 %v221
    %v259 = vunpack.c.l.b16 %v222
    %v260 = vunpack.c.l.b16 %v223
    %v261 = vunpack.c.l.b16 %v224
    %v262 = vunpack.c.l.b16 %v225
    %v263 = vunpack.c.l.b16 %v226
    %v264 = vunpack.c.l.b16 %v227
    %v265 = vpack.c.b16 %v250, %v249
    %v266 = vpack.c.b16 %v252, %v251
    %v267 = vpack.c.b16 %v254, %v253
    %v268 = vpack.c.b16 %v256, %v255
    %v269 = vpack.c.b16 %v258, %v257
    %v270 = vpack.c.b16 %v260, %v259
    %v271 = vpack.c.b16 %v262, %v261
    %v272 = vpack.c.b16 %v264, %v263
    %281 = vmatprep.subr.bf16.mxu0 0
    %282 = vmatpush1.bf16.msra.mxu0 %v265
    %283 = vmatprep.subr.bf16.mxu0 0
    %284 = vmatpush1.bf16.msra.mxu0 %v266
    %285 = vmatprep.subr.bf16.mxu0 0
    %286 = vmatpush1.bf16.msra.mxu0 %v267
    %287 = vmatprep.subr.bf16.mxu0 0
    %288 = vmatpush1.bf16.msra.mxu0 %v268
    %289 = vmatprep.subr.bf16.mxu0 0
    %290 = vmatpush1.bf16.msra.mxu0 %v269
    %291 = vmatprep.subr.bf16.mxu0 0
    %292 = vmatpush1.bf16.msra.mxu0 %v270
    %293 = vmatprep.subr.bf16.mxu0 0
    %294 = vmatpush1.bf16.msra.mxu0 %v271
    %295 = vmatprep.subr.bf16.mxu0 0
    %296 = vmatpush1.bf16.msra.mxu0 %v272
    %297 = vmatprep.subr.bf16.mxu0 0
    %298 = vmatpush1.bf16.msra.mxu0 0
    %299 = vmatprep.subr.bf16.mxu0 0
    %300 = vmatpush1.bf16.msra.mxu0 0
    %301 = vmatprep.subr.bf16.mxu0 0
    %302 = vmatpush1.bf16.msra.mxu0 0
    %303 = vmatprep.subr.bf16.mxu0 0
    %304 = vmatpush1.bf16.msra.mxu0 0
    %305 = vmatprep.subr.bf16.mxu0 0
    %306 = vmatpush1.bf16.msra.mxu0 0
    %307 = vmatprep.subr.bf16.mxu0 0
    %308 = vmatpush1.bf16.msra.mxu0 0
    %309 = vmatprep.subr.bf16.mxu0 0
    %310 = vmatpush1.bf16.msra.mxu0 0
    %311 = vmatprep.subr.bf16.mxu0 0
    %312 = vmatpush1.bf16.msra.mxu0 0
    %313 = vmatprep.mubr.bf16.mxu0 0
    %314 = vmatmul.mubr.bf16.gmra.mrb[0].mxu0 %v211
    %v315 = vpop.f32.mrb[0].mxu0
    %v316 = vadd.f32 %v232, %v315
    %v317 = vpop.f32.mrb[0].mxu0
    %v318 = vpop.f32.mrb[0].mxu0
    %v319 = vpop.f32.mrb[0].mxu0
    %320 = vdwg.mxu0
    %s321 = scalar_lea.vmem [#allocation5], 64
    %v322 = vld [vmem:[%s321] sm:$0xf]
    %v323 = vld [vmem:[%s321 + $0x4] sm:$0xf]
    %v324 = vld [vmem:[%s321 + $0x8] sm:$0xf]
    %v325 = vld [vmem:[%s321 + $0xc] sm:$0xf]
    %v326 = vld [vmem:[%s321 + $0x10] sm:$0xf]
    %v327 = vld [vmem:[%s321 + $0x14] sm:$0xf]
    %v328 = vld [vmem:[%s321 + $0x18] sm:$0xf]
    %v329 = vld [vmem:[%s321 + $0x1c] sm:$0xf]
    %v330 = vld [vmem:[%s321 + $0x20] sm:$0xf]
    %v331 = vld [vmem:[%s321 + $0x24] sm:$0xf]
    %v332 = vld [vmem:[%s321 + $0x28] sm:$0xf]
    %v333 = vld [vmem:[%s321 + $0x2c] sm:$0xf]
    %v334 = vld [vmem:[%s321 + $0x30] sm:$0xf]
    %v335 = vld [vmem:[%s321 + $0x34] sm:$0xf]
    %v336 = vld [vmem:[%s321 + $0x38] sm:$0xf]
    %v337 = vld [vmem:[%s321 + $0x3c] sm:$0xf]
    %s338 = scalar_lea.vmem %s6, 8
    %v339 = vld [vmem:[%s338 + $0x1] sm:$0x1]
    %v340 = vlaneseq
    %v341 = vshrl.u32 %v340, 7
    %v342 = vsub.s32 0, %v341
    %v343 = vrot.slane %v339, %v342
    %v360 = vunpack.c.l.b16 %v322
    %v361 = vunpack.c.l.b16 %v323
    %v362 = vunpack.c.l.b16 %v324
    %v363 = vunpack.c.l.b16 %v325
    %v364 = vunpack.c.l.b16 %v326
    %v365 = vunpack.c.l.b16 %v327
    %v366 = vunpack.c.l.b16 %v328
    %v367 = vunpack.c.l.b16 %v329
    %v368 = vunpack.c.l.b16 %v330
    %v369 = vunpack.c.l.b16 %v331
    %v370 = vunpack.c.l.b16 %v332
    %v371 = vunpack.c.l.b16 %v333
    %v372 = vunpack.c.l.b16 %v334
    %v373 = vunpack.c.l.b16 %v335
    %v374 = vunpack.c.l.b16 %v336
    %v375 = vunpack.c.l.b16 %v337
    %v376 = vpack.c.b16 %v361, %v360
    %v377 = vpack.c.b16 %v363, %v362
    %v378 = vpack.c.b16 %v365, %v364
    %v379 = vpack.c.b16 %v367, %v366
    %v380 = vpack.c.b16 %v369, %v368
    %v381 = vpack.c.b16 %v371, %v370
    %v382 = vpack.c.b16 %v373, %v372
    %v383 = vpack.c.b16 %v375, %v374
    %392 = vmatprep.subr.bf16.mxu0 0
    %393 = vmatpush1.bf16.msra.mxu0 %v376
    %394 = vmatprep.subr.bf16.mxu0 0
    %395 = vmatpush1.bf16.msra.mxu0 %v377
    %396 = vmatprep.subr.bf16.mxu0 0
    %397 = vmatpush1.bf16.msra.mxu0 %v378
    %398 = vmatprep.subr.bf16.mxu0 0
    %399 = vmatpush1.bf16.msra.mxu0 %v379
    %400 = vmatprep.subr.bf16.mxu0 0
    %401 = vmatpush1.bf16.msra.mxu0 %v380
    %402 = vmatprep.subr.bf16.mxu0 0
    %403 = vmatpush1.bf16.msra.mxu0 %v381
    %404 = vmatprep.subr.bf16.mxu0 0
    %405 = vmatpush1.bf16.msra.mxu0 %v382
    %406 = vmatprep.subr.bf16.mxu0 0
    %407 = vmatpush1.bf16.msra.mxu0 %v383
    %408 = vmatprep.subr.bf16.mxu0 0
    %409 = vmatpush1.bf16.msra.mxu0 0
    %410 = vmatprep.subr.bf16.mxu0 0
    %411 = vmatpush1.bf16.msra.mxu0 0
    %412 = vmatprep.subr.bf16.mxu0 0
    %413 = vmatpush1.bf16.msra.mxu0 0
    %414 = vmatprep.subr.bf16.mxu0 0
    %415 = vmatpush1.bf16.msra.mxu0 0
    %416 = vmatprep.subr.bf16.mxu0 0
    %417 = vmatpush1.bf16.msra.mxu0 0
    %418 = vmatprep.subr.bf16.mxu0 0
    %419 = vmatpush1.bf16.msra.mxu0 0
    %420 = vmatprep.subr.bf16.mxu0 0
    %421 = vmatpush1.bf16.msra.mxu0 0
    %422 = vmatprep.subr.bf16.mxu0 0
    %423 = vmatpush1.bf16.msra.mxu0 0
    %424 = vmatprep.mubr.bf16.mxu0 0
    %425 = vmatmul.mubr.bf16.gmra.mrb[0].mxu0 %v100
    %v426 = vpop.f32.mrb[0].mxu0
    %v427 = vadd.f32 %v343, %v426
    %v428 = vpop.f32.mrb[0].mxu0
    %v429 = vpop.f32.mrb[0].mxu0
    %v430 = vpop.f32.mrb[0].mxu0
    %431 = vdwg.mxu0
    %v432 = vmax.f32 %v427, 0.0
    %v433 = vpack.c.bf16 %v432, %v432
    %s434 = scalar_lea.vmem [#allocation7], 64
    %v435 = vld [vmem:[%s434] sm:$0xf]
    %v436 = vld [vmem:[%s434 + $0x4] sm:$0xf]
    %v437 = vld [vmem:[%s434 + $0x8] sm:$0xf]
    %v438 = vld [vmem:[%s434 + $0xc] sm:$0xf]
    %v439 = vld [vmem:[%s434 + $0x10] sm:$0xf]
    %v440 = vld [vmem:[%s434 + $0x14] sm:$0xf]
    %v441 = vld [vmem:[%s434 + $0x18] sm:$0xf]
    %v442 = vld [vmem:[%s434 + $0x1c] sm:$0xf]
    %v443 = vld [vmem:[%s434 + $0x20] sm:$0xf]
    %v444 = vld [vmem:[%s434 + $0x24] sm:$0xf]
    %v445 = vld [vmem:[%s434 + $0x28] sm:$0xf]
    %v446 = vld [vmem:[%s434 + $0x2c] sm:$0xf]
    %v447 = vld [vmem:[%s434 + $0x30] sm:$0xf]
    %v448 = vld [vmem:[%s434 + $0x34] sm:$0xf]
    %v449 = vld [vmem:[%s434 + $0x38] sm:$0xf]
    %v450 = vld [vmem:[%s434 + $0x3c] sm:$0xf]
    %v451 = vld [vmem:[%s338 + $0x2] sm:$0x1]
    %v452 = vlaneseq
    %v453 = vshrl.u32 %v452, 7
    %v454 = vsub.s32 0, %v453
    %v455 = vrot.slane %v451, %v454
    %v472 = vunpack.c.l.b16 %v435
    %v473 = vunpack.c.l.b16 %v436
    %v474 = vunpack.c.l.b16 %v437
    %v475 = vunpack.c.l.b16 %v438
    %v476 = vunpack.c.l.b16 %v439
    %v477 = vunpack.c.l.b16 %v440
    %v478 = vunpack.c.l.b16 %v441
    %v479 = vunpack.c.l.b16 %v442
    %v480 = vunpack.c.l.b16 %v443
    %v481 = vunpack.c.l.b16 %v444
    %v482 = vunpack.c.l.b16 %v445
    %v483 = vunpack.c.l.b16 %v446
    %v484 = vunpack.c.l.b16 %v447
    %v485 = vunpack.c.l.b16 %v448
    %v486 = vunpack.c.l.b16 %v449
    %v487 = vunpack.c.l.b16 %v450
    %v488 = vpack.c.b16 %v473, %v472
    %v489 = vpack.c.b16 %v475, %v474
    %v490 = vpack.c.b16 %v477, %v476
    %v491 = vpack.c.b16 %v479, %v478
    %v492 = vpack.c.b16 %v481, %v480
    %v493 = vpack.c.b16 %v483, %v482
    %v494 = vpack.c.b16 %v485, %v484
    %v495 = vpack.c.b16 %v487, %v486
    %504 = vmatprep.subr.bf16.mxu0 0
    %505 = vmatpush1.bf16.msra.mxu0 %v488
    %506 = vmatprep.subr.bf16.mxu0 0
    %507 = vmatpush1.bf16.msra.mxu0 %v489
    %508 = vmatprep.subr.bf16.mxu0 0
    %509 = vmatpush1.bf16.msra.mxu0 %v490
    %510 = vmatprep.subr.bf16.mxu0 0
    %511 = vmatpush1.bf16.msra.mxu0 %v491
    %512 = vmatprep.subr.bf16.mxu0 0
    %513 = vmatpush1.bf16.msra.mxu0 %v492
    %514 = vmatprep.subr.bf16.mxu0 0
    %515 = vmatpush1.bf16.msra.mxu0 %v493
    %516 = vmatprep.subr.bf16.mxu0 0
    %517 = vmatpush1.bf16.msra.mxu0 %v494
    %518 = vmatprep.subr.bf16.mxu0 0
    %519 = vmatpush1.bf16.msra.mxu0 %v495
    %520 = vmatprep.subr.bf16.mxu0 0
    %521 = vmatpush1.bf16.msra.mxu0 0
    %522 = vmatprep.subr.bf16.mxu0 0
    %523 = vmatpush1.bf16.msra.mxu0 0
    %524 = vmatprep.subr.bf16.mxu0 0
    %525 = vmatpush1.bf16.msra.mxu0 0
    %526 = vmatprep.subr.bf16.mxu0 0
    %527 = vmatpush1.bf16.msra.mxu0 0
    %528 = vmatprep.subr.bf16.mxu0 0
    %529 = vmatpush1.bf16.msra.mxu0 0
    %530 = vmatprep.subr.bf16.mxu0 0
    %531 = vmatpush1.bf16.msra.mxu0 0
    %532 = vmatprep.subr.bf16.mxu0 0
    %533 = vmatpush1.bf16.msra.mxu0 0
    %534 = vmatprep.subr.bf16.mxu0 0
    %535 = vmatpush1.bf16.msra.mxu0 0
    %536 = vmatprep.mubr.bf16.mxu0 0
    %537 = vmatmul.mubr.bf16.gmra.mrb[0].mxu0 %v433
    %v538 = vpop.f32.mrb[0].mxu0
    %v539 = vadd.f32 %v455, %v538
    %v540 = vpop.f32.mrb[0].mxu0
    %v541 = vpop.f32.mrb[0].mxu0
    %v542 = vpop.f32.mrb[0].mxu0
    %543 = vdwg.mxu0
    %s544 = scalar_lea.vmem [#allocation5], 128
    %v545 = vld [vmem:[%s544] sm:$0xf]
    %v546 = vld [vmem:[%s544 + $0x4] sm:$0xf]
    %v547 = vld [vmem:[%s544 + $0x8] sm:$0xf]
    %v548 = vld [vmem:[%s544 + $0xc] sm:$0xf]
    %v549 = vld [vmem:[%s544 + $0x10] sm:$0xf]
    %v550 = vld [vmem:[%s544 + $0x14] sm:$0xf]
    %v551 = vld [vmem:[%s544 + $0x18] sm:$0xf]
    %v552 = vld [vmem:[%s544 + $0x1c] sm:$0xf]
    %v553 = vld [vmem:[%s544 + $0x20] sm:$0xf]
    %v554 = vld [vmem:[%s544 + $0x24] sm:$0xf]
    %v555 = vld [vmem:[%s544 + $0x28] sm:$0xf]
    %v556 = vld [vmem:[%s544 + $0x2c] sm:$0xf]
    %v557 = vld [vmem:[%s544 + $0x30] sm:$0xf]
    %v558 = vld [vmem:[%s544 + $0x34] sm:$0xf]
    %v559 = vld [vmem:[%s544 + $0x38] sm:$0xf]
    %v560 = vld [vmem:[%s544 + $0x3c] sm:$0xf]
    %s561 = scalar_lea.vmem %s6, 16
    %v562 = vld [vmem:[%s561 + $0x1] sm:$0x1]
    %v563 = vlaneseq
    %v564 = vshrl.u32 %v563, 7
    %v565 = vsub.s32 0, %v564
    %v566 = vrot.slane %v562, %v565
    %v583 = vunpack.c.l.b16 %v545
    %v584 = vunpack.c.l.b16 %v546
    %v585 = vunpack.c.l.b16 %v547
    %v586 = vunpack.c.l.b16 %v548
    %v587 = vunpack.c.l.b16 %v549
    %v588 = vunpack.c.l.b16 %v550
    %v589 = vunpack.c.l.b16 %v551
    %v590 = vunpack.c.l.b16 %v552
    %v591 = vunpack.c.l.b16 %v553
    %v592 = vunpack.c.l.b16 %v554
    %v593 = vunpack.c.l.b16 %v555
    %v594 = vunpack.c.l.b16 %v556
    %v595 = vunpack.c.l.b16 %v557
    %v596 = vunpack.c.l.b16 %v558
    %v597 = vunpack.c.l.b16 %v559
    %v598 = vunpack.c.l.b16 %v560
    %v599 = vpack.c.b16 %v584, %v583
    %v600 = vpack.c.b16 %v586, %v585
    %v601 = vpack.c.b16 %v588, %v587
    %v602 = vpack.c.b16 %v590, %v589
    %v603 = vpack.c.b16 %v592, %v591
    %v604 = vpack.c.b16 %v594, %v593
    %v605 = vpack.c.b16 %v596, %v595
    %v606 = vpack.c.b16 %v598, %v597
    %615 = vmatprep.subr.bf16.mxu0 0
    %616 = vmatpush1.bf16.msra.mxu0 %v599
    %617 = vmatprep.subr.bf16.mxu0 0
    %618 = vmatpush1.bf16.msra.mxu0 %v600
    %619 = vmatprep.subr.bf16.mxu0 0
    %620 = vmatpush1.bf16.msra.mxu0 %v601
    %621 = vmatprep.subr.bf16.mxu0 0
    %622 = vmatpush1.bf16.msra.mxu0 %v602
    %623 = vmatprep.subr.bf16.mxu0 0
    %624 = vmatpush1.bf16.msra.mxu0 %v603
    %625 = vmatprep.subr.bf16.mxu0 0
    %626 = vmatpush1.bf16.msra.mxu0 %v604
    %627 = vmatprep.subr.bf16.mxu0 0
    %628 = vmatpush1.bf16.msra.mxu0 %v605
    %629 = vmatprep.subr.bf16.mxu0 0
    %630 = vmatpush1.bf16.msra.mxu0 %v606
    %631 = vmatprep.subr.bf16.mxu0 0
    %632 = vmatpush1.bf16.msra.mxu0 0
    %633 = vmatprep.subr.bf16.mxu0 0
    %634 = vmatpush1.bf16.msra.mxu0 0
    %635 = vmatprep.subr.bf16.mxu0 0
    %636 = vmatpush1.bf16.msra.mxu0 0
    %637 = vmatprep.subr.bf16.mxu0 0
    %638 = vmatpush1.bf16.msra.mxu0 0
    %639 = vmatprep.subr.bf16.mxu0 0
    %640 = vmatpush1.bf16.msra.mxu0 0
    %641 = vmatprep.subr.bf16.mxu0 0
    %642 = vmatpush1.bf16.msra.mxu0 0
    %643 = vmatprep.subr.bf16.mxu0 0
    %644 = vmatpush1.bf16.msra.mxu0 0
    %645 = vmatprep.subr.bf16.mxu0 0
    %646 = vmatpush1.bf16.msra.mxu0 0
    %647 = vmatprep.mubr.bf16.mxu0 0
    %648 = vmatmul.mubr.bf16.gmra.mrb[0].mxu0 %v100
    %v649 = vpop.f32.mrb[0].mxu0
    %v650 = vadd.f32 %v566, %v649
    %v651 = vpop.f32.mrb[0].mxu0
    %v652 = vpop.f32.mrb[0].mxu0
    %v653 = vpop.f32.mrb[0].mxu0
    %654 = vdwg.mxu0
    %v655 = vmax.f32 %v650, 0.0
    %v656 = vpack.c.bf16 %v655, %v655
    %s657 = scalar_lea.vmem [#allocation7], 128
    %v658 = vld [vmem:[%s657] sm:$0xf]
    %v659 = vld [vmem:[%s657 + $0x4] sm:$0xf]
    %v660 = vld [vmem:[%s657 + $0x8] sm:$0xf]
    %v661 = vld [vmem:[%s657 + $0xc] sm:$0xf]
    %v662 = vld [vmem:[%s657 + $0x10] sm:$0xf]
    %v663 = vld [vmem:[%s657 + $0x14] sm:$0xf]
    %v664 = vld [vmem:[%s657 + $0x18] sm:$0xf]
    %v665 = vld [vmem:[%s657 + $0x1c] sm:$0xf]
    %v666 = vld [vmem:[%s657 + $0x20] sm:$0xf]
    %v667 = vld [vmem:[%s657 + $0x24] sm:$0xf]
    %v668 = vld [vmem:[%s657 + $0x28] sm:$0xf]
    %v669 = vld [vmem:[%s657 + $0x2c] sm:$0xf]
    %v670 = vld [vmem:[%s657 + $0x30] sm:$0xf]
    %v671 = vld [vmem:[%s657 + $0x34] sm:$0xf]
    %v672 = vld [vmem:[%s657 + $0x38] sm:$0xf]
    %v673 = vld [vmem:[%s657 + $0x3c] sm:$0xf]
    %v674 = vld [vmem:[%s561 + $0x2] sm:$0x1]
    %v675 = vlaneseq
    %v676 = vshrl.u32 %v675, 7
    %v677 = vsub.s32 0, %v676
    %v678 = vrot.slane %v674, %v677
    %v695 = vunpack.c.l.b16 %v658
    %v696 = vunpack.c.l.b16 %v659
    %v697 = vunpack.c.l.b16 %v660
    %v698 = vunpack.c.l.b16 %v661
    %v699 = vunpack.c.l.b16 %v662
    %v700 = vunpack.c.l.b16 %v663
    %v701 = vunpack.c.l.b16 %v664
    %v702 = vunpack.c.l.b16 %v665
    %v703 = vunpack.c.l.b16 %v666
    %v704 = vunpack.c.l.b16 %v667
    %v705 = vunpack.c.l.b16 %v668
    %v706 = vunpack.c.l.b16 %v669
    %v707 = vunpack.c.l.b16 %v670
    %v708 = vunpack.c.l.b16 %v671
    %v709 = vunpack.c.l.b16 %v672
    %v710 = vunpack.c.l.b16 %v673
    %v711 = vpack.c.b16 %v696, %v695
    %v712 = vpack.c.b16 %v698, %v697
    %v713 = vpack.c.b16 %v700, %v699
    %v714 = vpack.c.b16 %v702, %v701
    %v715 = vpack.c.b16 %v704, %v703
    %v716 = vpack.c.b16 %v706, %v705
    %v717 = vpack.c.b16 %v708, %v707
    %v718 = vpack.c.b16 %v710, %v709
    %727 = vmatprep.subr.bf16.mxu0 0
    %728 = vmatpush1.bf16.msra.mxu0 %v711
    %729 = vmatprep.subr.bf16.mxu0 0
    %730 = vmatpush1.bf16.msra.mxu0 %v712
    %731 = vmatprep.subr.bf16.mxu0 0
    %732 = vmatpush1.bf16.msra.mxu0 %v713
    %733 = vmatprep.subr.bf16.mxu0 0
    %734 = vmatpush1.bf16.msra.mxu0 %v714
    %735 = vmatprep.subr.bf16.mxu0 0
    %736 = vmatpush1.bf16.msra.mxu0 %v715
    %737 = vmatprep.subr.bf16.mxu0 0
    %738 = vmatpush1.bf16.msra.mxu0 %v716
    %739 = vmatprep.subr.bf16.mxu0 0
    %740 = vmatpush1.bf16.msra.mxu0 %v717
    %741 = vmatprep.subr.bf16.mxu0 0
    %742 = vmatpush1.bf16.msra.mxu0 %v718
    %743 = vmatprep.subr.bf16.mxu0 0
    %744 = vmatpush1.bf16.msra.mxu0 0
    %745 = vmatprep.subr.bf16.mxu0 0
    %746 = vmatpush1.bf16.msra.mxu0 0
    %747 = vmatprep.subr.bf16.mxu0 0
    %748 = vmatpush1.bf16.msra.mxu0 0
    %749 = vmatprep.subr.bf16.mxu0 0
    %750 = vmatpush1.bf16.msra.mxu0 0
    %751 = vmatprep.subr.bf16.mxu0 0
    %752 = vmatpush1.bf16.msra.mxu0 0
    %753 = vmatprep.subr.bf16.mxu0 0
    %754 = vmatpush1.bf16.msra.mxu0 0
    %755 = vmatprep.subr.bf16.mxu0 0
    %756 = vmatpush1.bf16.msra.mxu0 0
    %757 = vmatprep.subr.bf16.mxu0 0
    %758 = vmatpush1.bf16.msra.mxu0 0
    %759 = vmatprep.mubr.bf16.mxu0 0
    %760 = vmatmul.mubr.bf16.gmra.mrb[0].mxu0 %v656
    %v761 = vpop.f32.mrb[0].mxu0
    %v762 = vadd.f32 %v678, %v761
    %v763 = vpop.f32.mrb[0].mxu0
    %v764 = vpop.f32.mrb[0].mxu0
    %v765 = vpop.f32.mrb[0].mxu0
    %766 = vdwg.mxu0
    %v767 = vlaneseq
    %v768 = vand.u32 %v767, 127
    %vm769 = vcmp.lt.s32.totalorder %v768, 32
    %v770 = vld [vmem:[%s0] sm:$0xf]
    %v771 = vld [vmem:[#allocation8] sm:$0xf]
    %v772 = vld [vmem:[#allocation8 + $0x4] sm:$0xf]
    %v773 = vld [vmem:[#allocation8 + $0x8] sm:$0xf]
    %v774 = vld [vmem:[#allocation8 + $0xc] sm:$0xf]
    %v775 = vld [vmem:[#allocation8 + $0x10] sm:$0xf]
    %v776 = vld [vmem:[#allocation8 + $0x14] sm:$0xf]
    %v777 = vld [vmem:[#allocation8 + $0x18] sm:$0xf]
    %v778 = vld [vmem:[#allocation8 + $0x1c] sm:$0xf]
    %v779 = vld [vmem:[#allocation8 + $0x20] sm:$0xf]
    %v780 = vld [vmem:[#allocation8 + $0x24] sm:$0xf]
    %v781 = vld [vmem:[#allocation8 + $0x28] sm:$0xf]
    %v782 = vld [vmem:[#allocation8 + $0x2c] sm:$0xf]
    %v783 = vld [vmem:[#allocation8 + $0x30] sm:$0xf]
    %v784 = vld [vmem:[#allocation8 + $0x34] sm:$0xf]
    %v785 = vld [vmem:[#allocation8 + $0x38] sm:$0xf]
    %v786 = vld [vmem:[#allocation8 + $0x3c] sm:$0xf]
    %v787 = vld [vmem:[%s6] sm:$0x1]
    %v788 = vlaneseq
    %v789 = vshrl.u32 %v788, 7
    %v790 = vsub.s32 0, %v789
    %v791 = vrot.slane %v787, %v790
    %v808 = vunpack.c.l.b16 %v771
    %v809 = vunpack.c.l.b16 %v772
    %v810 = vunpack.c.l.b16 %v773
    %v811 = vunpack.c.l.b16 %v774
    %v812 = vunpack.c.l.b16 %v775
    %v813 = vunpack.c.l.b16 %v776
    %v814 = vunpack.c.l.b16 %v777
    %v815 = vunpack.c.l.b16 %v778
    %v816 = vunpack.c.l.b16 %v779
    %v817 = vunpack.c.l.b16 %v780
    %v818 = vunpack.c.l.b16 %v781
    %v819 = vunpack.c.l.b16 %v782
    %v820 = vunpack.c.l.b16 %v783
    %v821 = vunpack.c.l.b16 %v784
    %v822 = vunpack.c.l.b16 %v785
    %v823 = vunpack.c.l.b16 %v786
    %v824 = vpack.c.b16 %v809, %v808
    %v825 = vpack.c.b16 %v811, %v810
    %v826 = vpack.c.b16 %v813, %v812
    %v827 = vpack.c.b16 %v815, %v814
    %v828 = vpack.c.b16 %v817, %v816
    %v829 = vpack.c.b16 %v819, %v818
    %v830 = vpack.c.b16 %v821, %v820
    %v831 = vpack.c.b16 %v823, %v822
    %840 = vmatprep.subr.bf16.mxu0 0
    %841 = vmatpush1.bf16.msra.mxu0 %v824
    %842 = vmatprep.subr.bf16.mxu0 0
    %843 = vmatpush1.bf16.msra.mxu0 %v825
    %844 = vmatprep.subr.bf16.mxu0 0
    %845 = vmatpush1.bf16.msra.mxu0 %v826
    %846 = vmatprep.subr.bf16.mxu0 0
    %847 = vmatpush1.bf16.msra.mxu0 %v827
    %848 = vmatprep.subr.bf16.mxu0 0
    %849 = vmatpush1.bf16.msra.mxu0 %v828
    %850 = vmatprep.subr.bf16.mxu0 0
    %851 = vmatpush1.bf16.msra.mxu0 %v829
    %852 = vmatprep.subr.bf16.mxu0 0
    %853 = vmatpush1.bf16.msra.mxu0 %v830
    %854 = vmatprep.subr.bf16.mxu0 0
    %855 = vmatpush1.bf16.msra.mxu0 %v831
    %856 = vmatprep.subr.bf16.mxu0 0
    %857 = vmatpush1.bf16.msra.mxu0 0
    %858 = vmatprep.subr.bf16.mxu0 0
    %859 = vmatpush1.bf16.msra.mxu0 0
    %860 = vmatprep.subr.bf16.mxu0 0
    %861 = vmatpush1.bf16.msra.mxu0 0
    %862 = vmatprep.subr.bf16.mxu0 0
    %863 = vmatpush1.bf16.msra.mxu0 0
    %864 = vmatprep.subr.bf16.mxu0 0
    %865 = vmatpush1.bf16.msra.mxu0 0
    %866 = vmatprep.subr.bf16.mxu0 0
    %867 = vmatpush1.bf16.msra.mxu0 0
    %868 = vmatprep.subr.bf16.mxu0 0
    %869 = vmatpush1.bf16.msra.mxu0 0
    %870 = vmatprep.subr.bf16.mxu0 0
    %871 = vmatpush1.bf16.msra.mxu0 0
    %872 = vmatprep.mubr.bf16.mxu0 0
    %873 = vmatmul.mubr.bf16.gmra.mrb[0].mxu0 %v770
    %v874 = vpop.f32.mrb[0].mxu0
    %v875 = vadd.f32 %v791, %v874
    %v876 = vpop.f32.mrb[0].mxu0
    %v877 = vpop.f32.mrb[0].mxu0
    %v878 = vpop.f32.mrb[0].mxu0
    %879 = vdwg.mxu0
    %v880 = vmax.f32 %v875, 0.0
    %v881 = vadd.f32 %v880, %v316
    %882 = vadd.xlane.f32.xlu0 %v881
    %v883 = vpop.xlane.xlu0 %882
    %v884 = vmul.f32 %v883, 0.03125
    %v885 = vsub.f32 %v881, %v884
    %v886 = vsel %vm769, 1, 0
    %vm887 = vcmp.eq.s32.totalorder %v886, 1
    %v888 = vsel %vm887, %v885, 0.0
    %v889 = vmul.f32 %v888, %v888
    %890 = vadd.xlane.f32.xlu0 %v889
    %v891 = vpop.xlane.xlu0 %890
    %v892 = vmul.f32 %v891, 0.03125
    %v893 = vadd.f32 %v892, 1e-05
    %v894 = vrsqrt.pop %v893
    %v895 = vmul.f32 %v888, %v894
    %v896 = vld [vmem:[%s6 + $0x3] sm:$0x1]
    %v897 = vlaneseq
    %v898 = vshrl.u32 %v897, 7
    %v899 = vsub.s32 0, %v898
    %v900 = vrot.slane %v896, %v899
    %v901 = vmul.f32 %v895, %v900
    %v902 = vld [vmem:[%s6 + $0x4] sm:$0x1]
    %v903 = vlaneseq
    %v904 = vshrl.u32 %v903, 7
    %v905 = vsub.s32 0, %v904
    %v906 = vrot.slane %v902, %v905
    %v907 = vadd.f32 %v901, %v906
    %v908 = vpack.c.bf16 %v907, %v907
    %v909 = vld [vmem:[#allocation10] sm:$0xf]
    %v910 = vld [vmem:[#allocation10 + $0x4] sm:$0xf]
    %v911 = vld [vmem:[#allocation10 + $0x8] sm:$0xf]
    %v912 = vld [vmem:[#allocation10 + $0xc] sm:$0xf]
    %v913 = vld [vmem:[#allocation10 + $0x10] sm:$0xf]
    %v914 = vld [vmem:[#allocation10 + $0x14] sm:$0xf]
    %v915 = vld [vmem:[#allocation10 + $0x18] sm:$0xf]
    %v916 = vld [vmem:[#allocation10 + $0x1c] sm:$0xf]
    %v917 = vld [vmem:[#allocation10 + $0x20] sm:$0xf]
    %v918 = vld [vmem:[#allocation10 + $0x24] sm:$0xf]
    %v919 = vld [vmem:[#allocation10 + $0x28] sm:$0xf]
    %v920 = vld [vmem:[#allocation10 + $0x2c] sm:$0xf]
    %v921 = vld [vmem:[#allocation10 + $0x30] sm:$0xf]
    %v922 = vld [vmem:[#allocation10 + $0x34] sm:$0xf]
    %v923 = vld [vmem:[#allocation10 + $0x38] sm:$0xf]
    %v924 = vld [vmem:[#allocation10 + $0x3c] sm:$0xf]
    %v925 = vld [vmem:[%s338] sm:$0x1]
    %v926 = vlaneseq
    %v927 = vshrl.u32 %v926, 7
    %v928 = vsub.s32 0, %v927
    %v929 = vrot.slane %v925, %v928
    %v946 = vunpack.c.l.b16 %v909
    %v947 = vunpack.c.l.b16 %v910
    %v948 = vunpack.c.l.b16 %v911
    %v949 = vunpack.c.l.b16 %v912
    %v950 = vunpack.c.l.b16 %v913
    %v951 = vunpack.c.l.b16 %v914
    %v952 = vunpack.c.l.b16 %v915
    %v953 = vunpack.c.l.b16 %v916
    %v954 = vunpack.c.l.b16 %v917
    %v955 = vunpack.c.l.b16 %v918
    %v956 = vunpack.c.l.b16 %v919
    %v957 = vunpack.c.l.b16 %v920
    %v958 = vunpack.c.l.b16 %v921
    %v959 = vunpack.c.l.b16 %v922
    %v960 = vunpack.c.l.b16 %v923
    %v961 = vunpack.c.l.b16 %v924
    %v962 = vpack.c.b16 %v947, %v946
    %v963 = vpack.c.b16 %v949, %v948
    %v964 = vpack.c.b16 %v951, %v950
    %v965 = vpack.c.b16 %v953, %v952
    %v966 = vpack.c.b16 %v955, %v954
    %v967 = vpack.c.b16 %v957, %v956
    %v968 = vpack.c.b16 %v959, %v958
    %v969 = vpack.c.b16 %v961, %v960
    %978 = vmatprep.subr.bf16.mxu0 0
    %979 = vmatpush1.bf16.msra.mxu0 %v962
    %980 = vmatprep.subr.bf16.mxu0 0
    %981 = vmatpush1.bf16.msra.mxu0 %v963
    %982 = vmatprep.subr.bf16.mxu0 0
    %983 = vmatpush1.bf16.msra.mxu0 %v964
    %984 = vmatprep.subr.bf16.mxu0 0
    %985 = vmatpush1.bf16.msra.mxu0 %v965
    %986 = vmatprep.subr.bf16.mxu0 0
    %987 = vmatpush1.bf16.msra.mxu0 %v966
    %988 = vmatprep.subr.bf16.mxu0 0
    %989 = vmatpush1.bf16.msra.mxu0 %v967
    %990 = vmatprep.subr.bf16.mxu0 0
    %991 = vmatpush1.bf16.msra.mxu0 %v968
    %992 = vmatprep.subr.bf16.mxu0 0
    %993 = vmatpush1.bf16.msra.mxu0 %v969
    %994 = vmatprep.subr.bf16.mxu0 0
    %995 = vmatpush1.bf16.msra.mxu0 0
    %996 = vmatprep.subr.bf16.mxu0 0
    %997 = vmatpush1.bf16.msra.mxu0 0
    %998 = vmatprep.subr.bf16.mxu0 0
    %999 = vmatpush1.bf16.msra.mxu0 0
    %1000 = vmatprep.subr.bf16.mxu0 0
    %1001 = vmatpush1.bf16.msra.mxu0 0
    %1002 = vmatprep.subr.bf16.mxu0 0
    %1003 = vmatpush1.bf16.msra.mxu0 0
    %1004 = vmatprep.subr.bf16.mxu0 0
    %1005 = vmatpush1.bf16.msra.mxu0 0
    %1006 = vmatprep.subr.bf16.mxu0 0
    %1007 = vmatpush1.bf16.msra.mxu0 0
    %1008 = vmatprep.subr.bf16.mxu0 0
    %1009 = vmatpush1.bf16.msra.mxu0 0
    %1010 = vmatprep.mubr.bf16.mxu0 0
    %1011 = vmatmul.mubr.bf16.gmra.mrb[0].mxu0 %v908
    %v1012 = vpop.f32.mrb[0].mxu0
    %v1013 = vadd.f32 %v929, %v1012
    %v1014 = vpop.f32.mrb[0].mxu0
    %v1015 = vpop.f32.mrb[0].mxu0
    %v1016 = vpop.f32.mrb[0].mxu0
    %1017 = vdwg.mxu0
    %v1018 = vmax.f32 %v1013, 0.0
    %v1019 = vadd.f32 %v1018, %v539
    %1020 = vadd.xlane.f32.xlu0 %v1019
    %v1021 = vpop.xlane.xlu0 %1020
    %v1022 = vmul.f32 %v1021, 0.03125
    %v1023 = vsub.f32 %v1019, %v1022
    %v1024 = vsel %vm887, %v1023, 0.0
    %v1025 = vmul.f32 %v1024, %v1024
    %1026 = vadd.xlane.f32.xlu0 %v1025
    %v1027 = vpop.xlane.xlu0 %1026
    %v1028 = vmul.f32 %v1027, 0.03125
    %v1029 = vadd.f32 %v1028, 1e-05
    %v1030 = vrsqrt.pop %v1029
    %v1031 = vmul.f32 %v1024, %v1030
    %v1032 = vld [vmem:[%s338 + $0x3] sm:$0x1]
    %v1033 = vlaneseq
    %v1034 = vshrl.u32 %v1033, 7
    %v1035 = vsub.s32 0, %v1034
    %v1036 = vrot.slane %v1032, %v1035
    %v1037 = vmul.f32 %v1031, %v1036
    %v1038 = vld [vmem:[%s338 + $0x4] sm:$0x1]
    %v1039 = vlaneseq
    %v1040 = vshrl.u32 %v1039, 7
    %v1041 = vsub.s32 0, %v1040
    %v1042 = vrot.slane %v1038, %v1041
    %v1043 = vadd.f32 %v1037, %v1042
    %v1044 = vpack.c.bf16 %v1043, %v1043
    %s1045 = scalar_lea.vmem [#allocation10], 64
    %v1046 = vld [vmem:[%s1045] sm:$0xf]
    %v1047 = vld [vmem:[%s1045 + $0x4] sm:$0xf]
    %v1048 = vld [vmem:[%s1045 + $0x8] sm:$0xf]
    %v1049 = vld [vmem:[%s1045 + $0xc] sm:$0xf]
    %v1050 = vld [vmem:[%s1045 + $0x10] sm:$0xf]
    %v1051 = vld [vmem:[%s1045 + $0x14] sm:$0xf]
    %v1052 = vld [vmem:[%s1045 + $0x18] sm:$0xf]
    %v1053 = vld [vmem:[%s1045 + $0x1c] sm:$0xf]
    %v1054 = vld [vmem:[%s1045 + $0x20] sm:$0xf]
    %v1055 = vld [vmem:[%s1045 + $0x24] sm:$0xf]
    %v1056 = vld [vmem:[%s1045 + $0x28] sm:$0xf]
    %v1057 = vld [vmem:[%s1045 + $0x2c] sm:$0xf]
    %v1058 = vld [vmem:[%s1045 + $0x30] sm:$0xf]
    %v1059 = vld [vmem:[%s1045 + $0x34] sm:$0xf]
    %v1060 = vld [vmem:[%s1045 + $0x38] sm:$0xf]
    %v1061 = vld [vmem:[%s1045 + $0x3c] sm:$0xf]
    %v1062 = vld [vmem:[%s561] sm:$0x1]
    %v1063 = vlaneseq
    %v1064 = vshrl.u32 %v1063, 7
    %v1065 = vsub.s32 0, %v1064
    %v1066 = vrot.slane %v1062, %v1065
    %v1083 = vunpack.c.l.b16 %v1046
    %v1084 = vunpack.c.l.b16 %v1047
    %v1085 = vunpack.c.l.b16 %v1048
    %v1086 = vunpack.c.l.b16 %v1049
    %v1087 = vunpack.c.l.b16 %v1050
    %v1088 = vunpack.c.l.b16 %v1051
    %v1089 = vunpack.c.l.b16 %v1052
    %v1090 = vunpack.c.l.b16 %v1053
    %v1091 = vunpack.c.l.b16 %v1054
    %v1092 = vunpack.c.l.b16 %v1055
    %v1093 = vunpack.c.l.b16 %v1056
    %v1094 = vunpack.c.l.b16 %v1057
    %v1095 = vunpack.c.l.b16 %v1058
    %v1096 = vunpack.c.l.b16 %v1059
    %v1097 = vunpack.c.l.b16 %v1060
    %v1098 = vunpack.c.l.b16 %v1061
    %v1099 = vpack.c.b16 %v1084, %v1083
    %v1100 = vpack.c.b16 %v1086, %v1085
    %v1101 = vpack.c.b16 %v1088, %v1087
    %v1102 = vpack.c.b16 %v1090, %v1089
    %v1103 = vpack.c.b16 %v1092, %v1091
    %v1104 = vpack.c.b16 %v1094, %v1093
    %v1105 = vpack.c.b16 %v1096, %v1095
    %v1106 = vpack.c.b16 %v1098, %v1097
    %1115 = vmatprep.subr.bf16.mxu0 0
    %1116 = vmatpush1.bf16.msra.mxu0 %v1099
    %1117 = vmatprep.subr.bf16.mxu0 0
    %1118 = vmatpush1.bf16.msra.mxu0 %v1100
    %1119 = vmatprep.subr.bf16.mxu0 0
    %1120 = vmatpush1.bf16.msra.mxu0 %v1101
    %1121 = vmatprep.subr.bf16.mxu0 0
    %1122 = vmatpush1.bf16.msra.mxu0 %v1102
    %1123 = vmatprep.subr.bf16.mxu0 0
    %1124 = vmatpush1.bf16.msra.mxu0 %v1103
    %1125 = vmatprep.subr.bf16.mxu0 0
    %1126 = vmatpush1.bf16.msra.mxu0 %v1104
    %1127 = vmatprep.subr.bf16.mxu0 0
    %1128 = vmatpush1.bf16.msra.mxu0 %v1105
    %1129 = vmatprep.subr.bf16.mxu0 0
    %1130 = vmatpush1.bf16.msra.mxu0 %v1106
    %1131 = vmatprep.subr.bf16.mxu0 0
    %1132 = vmatpush1.bf16.msra.mxu0 0
    %1133 = vmatprep.subr.bf16.mxu0 0
    %1134 = vmatpush1.bf16.msra.mxu0 0
    %1135 = vmatprep.subr.bf16.mxu0 0
    %1136 = vmatpush1.bf16.msra.mxu0 0
    %1137 = vmatprep.subr.bf16.mxu0 0
    %1138 = vmatpush1.bf16.msra.mxu0 0
    %1139 = vmatprep.subr.bf16.mxu0 0
    %1140 = vmatpush1.bf16.msra.mxu0 0
    %1141 = vmatprep.subr.bf16.mxu0 0
    %1142 = vmatpush1.bf16.msra.mxu0 0
    %1143 = vmatprep.subr.bf16.mxu0 0
    %1144 = vmatpush1.bf16.msra.mxu0 0
    %1145 = vmatprep.subr.bf16.mxu0 0
    %1146 = vmatpush1.bf16.msra.mxu0 0
    %1147 = vmatprep.mubr.bf16.mxu0 0
    %1148 = vmatmul.mubr.bf16.gmra.mrb[0].mxu0 %v1044
    %v1149 = vpop.f32.mrb[0].mxu0
    %v1150 = vadd.f32 %v1066, %v1149
    %v1151 = vpop.f32.mrb[0].mxu0
    %v1152 = vpop.f32.mrb[0].mxu0
    %v1153 = vpop.f32.mrb[0].mxu0
    %1154 = vdwg.mxu0
    %v1155 = vmax.f32 %v1150, 0.0
    %v1156 = vadd.f32 %v1155, %v762
    %1157 = vadd.xlane.f32.xlu0 %v1156
    %v1158 = vpop.xlane.xlu0 %1157
    %v1159 = vmul.f32 %v1158, 0.03125
    %v1160 = vsub.f32 %v1156, %v1159
    %v1161 = vsel %vm887, %v1160, 0.0
    %v1162 = vmul.f32 %v1161, %v1161
    %1163 = vadd.xlane.f32.xlu0 %v1162
    %v1164 = vpop.xlane.xlu0 %1163
    %v1165 = vmul.f32 %v1164, 0.03125
    %v1166 = vadd.f32 %v1165, 1e-05
    %v1167 = vrsqrt.pop %v1166
    %v1168 = vmul.f32 %v1161, %v1167
    %v1169 = vld [vmem:[%s561 + $0x3] sm:$0x1]
    %v1170 = vlaneseq
    %v1171 = vshrl.u32 %v1170, 7
    %v1172 = vsub.s32 0, %v1171
    %v1173 = vrot.slane %v1169, %v1172
    %v1174 = vmul.f32 %v1168, %v1173
    %v1175 = vld [vmem:[%s561 + $0x4] sm:$0x1]
    %v1176 = vlaneseq
    %v1177 = vshrl.u32 %v1176, 7
    %v1178 = vsub.s32 0, %v1177
    %v1179 = vrot.slane %v1175, %v1178
    %v1180 = vadd.f32 %v1174, %v1179
    %v1181 = vpack.c.bf16 %v1180, %v1180
    %v1182 = vld [vmem:[%s7] sm:$0xf]
    %v1183 = vld [vmem:[%s7 + $0x4] sm:$0xf]
    %v1184 = vld [vmem:[%s7 + $0x8] sm:$0xf]
    %v1185 = vld [vmem:[%s7 + $0xc] sm:$0xf]
    %v1186 = vld [vmem:[%s7 + $0x10] sm:$0xf]
    %v1187 = vld [vmem:[%s7 + $0x14] sm:$0xf]
    %v1188 = vld [vmem:[%s7 + $0x18] sm:$0xf]
    %v1189 = vld [vmem:[%s7 + $0x1c] sm:$0xf]
    %v1190 = vld [vmem:[%s7 + $0x20] sm:$0xf]
    %v1191 = vld [vmem:[%s7 + $0x24] sm:$0xf]
    %v1192 = vld [vmem:[%s7 + $0x28] sm:$0xf]
    %v1193 = vld [vmem:[%s7 + $0x2c] sm:$0xf]
    %v1194 = vld [vmem:[%s7 + $0x30] sm:$0xf]
    %v1195 = vld [vmem:[%s7 + $0x34] sm:$0xf]
    %v1196 = vld [vmem:[%s7 + $0x38] sm:$0xf]
    %v1197 = vld [vmem:[%s7 + $0x3c] sm:$0xf]
    %v1198 = vld [vmem:[%s8] sm:$0x1]
    %v1200 = vlaneseq
    %v1201 = vshrl.u32 %v1200, 7
    %v1202 = vsub.s32 0, %v1201
    %v1203 = vrot.slane %v1198, %v1202
    %v1221 = vunpack.c.l.b16 %v1182
    %v1222 = vunpack.c.l.b16 %v1183
    %v1223 = vunpack.c.l.b16 %v1184
    %v1224 = vunpack.c.l.b16 %v1185
    %v1225 = vunpack.c.l.b16 %v1186
    %v1226 = vunpack.c.l.b16 %v1187
    %v1227 = vunpack.c.l.b16 %v1188
    %v1228 = vunpack.c.l.b16 %v1189
    %v1229 = vunpack.c.l.b16 %v1190
    %v1230 = vunpack.c.l.b16 %v1191
    %v1231 = vunpack.c.l.b16 %v1192
    %v1232 = vunpack.c.l.b16 %v1193
    %v1233 = vunpack.c.l.b16 %v1194
    %v1234 = vunpack.c.l.b16 %v1195
    %v1235 = vunpack.c.l.b16 %v1196
    %v1236 = vunpack.c.l.b16 %v1197
    %v1237 = vpack.c.b16 %v1222, %v1221
    %v1238 = vpack.c.b16 %v1224, %v1223
    %v1239 = vpack.c.b16 %v1226, %v1225
    %v1240 = vpack.c.b16 %v1228, %v1227
    %v1241 = vpack.c.b16 %v1230, %v1229
    %v1242 = vpack.c.b16 %v1232, %v1231
    %v1243 = vpack.c.b16 %v1234, %v1233
    %v1244 = vpack.c.b16 %v1236, %v1235
    %1253 = vmatprep.subr.bf16.mxu0 0
    %1254 = vmatpush1.bf16.msra.mxu0 %v1237
    %1255 = vmatprep.subr.bf16.mxu0 0
    %1256 = vmatpush1.bf16.msra.mxu0 %v1238
    %1257 = vmatprep.subr.bf16.mxu0 0
    %1258 = vmatpush1.bf16.msra.mxu0 %v1239
    %1259 = vmatprep.subr.bf16.mxu0 0
    %1260 = vmatpush1.bf16.msra.mxu0 %v1240
    %1261 = vmatprep.subr.bf16.mxu0 0
    %1262 = vmatpush1.bf16.msra.mxu0 %v1241
    %1263 = vmatprep.subr.bf16.mxu0 0
    %1264 = vmatpush1.bf16.msra.mxu0 %v1242
    %1265 = vmatprep.subr.bf16.mxu0 0
    %1266 = vmatpush1.bf16.msra.mxu0 %v1243
    %1267 = vmatprep.subr.bf16.mxu0 0
    %1268 = vmatpush1.bf16.msra.mxu0 %v1244
    %1269 = vmatprep.subr.bf16.mxu0 0
    %1270 = vmatpush1.bf16.msra.mxu0 0
    %1271 = vmatprep.subr.bf16.mxu0 0
    %1272 = vmatpush1.bf16.msra.mxu0 0
    %1273 = vmatprep.subr.bf16.mxu0 0
    %1274 = vmatpush1.bf16.msra.mxu0 0
    %1275 = vmatprep.subr.bf16.mxu0 0
    %1276 = vmatpush1.bf16.msra.mxu0 0
    %1277 = vmatprep.subr.bf16.mxu0 0
    %1278 = vmatpush1.bf16.msra.mxu0 0
    %1279 = vmatprep.subr.bf16.mxu0 0
    %1280 = vmatpush1.bf16.msra.mxu0 0
    %1281 = vmatprep.subr.bf16.mxu0 0
    %1282 = vmatpush1.bf16.msra.mxu0 0
    %1283 = vmatprep.subr.bf16.mxu0 0
    %1284 = vmatpush1.bf16.msra.mxu0 0
    %1285 = vmatprep.mubr.bf16.mxu0 0
    %1286 = vmatmul.mubr.bf16.gmra.mrb[0].mxu0 %v1181
    %v1287 = vpop.f32.mrb[0].mxu0
    %v1288 = vadd.f32 %v1203, %v1287
    %v1289 = vpop.f32.mrb[0].mxu0
    %v1290 = vpop.f32.mrb[0].mxu0
    %v1291 = vpop.f32.mrb[0].mxu0
    %1292 = vdwg.mxu0
    %1293 = vst [vmem:[#allocation11] sm:$0xff] %v1288
    // Predicated region
    $region58: #{tpu_custom_call.1} parent=1 // pred_check
      _
    $region59: #{tpu_custom_call.1} parent=1 // pred_check_branch
      %1295 = sbr.rel (0) target = $region61
    $region60: #{tpu_custom_call.1} parent=1 // pred_region
      %s1297 = ssub.s32 128, 128
      %1298 = vsyncadd [#allocation4], %s1297
      %s1300 = sshll.u32 [#allocation11], 4
      %s1301 = int_to_ptr.vmem [resolvable:$true] %s1300
      %1303 = dma.vmem_to_hbm [thread:$0]  %s1301, 128, %s9, [#allocation4]
    $region61: #{tpu_custom_call.1} parent=1 // pred_fallthru
      _
    // Predicated region
    $region62: #{tpu_custom_call.1} parent=1 // pred_check
      _
    $region63: #{tpu_custom_call.1} parent=1 // pred_check_branch
      %1305 = sbr.rel (0) target = $region65
    $region64: #{tpu_custom_call.1} parent=1 // pred_region
      %1306 = dma.done [#allocation4], 128
    $region65: #{tpu_custom_call.1} parent=1 // pred_fallthru
      _
    %1307 = vsyncpa [#allocation3], 1
    %1308 = vsyncpa [#allocation6], 1
    %1309 = vsyncpa [#allocation9], 1
    %1310 = vsyncpa [#allocation4], 1

</llo_original>
